<compile_context>
chip_gen: v5e
topology: v5e:2x2
jax: 0.10.0
libtpu: 0.0.40
codegen_flags: <defaults>
</compile_context>

<pallas_src>
import numpy as np
import jax
import jax.numpy as jnp
from jax.experimental import pallas as pl
from jax.experimental.pallas import tpu as pltpu

F32 = jnp.float32

LAYER_KEYS = ("w_in", "b_in", "wo", "ob",
              "f1w", "f1b", "f2w", "f2b",
              "g1", "b1", "g2", "b2")


# ----------------------------------------------------------------------------
# In-kernel math helpers (pure jnp on values)
# ----------------------------------------------------------------------------
def _erf(x):
    # Abramowitz & Stegun 7.1.26 (|err| < 1.5e-7) -- only exp/mul/add/where,
    # guaranteed to lower on Mosaic (avoids relying on an erf primitive rule).
    a1, a2, a3, a4, a5 = 0.254829592, -0.284496736, 1.421413741, -1.453152027, 1.061405429
    p = 0.3275911
    ax = jnp.abs(x)
    t = 1.0 / (1.0 + p * ax)
    poly = ((((a5 * t + a4) * t + a3) * t + a2) * t + a1) * t
    y = 1.0 - poly * jnp.exp(-ax * ax)
    return jnp.where(x >= 0, y, -y)


def _gelu(x):
    # exact GELU, matches torch nn.GELU / F.gelu default
    return 0.5 * x * (1.0 + _erf(x * 0.7071067811865476))


def _layer_norm(v, g, b):
    mu = jnp.mean(v, axis=-1, keepdims=True)
    var = jnp.mean((v - mu) ** 2, axis=-1, keepdims=True)
    return (v - mu) * jax.lax.rsqrt(var + 1e-5) * g + b


def _transformer_layer(xs, mask, lw, nhead, activation):
    """Post-LN TransformerEncoderLayer on a flattened [B*Sseq, D] slab.

    `mask` is a [B*Sseq, B*Sseq] additive mask that is block-diagonal over
    graphs and -1e9 on padded key columns, so one big softmax is exactly
    equivalent to per-graph attention with src_key_padding_mask.
    """
    w_in, b_in, wo, ob, f1w, f1b, f2w, f2b, g1, b1, g2, b2 = lw
    D = xs.shape[-1]
    dh = D // nhead
    scale = 1.0 / float(np.sqrt(dh))

    # one fused QKV matmul for all graphs
    qkv = jnp.dot(xs, w_in, preferred_element_type=jnp.float32) + b_in
    q, k, v = qkv[:, :D], qkv[:, D:2 * D], qkv[:, 2 * D:]

    heads = []
    for h in range(nhead):                                  # tiny static loop
        sl = slice(h * dh, (h + 1) * dh)
        s = jax.lax.dot_general(q[:, sl], k[:, sl], (((1,), (1,)), ((), ())),
                                preferred_element_type=jnp.float32) * scale
        s = s + mask
        s = s - jnp.max(s, axis=-1, keepdims=True)
        e = jnp.exp(s)
        p = e / jnp.sum(e, axis=-1, keepdims=True)           # exact softmax divide
        heads.append(jnp.dot(p, v[:, sl], preferred_element_type=jnp.float32))
    attn = jnp.concatenate(heads, axis=-1)
    attn = jnp.dot(attn, wo, preferred_element_type=jnp.float32) + ob   # single out-proj

    x1 = _layer_norm(xs + attn, g1, b1)
    ff = jnp.dot(x1, f1w, preferred_element_type=jnp.float32) + f1b
    ff = _gelu(ff) if activation == "gelu" else jnp.maximum(ff, 0.0)
    ff = jnp.dot(ff, f2w, preferred_element_type=jnp.float32) + f2b
    return _layer_norm(x1 + ff, g2, b2)


# ----------------------------------------------------------------------------
# The single fused kernel
# ----------------------------------------------------------------------------
def make_fused_kernel(has_sc, n_bert, n_dec, nhead_bert, nhead_dec, bn_scale, slope):
    def kernel(*refs):
        it = iter(refs)

        def nxt():
            return next(it)[...]

        S = nxt(); x = nxt(); pos_in = nxt()
        G = nxt(); cls_sel = nxt(); U = nxt(); C_cls = nxt(); M = nxt()

        # ---------- GCN residual encoder ----------
        h = x
        for sc in has_sc:
            cw = nxt(); cb = nxt()
            if sc:
                sw = nxt(); sb = nxt()
                residual = jnp.dot(h, sw, preferred_element_type=jnp.float32) + sb
            else:
                residual = h
            conv = jnp.dot(S, jnp.dot(h, cw, preferred_element_type=jnp.float32),
                           preferred_element_type=jnp.float32) + cb
            # eval BatchNorm1d (running stats 0/1) == scalar scale; LeakyReLU;
            # residual add; LeakyReLU.  Dropout is identity in eval.
            y = conv * bn_scale
            y = jnp.where(y > 0, y, slope * y)
            y = y + residual
            h = jnp.where(y > 0, y, slope * y)

        # F.normalize(p=2, dim=1)
        ssq = jnp.sum(h * h, axis=-1, keepdims=True)
        h = h * jax.lax.rsqrt(jnp.maximum(ssq, 1e-24))

        # batched positional encoding: block-diagonal [wsp_w ; le_w] projection
        pw = nxt(); pb = nxt()
        h = h + jnp.dot(pos_in, pw, preferred_element_type=jnp.float32) + pb

        bert_cls = nxt(); dec_cls = nxt()
        bert_layers = [tuple(nxt() for _ in LAYER_KEYS) for _ in range(n_bert)]
        dec_layers = [tuple(nxt() for _ in LAYER_KEYS) for _ in range(n_dec)]
        u1w = nxt(); u1b = nxt(); u2w = nxt(); u2b = nxt()
        fd1w = nxt(); fd1b = nxt(); fd2w = nxt(); fd2b = nxt()

        cls_out_ref = next(it)
        xrec_ref = next(it)

        # ---------- BERT transformer on the flattened CLS slab ----------
        # slab = one-hot scatter of node rows + CLS rows (all one matmul + bcast mul)
        t = jnp.dot(G, h, preferred_element_type=jnp.float32) + cls_sel * bert_cls
        for lw in bert_layers:
            t = _transformer_layer(t, M, lw, nhead_bert, "gelu")
        z = jnp.dot(U, t, preferred_element_type=jnp.float32)        # un-batch to [N, D]

        # ---------- outer autoencoder: decoder transformer ----------
        e = jnp.dot(G, z, preferred_element_type=jnp.float32) + cls_sel * dec_cls
        for lw in dec_layers:
            e = _transformer_layer(e, M, lw, nhead_dec, "relu")

        cls_out_ref[...] = jnp.dot(C_cls, e, preferred_element_type=jnp.float32)
        u = jnp.dot(U, e, preferred_element_type=jnp.float32)        # [N, D]

        # ---------- u_mlp + feature decoder ----------
        hu = jnp.dot(u, u1w, preferred_element_type=jnp.float32) + u1b
        hu = jnp.maximum(hu, 0.0)
        up = jnp.dot(hu, u2w, preferred_element_type=jnp.float32) + u2b
        f = jnp.dot(up, fd1w, preferred_element_type=jnp.float32) + fd1b
        f = jnp.where(f > 0, f, 0.1 * f)                              # FeatureDecoder LeakyReLU
        xrec_ref[...] = jnp.dot(f, fd2w, preferred_element_type=jnp.float32) + fd2b

    return kernel


# ----------------------------------------------------------------------------
# Parameter init (deterministic, synthetic) — kernel-ready layout
# ----------------------------------------------------------------------------
class KeyGen:
    def __init__(self, seed=0):
        self._key = jax.random.PRNGKey(seed)

    def __call__(self):
        self._key, sub = jax.random.split(self._key)
        return sub


def xavier_uniform(kg, fan_in, fan_out, gain=1.0):
    a = gain * np.sqrt(6.0 / (fan_in + fan_out))
    return jax.random.uniform(kg(), (fan_in, fan_out), F32, -a, a)


def init_transformer_layer(kg, d, ff):
    return {
        "w_in": xavier_uniform(kg, d, 3 * d),            # fused QKV in_proj
        "b_in": jnp.zeros((1, 3 * d), F32),
        "wo": xavier_uniform(kg, d, d),
        "ob": jnp.zeros((1, d), F32),
        "f1w": xavier_uniform(kg, d, ff), "f1b": jnp.zeros((1, ff), F32),
        "f2w": xavier_uniform(kg, ff, d), "f2b": jnp.zeros((1, d), F32),
        "g1": jnp.ones((1, d), F32), "b1": jnp.zeros((1, d), F32),
        "g2": jnp.ones((1, d), F32), "b2": jnp.zeros((1, d), F32),
    }


def init_params(kg, num_features, hidden_dims, max_nodes, nl_bert, nl):
    d = hidden_dims[-1]
    dims = [num_features] + list(hidden_dims)
    leaky_gain = float(np.sqrt(2.0 / (1.0 + 0.1 ** 2)))   # calculate_gain('leaky_relu', 0.1)
    blocks = []
    for i in range(len(dims) - 1):
        blk = {"conv_w": xavier_uniform(kg, dims[i], dims[i + 1], gain=leaky_gain),
               "conv_b": jnp.zeros((1, dims[i + 1]), F32)}
        if dims[i] != dims[i + 1]:
            blk["sc_w"] = xavier_uniform(kg, dims[i], dims[i + 1])
            blk["sc_b"] = jnp.zeros((1, dims[i + 1]), F32)
        blocks.append(blk)
    # wsp/le encoders fused into one block-diagonal projection [2*max_nodes, d]
    wsp_w = xavier_uniform(kg, max_nodes, d // 2)
    le_w = xavier_uniform(kg, max_nodes, d // 2)
    pos_w = jnp.zeros((2 * max_nodes, d), F32)
    pos_w = pos_w.at[:max_nodes, :d // 2].set(wsp_w)
    pos_w = pos_w.at[max_nodes:, d // 2:].set(le_w)
    return {
        "d": d, "num_features": num_features,
        "blocks": blocks,
        "pos_w": pos_w, "pos_b": jnp.zeros((1, d), F32),
        "bert_layers": [init_transformer_layer(kg, d, 4 * d) for _ in range(nl_bert)],
        "bert_cls": jax.random.normal(kg(), (1, d), F32),
        "dec_layers": [init_transformer_layer(kg, d, 4 * d) for _ in range(nl)],
        "dec_cls": jax.random.normal(kg(), (1, d), F32),
        "u1_w": xavier_uniform(kg, d, d), "u1_b": jnp.zeros((1, d), F32),
        "u2_w": xavier_uniform(kg, d, d), "u2_b": jnp.zeros((1, d), F32),
        "fd1_w": xavier_uniform(kg, d, d // 2), "fd1_b": jnp.zeros((1, d // 2), F32),
        "fd2_w": xavier_uniform(kg, d // 2, num_features),
        "fd2_b": jnp.zeros((1, num_features), F32),
    }


# ----------------------------------------------------------------------------
# Host-side graph preprocessing (glue; no Pallas equivalent)
# ----------------------------------------------------------------------------
def wsp_matrix(edges, num_nodes, max_nodes):
    INF = 1e9
    D = np.full((num_nodes, num_nodes), INF, dtype=np.float64)
    np.fill_diagonal(D, 0.0)
    for u, v in edges:
        D[u, v] = 1.0
    for k in range(num_nodes):                       # Floyd-Warshall
        D = np.minimum(D, D[:, k:k + 1] + D[k:k + 1, :])
    D = np.where(D >= INF / 2, float(max_nodes), D)  # unreachable -> max_nodes
    np.fill_diagonal(D, 0.0)
    out = np.zeros((num_nodes, max_nodes), dtype=np.float32)
    c = min(num_nodes, max_nodes)
    out[:, :c] = D[:, :c]
    return out


def laplacian_eigvecs(edges, num_nodes, max_nodes):
    A = np.zeros((num_nodes, num_nodes), dtype=np.float64)
    for u, v in edges:
        A[u, v] = 1.0
    deg = A.sum(axis=1)
    dinv = np.where(deg > 0, deg ** -0.5, 0.0)
    L = np.eye(num_nodes) - (dinv[:, None] * A * dinv[None, :])   # sym-normalized Laplacian
    _, vecs = np.linalg.eigh(L)
    out = np.zeros((num_nodes, max_nodes), dtype=np.float32)
    out[:, :num_nodes] = vecs.astype(np.float32)
    return out


def build_gcn_matrix(edge_index_np, num_nodes):
    # ResidualBlock: add_self_loops, deg from edge_index[0], norm = d^-.5[row]*d^-.5[col]
    row = np.concatenate([edge_index_np[0], np.arange(num_nodes)])
    col = np.concatenate([edge_index_np[1], np.arange(num_nodes)])
    deg = np.zeros(num_nodes, dtype=np.float64)
    np.add.at(deg, row, 1.0)
    dinv = np.where(deg > 0, deg ** -0.5, 0.0)
    norm = dinv[row] * dinv[col]
    S0 = np.zeros((num_nodes, num_nodes), dtype=np.float64)
    np.add.at(S0, (col, row), norm)                  # aggregate at target (col)
    # GCNConv(normalize=True) re-runs gcn_norm on the provided edge weights:
    deg2 = S0.sum(axis=1)
    d2 = np.where(deg2 > 0, deg2 ** -0.5, 0.0)
    return jnp.asarray(d2[:, None] * S0 * d2[None, :], dtype=F32)


# ----------------------------------------------------------------------------
# Forward pass (inference: training=False, edge_training=False)
# ----------------------------------------------------------------------------
def forward(params, x, edge_index, batch, num_graphs, max_nodes, nhead_bert, nhead):
    N = x.shape[0]
    d = params["d"]
    ei_np = np.asarray(edge_index)
    batch_np = np.asarray(batch)

    # ---- host-side static bookkeeping (numpy) ----
    S = build_gcn_matrix(ei_np, N)
    node_counts = [int((batch_np == i).sum()) for i in range(num_graphs)]
    offsets = np.concatenate([[0], np.cumsum(node_counts)])
    max_n = int(max(node_counts))
    Sseq = max_n + 1                                  # CLS + padded nodes
    BS = num_graphs * Sseq

    pos_rows = []
    for i in range(num_graphs):
        sel = (ei_np[0] >= offsets[i]) & (ei_np[0] < offsets[i + 1])
        ge = ei_np[:, sel] - offsets[i]
        edges = list(zip(ge[0].tolist(), ge[1].tolist()))
        wsp = wsp_matrix(edges, node_counts[i], max_nodes)
        le = laplacian_eigvecs(edges, node_counts[i], max_nodes)
        pos_rows.append(np.concatenate([wsp, le], axis=1))
    pos_in = jnp.asarray(np.concatenate(pos_rows, axis=0), dtype=F32)   # [N, 2*max_nodes]

    # one-hot scatter/gather matrices + block-diagonal additive attention mask
    G = np.zeros((BS, N), np.float32)                 # node rows -> slab rows
    cls_sel = np.zeros((BS, 1), np.float32)           # CLS positions in the slab
    U = np.zeros((N, BS), np.float32)                 # slab rows -> node rows (un-batch)
    C_cls = np.zeros((num_graphs, BS), np.float32)    # CLS extraction
    M = np.full((BS, BS), -1e9, np.float32)           # block-diag + key-padding mask
    for i in range(num_graphs):
        base = i * Sseq
        n_i = node_counts[i]
        cls_sel[base, 0] = 1.0
        C_cls[i, base] = 1.0
        for j in range(n_i):
            G[base + 1 + j, offsets[i] + j] = 1.0
            U[offsets[i] + j, base + 1 + j] = 1.0
        M[base:base + Sseq, base:base + n_i + 1] = 0.0   # attend to CLS + real nodes only

    has_sc = tuple("sc_w" in blk for blk in params["blocks"])
    bn_scale = float(1.0 / np.sqrt(1.0 + 1e-5))       # eval BatchNorm1d (stats 0/1)

    # ---- assemble the single fused pallas_call ----
    args = [S, jnp.asarray(x, F32), pos_in,
            jnp.asarray(G), jnp.asarray(cls_sel), jnp.asarray(U),
            jnp.asarray(C_cls), jnp.asarray(M)]
    for blk in params["blocks"]:
        args += [blk["conv_w"], blk["conv_b"]]
        if "sc_w" in blk:
            args += [blk["sc_w"], blk["sc_b"]]
    args += [params["pos_w"], params["pos_b"], params["bert_cls"], params["dec_cls"]]
    for lp in params["bert_layers"]:
        args += [lp[k] for k in LAYER_KEYS]
    for lp in params["dec_layers"]:
        args += [lp[k] for k in LAYER_KEYS]
    args += [params["u1_w"], params["u1_b"], params["u2_w"], params["u2_b"],
             params["fd1_w"], params["fd1_b"], params["fd2_w"], params["fd2_b"]]

    kernel = make_fused_kernel(has_sc, len(params["bert_layers"]),
                               len(params["dec_layers"]), nhead_bert, nhead,
                               bn_scale, 0.1)
    out_shape = (jax.ShapeDtypeStruct((num_graphs, d), F32),
                 jax.ShapeDtypeStruct((N, params["num_features"]), F32))
    call = pl.pallas_call(
        kernel,
        out_shape=out_shape,
        in_specs=[pl.BlockSpec(memory_space=pltpu.MemorySpace.VMEM)] * len(args),
        out_specs=(pl.BlockSpec(memory_space=pltpu.MemorySpace.VMEM),
                   pl.BlockSpec(memory_space=pltpu.MemorySpace.VMEM)),
    )
    cls_output, x_recon = jax.jit(call)(*args)
    return cls_output, x_recon


# ----------------------------------------------------------------------------
if __name__ == "__main__":
    num_features = 4
    hidden_dims = [16, 32]
    max_nodes = 12
    nhead_bert, nhead = 4, 4
    num_layers_bert, num_layers = 1, 1

    kg = KeyGen(0)
    params = init_params(kg, num_features, hidden_dims, max_nodes,
                         num_layers_bert, num_layers)

    # Two small graphs (5 + 6 nodes); undirected edges stored in both directions.
    edges_g0 = [(0, 1), (1, 2), (2, 3), (3, 4), (4, 0)]
    edges_g1 = [(0, 1), (1, 2), (2, 3), (3, 4), (4, 5), (5, 0), (0, 3)]
    n0, n1 = 5, 6
    src, dst = [], []
    for u, v in edges_g0:
        src += [u, v]; dst += [v, u]
    for u, v in edges_g1:
        src += [u + n0, v + n0]; dst += [v + n0, u + n0]
    edge_index = np.array([src, dst], dtype=np.int32)
    batch = np.array([0] * n0 + [1] * n1, dtype=np.int32)
    N = n0 + n1

    x = jax.random.normal(jax.random.PRNGKey(0), (N, num_features), F32)

    cls_output, x_recon = forward(params, x, edge_index, batch, 2,
                                  max_nodes, nhead_bert, nhead)
    jax.block_until_ready((cls_output, x_recon))
    assert cls_output.shape == (2, hidden_dims[-1])
    assert x_recon.shape == (N, num_features)
    assert bool(jnp.all(jnp.isfinite(cls_output))) and bool(jnp.all(jnp.isfinite(x_recon)))
    print("KERNEL_OK")
</pallas_src>

<mosaic_0001>
module attributes {stable_mosaic.version = 11 : i64} {
  func.func @kernel(%arg0: memref<11x11xf32, #tpu.memory_space<vmem>>, %arg1: memref<11x4xf32, #tpu.memory_space<vmem>>, %arg2: memref<11x24xf32, #tpu.memory_space<vmem>>, %arg3: memref<14x11xf32, #tpu.memory_space<vmem>>, %arg4: memref<14x1xf32, #tpu.memory_space<vmem>>, %arg5: memref<11x14xf32, #tpu.memory_space<vmem>>, %arg6: memref<2x14xf32, #tpu.memory_space<vmem>>, %arg7: memref<14x14xf32, #tpu.memory_space<vmem>>, %arg8: memref<4x16xf32, #tpu.memory_space<vmem>>, %arg9: memref<1x16xf32, #tpu.memory_space<vmem>>, %arg10: memref<4x16xf32, #tpu.memory_space<vmem>>, %arg11: memref<1x16xf32, #tpu.memory_space<vmem>>, %arg12: memref<16x32xf32, #tpu.memory_space<vmem>>, %arg13: memref<1x32xf32, #tpu.memory_space<vmem>>, %arg14: memref<16x32xf32, #tpu.memory_space<vmem>>, %arg15: memref<1x32xf32, #tpu.memory_space<vmem>>, %arg16: memref<24x32xf32, #tpu.memory_space<vmem>>, %arg17: memref<1x32xf32, #tpu.memory_space<vmem>>, %arg18: memref<1x32xf32, #tpu.memory_space<vmem>>, %arg19: memref<1x32xf32, #tpu.memory_space<vmem>>, %arg20: memref<32x96xf32, #tpu.memory_space<vmem>>, %arg21: memref<1x96xf32, #tpu.memory_space<vmem>>, %arg22: memref<32x32xf32, #tpu.memory_space<vmem>>, %arg23: memref<1x32xf32, #tpu.memory_space<vmem>>, %arg24: memref<32x128xf32, #tpu.memory_space<vmem>>, %arg25: memref<1x128xf32, #tpu.memory_space<vmem>>, %arg26: memref<128x32xf32, #tpu.memory_space<vmem>>, %arg27: memref<1x32xf32, #tpu.memory_space<vmem>>, %arg28: memref<1x32xf32, #tpu.memory_space<vmem>>, %arg29: memref<1x32xf32, #tpu.memory_space<vmem>>, %arg30: memref<1x32xf32, #tpu.memory_space<vmem>>, %arg31: memref<1x32xf32, #tpu.memory_space<vmem>>, %arg32: memref<32x96xf32, #tpu.memory_space<vmem>>, %arg33: memref<1x96xf32, #tpu.memory_space<vmem>>, %arg34: memref<32x32xf32, #tpu.memory_space<vmem>>, %arg35: memref<1x32xf32, #tpu.memory_space<vmem>>, %arg36: memref<32x128xf32, #tpu.memory_space<vmem>>, %arg37: memref<1x128xf32, #tpu.memory_space<vmem>>, %arg38: memref<128x32xf32, #tpu.memory_space<vmem>>, %arg39: memref<1x32xf32, #tpu.memory_space<vmem>>, %arg40: memref<1x32xf32, #tpu.memory_space<vmem>>, %arg41: memref<1x32xf32, #tpu.memory_space<vmem>>, %arg42: memref<1x32xf32, #tpu.memory_space<vmem>>, %arg43: memref<1x32xf32, #tpu.memory_space<vmem>>, %arg44: memref<32x32xf32, #tpu.memory_space<vmem>>, %arg45: memref<1x32xf32, #tpu.memory_space<vmem>>, %arg46: memref<32x32xf32, #tpu.memory_space<vmem>>, %arg47: memref<1x32xf32, #tpu.memory_space<vmem>>, %arg48: memref<32x16xf32, #tpu.memory_space<vmem>>, %arg49: memref<1x16xf32, #tpu.memory_space<vmem>>, %arg50: memref<16x4xf32, #tpu.memory_space<vmem>>, %arg51: memref<1x4xf32, #tpu.memory_space<vmem>>, %arg52: memref<2x32xf32, #tpu.memory_space<vmem>>, %arg53: memref<11x4xf32, #tpu.memory_space<vmem>>) attributes {dimension_semantics = [], scalar_prefetch = 0 : i64, scratch_operands = 0 : i64, tpu.core_type = #tpu.core_type<tc>} {
    %c0 = arith.constant 0 : index
    %c0_0 = arith.constant 0 : index
    %0 = vector.load %arg0[%c0, %c0_0] : memref<11x11xf32, #tpu.memory_space<vmem>>, vector<11x11xf32>
    %c0_1 = arith.constant 0 : index
    %c0_2 = arith.constant 0 : index
    %1 = vector.load %arg1[%c0_1, %c0_2] : memref<11x4xf32, #tpu.memory_space<vmem>>, vector<11x4xf32>
    %c0_3 = arith.constant 0 : index
    %c0_4 = arith.constant 0 : index
    %2 = vector.load %arg2[%c0_3, %c0_4] : memref<11x24xf32, #tpu.memory_space<vmem>>, vector<11x24xf32>
    %c0_5 = arith.constant 0 : index
    %c0_6 = arith.constant 0 : index
    %3 = vector.load %arg3[%c0_5, %c0_6] : memref<14x11xf32, #tpu.memory_space<vmem>>, vector<14x11xf32>
    %c0_7 = arith.constant 0 : index
    %c0_8 = arith.constant 0 : index
    %4 = vector.load %arg4[%c0_7, %c0_8] : memref<14x1xf32, #tpu.memory_space<vmem>>, vector<14x1xf32>
    %c0_9 = arith.constant 0 : index
    %c0_10 = arith.constant 0 : index
    %5 = vector.load %arg5[%c0_9, %c0_10] : memref<11x14xf32, #tpu.memory_space<vmem>>, vector<11x14xf32>
    %c0_11 = arith.constant 0 : index
    %c0_12 = arith.constant 0 : index
    %6 = vector.load %arg6[%c0_11, %c0_12] : memref<2x14xf32, #tpu.memory_space<vmem>>, vector<2x14xf32>
    %c0_13 = arith.constant 0 : index
    %c0_14 = arith.constant 0 : index
    %7 = vector.load %arg7[%c0_13, %c0_14] : memref<14x14xf32, #tpu.memory_space<vmem>>, vector<14x14xf32>
    %c0_15 = arith.constant 0 : index
    %c0_16 = arith.constant 0 : index
    %8 = vector.load %arg8[%c0_15, %c0_16] : memref<4x16xf32, #tpu.memory_space<vmem>>, vector<4x16xf32>
    %c0_17 = arith.constant 0 : index
    %c0_18 = arith.constant 0 : index
    %9 = vector.load %arg9[%c0_17, %c0_18] : memref<1x16xf32, #tpu.memory_space<vmem>>, vector<1x16xf32>
    %c0_19 = arith.constant 0 : index
    %c0_20 = arith.constant 0 : index
    %10 = vector.load %arg10[%c0_19, %c0_20] : memref<4x16xf32, #tpu.memory_space<vmem>>, vector<4x16xf32>
    %c0_21 = arith.constant 0 : index
    %c0_22 = arith.constant 0 : index
    %11 = vector.load %arg11[%c0_21, %c0_22] : memref<1x16xf32, #tpu.memory_space<vmem>>, vector<1x16xf32>
    %cst = arith.constant dense<0.000000e+00> : vector<11x16xf32>
    %12 = tpu.matmul %1, %10, %cst {dimension_numbers = #tpu.dot_dimension_numbers<[1], [0], [0], [1], [0, 0, 1, 1], [], []>} : vector<11x4xf32>, vector<4x16xf32>, vector<11x16xf32> -> vector<11x16xf32>
    %13 = vector.broadcast %11 : vector<1x16xf32> to vector<11x16xf32>
    %14 = arith.addf %12, %13 : vector<11x16xf32>
    %cst_23 = arith.constant dense<0.000000e+00> : vector<11x16xf32>
    %15 = tpu.matmul %1, %8, %cst_23 {dimension_numbers = #tpu.dot_dimension_numbers<[1], [0], [0], [1], [0, 0, 1, 1], [], []>} : vector<11x4xf32>, vector<4x16xf32>, vector<11x16xf32> -> vector<11x16xf32>
    %cst_24 = arith.constant dense<0.000000e+00> : vector<11x16xf32>
    %16 = tpu.matmul %0, %15, %cst_24 {dimension_numbers = #tpu.dot_dimension_numbers<[1], [0], [0], [1], [0, 0, 1, 1], [], []>} : vector<11x11xf32>, vector<11x16xf32>, vector<11x16xf32> -> vector<11x16xf32>
    %17 = vector.broadcast %9 : vector<1x16xf32> to vector<11x16xf32>
    %18 = arith.addf %16, %17 : vector<11x16xf32>
    %cst_25 = arith.constant 0.999994993 : f32
    %19 = vector.broadcast %cst_25 : f32 to vector<11x16xf32>
    %20 = arith.mulf %18, %19 : vector<11x16xf32>
    %cst_26 = arith.constant 0.000000e+00 : f32
    %21 = vector.broadcast %cst_26 : f32 to vector<11x16xf32>
    %22 = arith.cmpf ogt, %20, %21 : vector<11x16xf32>
    %cst_27 = arith.constant 1.000000e-01 : f32
    %23 = vector.broadcast %cst_27 : f32 to vector<11x16xf32>
    %24 = arith.mulf %23, %20 : vector<11x16xf32>
    %25 = arith.select %22, %20, %24 : vector<11x16xi1>, vector<11x16xf32>
    %26 = arith.addf %25, %14 : vector<11x16xf32>
    %cst_28 = arith.constant 0.000000e+00 : f32
    %27 = vector.broadcast %cst_28 : f32 to vector<11x16xf32>
    %28 = arith.cmpf ogt, %26, %27 : vector<11x16xf32>
    %cst_29 = arith.constant 1.000000e-01 : f32
    %29 = vector.broadcast %cst_29 : f32 to vector<11x16xf32>
    %30 = arith.mulf %29, %26 : vector<11x16xf32>
    %31 = arith.select %28, %26, %30 : vector<11x16xi1>, vector<11x16xf32>
    %c0_30 = arith.constant 0 : index
    %c0_31 = arith.constant 0 : index
    %32 = vector.load %arg12[%c0_30, %c0_31] : memref<16x32xf32, #tpu.memory_space<vmem>>, vector<16x32xf32>
    %c0_32 = arith.constant 0 : index
    %c0_33 = arith.constant 0 : index
    %33 = vector.load %arg13[%c0_32, %c0_33] : memref<1x32xf32, #tpu.memory_space<vmem>>, vector<1x32xf32>
    %c0_34 = arith.constant 0 : index
    %c0_35 = arith.constant 0 : index
    %34 = vector.load %arg14[%c0_34, %c0_35] : memref<16x32xf32, #tpu.memory_space<vmem>>, vector<16x32xf32>
    %c0_36 = arith.constant 0 : index
    %c0_37 = arith.constant 0 : index
    %35 = vector.load %arg15[%c0_36, %c0_37] : memref<1x32xf32, #tpu.memory_space<vmem>>, vector<1x32xf32>
    %cst_38 = arith.constant dense<0.000000e+00> : vector<11x32xf32>
    %36 = tpu.matmul %31, %34, %cst_38 {dimension_numbers = #tpu.dot_dimension_numbers<[1], [0], [0], [1], [0, 0, 1, 1], [], []>} : vector<11x16xf32>, vector<16x32xf32>, vector<11x32xf32> -> vector<11x32xf32>
    %37 = vector.broadcast %35 : vector<1x32xf32> to vector<11x32xf32>
    %38 = arith.addf %36, %37 : vector<11x32xf32>
    %cst_39 = arith.constant dense<0.000000e+00> : vector<11x32xf32>
    %39 = tpu.matmul %31, %32, %cst_39 {dimension_numbers = #tpu.dot_dimension_numbers<[1], [0], [0], [1], [0, 0, 1, 1], [], []>} : vector<11x16xf32>, vector<16x32xf32>, vector<11x32xf32> -> vector<11x32xf32>
    %cst_40 = arith.constant dense<0.000000e+00> : vector<11x32xf32>
    %40 = tpu.matmul %0, %39, %cst_40 {dimension_numbers = #tpu.dot_dimension_numbers<[1], [0], [0], [1], [0, 0, 1, 1], [], []>} : vector<11x11xf32>, vector<11x32xf32>, vector<11x32xf32> -> vector<11x32xf32>
    %41 = vector.broadcast %33 : vector<1x32xf32> to vector<11x32xf32>
    %42 = arith.addf %40, %41 : vector<11x32xf32>
    %cst_41 = arith.constant 0.999994993 : f32
    %43 = vector.broadcast %cst_41 : f32 to vector<11x32xf32>
    %44 = arith.mulf %42, %43 : vector<11x32xf32>
    %cst_42 = arith.constant 0.000000e+00 : f32
    %45 = vector.broadcast %cst_42 : f32 to vector<11x32xf32>
    %46 = arith.cmpf ogt, %44, %45 : vector<11x32xf32>
    %cst_43 = arith.constant 1.000000e-01 : f32
    %47 = vector.broadcast %cst_43 : f32 to vector<11x32xf32>
    %48 = arith.mulf %47, %44 : vector<11x32xf32>
    %49 = arith.select %46, %44, %48 : vector<11x32xi1>, vector<11x32xf32>
    %50 = arith.addf %49, %38 : vector<11x32xf32>
    %cst_44 = arith.constant 0.000000e+00 : f32
    %51 = vector.broadcast %cst_44 : f32 to vector<11x32xf32>
    %52 = arith.cmpf ogt, %50, %51 : vector<11x32xf32>
    %cst_45 = arith.constant 1.000000e-01 : f32
    %53 = vector.broadcast %cst_45 : f32 to vector<11x32xf32>
    %54 = arith.mulf %53, %50 : vector<11x32xf32>
    %55 = arith.select %52, %50, %54 : vector<11x32xi1>, vector<11x32xf32>
    %56 = arith.mulf %55, %55 : vector<11x32xf32>
    %cst_46 = arith.constant dense<0.000000e+00> : vector<11xf32>
    %57 = vector.multi_reduction <add>, %56, %cst_46 [1] : vector<11x32xf32> to vector<11xf32>
    %58 = vector.shape_cast %57 : vector<11xf32> to vector<11x1xf32>
    %cst_47 = arith.constant 1.000000e-24 : f32
    %59 = vector.broadcast %cst_47 : f32 to vector<11x1xf32>
    %60 = arith.maximumf %58, %59 : vector<11x1xf32>
    %61 = math.rsqrt %60 : vector<11x1xf32>
    %62 = vector.broadcast %61 : vector<11x1xf32> to vector<11x32xf32>
    %63 = arith.mulf %55, %62 : vector<11x32xf32>
    %c0_48 = arith.constant 0 : index
    %c0_49 = arith.constant 0 : index
    %64 = vector.load %arg16[%c0_48, %c0_49] : memref<24x32xf32, #tpu.memory_space<vmem>>, vector<24x32xf32>
    %c0_50 = arith.constant 0 : index
    %c0_51 = arith.constant 0 : index
    %65 = vector.load %arg17[%c0_50, %c0_51] : memref<1x32xf32, #tpu.memory_space<vmem>>, vector<1x32xf32>
    %cst_52 = arith.constant dense<0.000000e+00> : vector<11x32xf32>
    %66 = tpu.matmul %2, %64, %cst_52 {dimension_numbers = #tpu.dot_dimension_numbers<[1], [0], [0], [1], [0, 0, 1, 1], [], []>} : vector<11x24xf32>, vector<24x32xf32>, vector<11x32xf32> -> vector<11x32xf32>
    %67 = arith.addf %63, %66 : vector<11x32xf32>
    %68 = vector.broadcast %65 : vector<1x32xf32> to vector<11x32xf32>
    %69 = arith.addf %67, %68 : vector<11x32xf32>
    %c0_53 = arith.constant 0 : index
    %c0_54 = arith.constant 0 : index
    %70 = vector.load %arg18[%c0_53, %c0_54] : memref<1x32xf32, #tpu.memory_space<vmem>>, vector<1x32xf32>
    %c0_55 = arith.constant 0 : index
    %c0_56 = arith.constant 0 : index
    %71 = vector.load %arg19[%c0_55, %c0_56] : memref<1x32xf32, #tpu.memory_space<vmem>>, vector<1x32xf32>
    %c0_57 = arith.constant 0 : index
    %c0_58 = arith.constant 0 : index
    %72 = vector.load %arg20[%c0_57, %c0_58] : memref<32x96xf32, #tpu.memory_space<vmem>>, vector<32x96xf32>
    %c0_59 = arith.constant 0 : index
    %c0_60 = arith.constant 0 : index
    %73 = vector.load %arg21[%c0_59, %c0_60] : memref<1x96xf32, #tpu.memory_space<vmem>>, vector<1x96xf32>
    %c0_61 = arith.constant 0 : index
    %c0_62 = arith.constant 0 : index
    %74 = vector.load %arg22[%c0_61, %c0_62] : memref<32x32xf32, #tpu.memory_space<vmem>>, vector<32x32xf32>
    %c0_63 = arith.constant 0 : index
    %c0_64 = arith.constant 0 : index
    %75 = vector.load %arg23[%c0_63, %c0_64] : memref<1x32xf32, #tpu.memory_space<vmem>>, vector<1x32xf32>
    %c0_65 = arith.constant 0 : index
    %c0_66 = arith.constant 0 : index
    %76 = vector.load %arg24[%c0_65, %c0_66] : memref<32x128xf32, #tpu.memory_space<vmem>>, vector<32x128xf32>
    %c0_67 = arith.constant 0 : index
    %c0_68 = arith.constant 0 : index
    %77 = vector.load %arg25[%c0_67, %c0_68] : memref<1x128xf32, #tpu.memory_space<vmem>>, vector<1x128xf32>
    %c0_69 = arith.constant 0 : index
    %c0_70 = arith.constant 0 : index
    %78 = vector.load %arg26[%c0_69, %c0_70] : memref<128x32xf32, #tpu.memory_space<vmem>>, vector<128x32xf32>
    %c0_71 = arith.constant 0 : index
    %c0_72 = arith.constant 0 : index
    %79 = vector.load %arg27[%c0_71, %c0_72] : memref<1x32xf32, #tpu.memory_space<vmem>>, vector<1x32xf32>
    %c0_73 = arith.constant 0 : index
    %c0_74 = arith.constant 0 : index
    %80 = vector.load %arg28[%c0_73, %c0_74] : memref<1x32xf32, #tpu.memory_space<vmem>>, vector<1x32xf32>
    %c0_75 = arith.constant 0 : index
    %c0_76 = arith.constant 0 : index
    %81 = vector.load %arg29[%c0_75, %c0_76] : memref<1x32xf32, #tpu.memory_space<vmem>>, vector<1x32xf32>
    %c0_77 = arith.constant 0 : index
    %c0_78 = arith.constant 0 : index
    %82 = vector.load %arg30[%c0_77, %c0_78] : memref<1x32xf32, #tpu.memory_space<vmem>>, vector<1x32xf32>
    %c0_79 = arith.constant 0 : index
    %c0_80 = arith.constant 0 : index
    %83 = vector.load %arg31[%c0_79, %c0_80] : memref<1x32xf32, #tpu.memory_space<vmem>>, vector<1x32xf32>
    %c0_81 = arith.constant 0 : index
    %c0_82 = arith.constant 0 : index
    %84 = vector.load %arg32[%c0_81, %c0_82] : memref<32x96xf32, #tpu.memory_space<vmem>>, vector<32x96xf32>
    %c0_83 = arith.constant 0 : index
    %c0_84 = arith.constant 0 : index
    %85 = vector.load %arg33[%c0_83, %c0_84] : memref<1x96xf32, #tpu.memory_space<vmem>>, vector<1x96xf32>
    %c0_85 = arith.constant 0 : index
    %c0_86 = arith.constant 0 : index
    %86 = vector.load %arg34[%c0_85, %c0_86] : memref<32x32xf32, #tpu.memory_space<vmem>>, vector<32x32xf32>
    %c0_87 = arith.constant 0 : index
    %c0_88 = arith.constant 0 : index
    %87 = vector.load %arg35[%c0_87, %c0_88] : memref<1x32xf32, #tpu.memory_space<vmem>>, vector<1x32xf32>
    %c0_89 = arith.constant 0 : index
    %c0_90 = arith.constant 0 : index
    %88 = vector.load %arg36[%c0_89, %c0_90] : memref<32x128xf32, #tpu.memory_space<vmem>>, vector<32x128xf32>
    %c0_91 = arith.constant 0 : index
    %c0_92 = arith.constant 0 : index
    %89 = vector.load %arg37[%c0_91, %c0_92] : memref<1x128xf32, #tpu.memory_space<vmem>>, vector<1x128xf32>
    %c0_93 = arith.constant 0 : index
    %c0_94 = arith.constant 0 : index
    %90 = vector.load %arg38[%c0_93, %c0_94] : memref<128x32xf32, #tpu.memory_space<vmem>>, vector<128x32xf32>
    %c0_95 = arith.constant 0 : index
    %c0_96 = arith.constant 0 : index
    %91 = vector.load %arg39[%c0_95, %c0_96] : memref<1x32xf32, #tpu.memory_space<vmem>>, vector<1x32xf32>
    %c0_97 = arith.constant 0 : index
    %c0_98 = arith.constant 0 : index
    %92 = vector.load %arg40[%c0_97, %c0_98] : memref<1x32xf32, #tpu.memory_space<vmem>>, vector<1x32xf32>
    %c0_99 = arith.constant 0 : index
    %c0_100 = arith.constant 0 : index
    %93 = vector.load %arg41[%c0_99, %c0_100] : memref<1x32xf32, #tpu.memory_space<vmem>>, vector<1x32xf32>
    %c0_101 = arith.constant 0 : index
    %c0_102 = arith.constant 0 : index
    %94 = vector.load %arg42[%c0_101, %c0_102] : memref<1x32xf32, #tpu.memory_space<vmem>>, vector<1x32xf32>
    %c0_103 = arith.constant 0 : index
    %c0_104 = arith.constant 0 : index
    %95 = vector.load %arg43[%c0_103, %c0_104] : memref<1x32xf32, #tpu.memory_space<vmem>>, vector<1x32xf32>
    %c0_105 = arith.constant 0 : index
    %c0_106 = arith.constant 0 : index
    %96 = vector.load %arg44[%c0_105, %c0_106] : memref<32x32xf32, #tpu.memory_space<vmem>>, vector<32x32xf32>
    %c0_107 = arith.constant 0 : index
    %c0_108 = arith.constant 0 : index
    %97 = vector.load %arg45[%c0_107, %c0_108] : memref<1x32xf32, #tpu.memory_space<vmem>>, vector<1x32xf32>
    %c0_109 = arith.constant 0 : index
    %c0_110 = arith.constant 0 : index
    %98 = vector.load %arg46[%c0_109, %c0_110] : memref<32x32xf32, #tpu.memory_space<vmem>>, vector<32x32xf32>
    %c0_111 = arith.constant 0 : index
    %c0_112 = arith.constant 0 : index
    %99 = vector.load %arg47[%c0_111, %c0_112] : memref<1x32xf32, #tpu.memory_space<vmem>>, vector<1x32xf32>
    %c0_113 = arith.constant 0 : index
    %c0_114 = arith.constant 0 : index
    %100 = vector.load %arg48[%c0_113, %c0_114] : memref<32x16xf32, #tpu.memory_space<vmem>>, vector<32x16xf32>
    %c0_115 = arith.constant 0 : index
    %c0_116 = arith.constant 0 : index
    %101 = vector.load %arg49[%c0_115, %c0_116] : memref<1x16xf32, #tpu.memory_space<vmem>>, vector<1x16xf32>
    %c0_117 = arith.constant 0 : index
    %c0_118 = arith.constant 0 : index
    %102 = vector.load %arg50[%c0_117, %c0_118] : memref<16x4xf32, #tpu.memory_space<vmem>>, vector<16x4xf32>
    %c0_119 = arith.constant 0 : index
    %c0_120 = arith.constant 0 : index
    %103 = vector.load %arg51[%c0_119, %c0_120] : memref<1x4xf32, #tpu.memory_space<vmem>>, vector<1x4xf32>
    %cst_121 = arith.constant dense<0.000000e+00> : vector<14x32xf32>
    %104 = tpu.matmul %3, %69, %cst_121 {dimension_numbers = #tpu.dot_dimension_numbers<[1], [0], [0], [1], [0, 0, 1, 1], [], []>} : vector<14x11xf32>, vector<11x32xf32>, vector<14x32xf32> -> vector<14x32xf32>
    %105 = vector.broadcast %4 : vector<14x1xf32> to vector<14x32xf32>
    %106 = vector.broadcast %70 : vector<1x32xf32> to vector<14x32xf32>
    %107 = arith.mulf %105, %106 : vector<14x32xf32>
    %108 = arith.addf %104, %107 : vector<14x32xf32>
    %cst_122 = arith.constant dense<0.000000e+00> : vector<14x96xf32>
    %109 = tpu.matmul %108, %72, %cst_122 {dimension_numbers = #tpu.dot_dimension_numbers<[1], [0], [0], [1], [0, 0, 1, 1], [], []>} : vector<14x32xf32>, vector<32x96xf32>, vector<14x96xf32> -> vector<14x96xf32>
    %110 = vector.broadcast %73 : vector<1x96xf32> to vector<14x96xf32>
    %111 = arith.addf %109, %110 : vector<14x96xf32>
    %112 = vector.extract_strided_slice %111 {offsets = [0, 0], sizes = [14, 32], strides = [1, 1]} : vector<14x96xf32> to vector<14x32xf32>
    %113 = vector.extract_strided_slice %111 {offsets = [0, 32], sizes = [14, 32], strides = [1, 1]} : vector<14x96xf32> to vector<14x32xf32>
    %114 = vector.extract_strided_slice %111 {offsets = [0, 64], sizes = [14, 32], strides = [1, 1]} : vector<14x96xf32> to vector<14x32xf32>
    %115 = vector.extract_strided_slice %112 {offsets = [0, 0], sizes = [14, 8], strides = [1, 1]} : vector<14x32xf32> to vector<14x8xf32>
    %116 = vector.extract_strided_slice %113 {offsets = [0, 0], sizes = [14, 8], strides = [1, 1]} : vector<14x32xf32> to vector<14x8xf32>
    %cst_123 = arith.constant dense<0.000000e+00> : vector<14x14xf32>
    %117 = tpu.matmul %115, %116, %cst_123 {dimension_numbers = #tpu.dot_dimension_numbers<[1], [1], [0], [0], [0, 0, 1, 0], [], []>} : vector<14x8xf32>, vector<14x8xf32>, vector<14x14xf32> -> vector<14x14xf32>
    %cst_124 = arith.constant 0.353553385 : f32
    %118 = vector.broadcast %cst_124 : f32 to vector<14x14xf32>
    %119 = arith.mulf %117, %118 : vector<14x14xf32>
    %120 = arith.addf %119, %7 : vector<14x14xf32>
    %cst_125 = arith.constant dense<0xFF800000> : vector<14xf32>
    %121 = vector.multi_reduction <maximumf>, %120, %cst_125 [1] : vector<14x14xf32> to vector<14xf32>
    %122 = vector.shape_cast %121 : vector<14xf32> to vector<14x1xf32>
    %123 = vector.broadcast %122 : vector<14x1xf32> to vector<14x14xf32>
    %124 = arith.subf %120, %123 : vector<14x14xf32>
    %125 = math.exp %124 : vector<14x14xf32>
    %cst_126 = arith.constant dense<0.000000e+00> : vector<14xf32>
    %126 = vector.multi_reduction <add>, %125, %cst_126 [1] : vector<14x14xf32> to vector<14xf32>
    %127 = vector.shape_cast %126 : vector<14xf32> to vector<14x1xf32>
    %128 = vector.broadcast %127 : vector<14x1xf32> to vector<14x14xf32>
    %129 = arith.divf %125, %128 : vector<14x14xf32>
    %130 = vector.extract_strided_slice %114 {offsets = [0, 0], sizes = [14, 8], strides = [1, 1]} : vector<14x32xf32> to vector<14x8xf32>
    %cst_127 = arith.constant dense<0.000000e+00> : vector<14x8xf32>
    %131 = tpu.matmul %129, %130, %cst_127 {dimension_numbers = #tpu.dot_dimension_numbers<[1], [0], [0], [1], [0, 0, 1, 1], [], []>} : vector<14x14xf32>, vector<14x8xf32>, vector<14x8xf32> -> vector<14x8xf32>
    %132 = vector.extract_strided_slice %112 {offsets = [0, 8], sizes = [14, 8], strides = [1, 1]} : vector<14x32xf32> to vector<14x8xf32>
    %133 = vector.extract_strided_slice %113 {offsets = [0, 8], sizes = [14, 8], strides = [1, 1]} : vector<14x32xf32> to vector<14x8xf32>
    %cst_128 = arith.constant dense<0.000000e+00> : vector<14x14xf32>
    %134 = tpu.matmul %132, %133, %cst_128 {dimension_numbers = #tpu.dot_dimension_numbers<[1], [1], [0], [0], [0, 0, 1, 0], [], []>} : vector<14x8xf32>, vector<14x8xf32>, vector<14x14xf32> -> vector<14x14xf32>
    %cst_129 = arith.constant 0.353553385 : f32
    %135 = vector.broadcast %cst_129 : f32 to vector<14x14xf32>
    %136 = arith.mulf %134, %135 : vector<14x14xf32>
    %137 = arith.addf %136, %7 : vector<14x14xf32>
    %cst_130 = arith.constant dense<0xFF800000> : vector<14xf32>
    %138 = vector.multi_reduction <maximumf>, %137, %cst_130 [1] : vector<14x14xf32> to vector<14xf32>
    %139 = vector.shape_cast %138 : vector<14xf32> to vector<14x1xf32>
    %140 = vector.broadcast %139 : vector<14x1xf32> to vector<14x14xf32>
    %141 = arith.subf %137, %140 : vector<14x14xf32>
    %142 = math.exp %141 : vector<14x14xf32>
    %cst_131 = arith.constant dense<0.000000e+00> : vector<14xf32>
    %143 = vector.multi_reduction <add>, %142, %cst_131 [1] : vector<14x14xf32> to vector<14xf32>
    %144 = vector.shape_cast %143 : vector<14xf32> to vector<14x1xf32>
    %145 = vector.broadcast %144 : vector<14x1xf32> to vector<14x14xf32>
    %146 = arith.divf %142, %145 : vector<14x14xf32>
    %147 = vector.extract_strided_slice %114 {offsets = [0, 8], sizes = [14, 8], strides = [1, 1]} : vector<14x32xf32> to vector<14x8xf32>
    %cst_132 = arith.constant dense<0.000000e+00> : vector<14x8xf32>
    %148 = tpu.matmul %146, %147, %cst_132 {dimension_numbers = #tpu.dot_dimension_numbers<[1], [0], [0], [1], [0, 0, 1, 1], [], []>} : vector<14x14xf32>, vector<14x8xf32>, vector<14x8xf32> -> vector<14x8xf32>
    %149 = vector.extract_strided_slice %112 {offsets = [0, 16], sizes = [14, 8], strides = [1, 1]} : vector<14x32xf32> to vector<14x8xf32>
    %150 = vector.extract_strided_slice %113 {offsets = [0, 16], sizes = [14, 8], strides = [1, 1]} : vector<14x32xf32> to vector<14x8xf32>
    %cst_133 = arith.constant dense<0.000000e+00> : vector<14x14xf32>
    %151 = tpu.matmul %149, %150, %cst_133 {dimension_numbers = #tpu.dot_dimension_numbers<[1], [1], [0], [0], [0, 0, 1, 0], [], []>} : vector<14x8xf32>, vector<14x8xf32>, vector<14x14xf32> -> vector<14x14xf32>
    %cst_134 = arith.constant 0.353553385 : f32
    %152 = vector.broadcast %cst_134 : f32 to vector<14x14xf32>
    %153 = arith.mulf %151, %152 : vector<14x14xf32>
    %154 = arith.addf %153, %7 : vector<14x14xf32>
    %cst_135 = arith.constant dense<0xFF800000> : vector<14xf32>
    %155 = vector.multi_reduction <maximumf>, %154, %cst_135 [1] : vector<14x14xf32> to vector<14xf32>
    %156 = vector.shape_cast %155 : vector<14xf32> to vector<14x1xf32>
    %157 = vector.broadcast %156 : vector<14x1xf32> to vector<14x14xf32>
    %158 = arith.subf %154, %157 : vector<14x14xf32>
    %159 = math.exp %158 : vector<14x14xf32>
    %cst_136 = arith.constant dense<0.000000e+00> : vector<14xf32>
    %160 = vector.multi_reduction <add>, %159, %cst_136 [1] : vector<14x14xf32> to vector<14xf32>
    %161 = vector.shape_cast %160 : vector<14xf32> to vector<14x1xf32>
    %162 = vector.broadcast %161 : vector<14x1xf32> to vector<14x14xf32>
    %163 = arith.divf %159, %162 : vector<14x14xf32>
    %164 = vector.extract_strided_slice %114 {offsets = [0, 16], sizes = [14, 8], strides = [1, 1]} : vector<14x32xf32> to vector<14x8xf32>
    %cst_137 = arith.constant dense<0.000000e+00> : vector<14x8xf32>
    %165 = tpu.matmul %163, %164, %cst_137 {dimension_numbers = #tpu.dot_dimension_numbers<[1], [0], [0], [1], [0, 0, 1, 1], [], []>} : vector<14x14xf32>, vector<14x8xf32>, vector<14x8xf32> -> vector<14x8xf32>
    %166 = vector.extract_strided_slice %112 {offsets = [0, 24], sizes = [14, 8], strides = [1, 1]} : vector<14x32xf32> to vector<14x8xf32>
    %167 = vector.extract_strided_slice %113 {offsets = [0, 24], sizes = [14, 8], strides = [1, 1]} : vector<14x32xf32> to vector<14x8xf32>
    %cst_138 = arith.constant dense<0.000000e+00> : vector<14x14xf32>
    %168 = tpu.matmul %166, %167, %cst_138 {dimension_numbers = #tpu.dot_dimension_numbers<[1], [1], [0], [0], [0, 0, 1, 0], [], []>} : vector<14x8xf32>, vector<14x8xf32>, vector<14x14xf32> -> vector<14x14xf32>
    %cst_139 = arith.constant 0.353553385 : f32
    %169 = vector.broadcast %cst_139 : f32 to vector<14x14xf32>
    %170 = arith.mulf %168, %169 : vector<14x14xf32>
    %171 = arith.addf %170, %7 : vector<14x14xf32>
    %cst_140 = arith.constant dense<0xFF800000> : vector<14xf32>
    %172 = vector.multi_reduction <maximumf>, %171, %cst_140 [1] : vector<14x14xf32> to vector<14xf32>
    %173 = vector.shape_cast %172 : vector<14xf32> to vector<14x1xf32>
    %174 = vector.broadcast %173 : vector<14x1xf32> to vector<14x14xf32>
    %175 = arith.subf %171, %174 : vector<14x14xf32>
    %176 = math.exp %175 : vector<14x14xf32>
    %cst_141 = arith.constant dense<0.000000e+00> : vector<14xf32>
    %177 = vector.multi_reduction <add>, %176, %cst_141 [1] : vector<14x14xf32> to vector<14xf32>
    %178 = vector.shape_cast %177 : vector<14xf32> to vector<14x1xf32>
    %179 = vector.broadcast %178 : vector<14x1xf32> to vector<14x14xf32>
    %180 = arith.divf %176, %179 : vector<14x14xf32>
    %181 = vector.extract_strided_slice %114 {offsets = [0, 24], sizes = [14, 8], strides = [1, 1]} : vector<14x32xf32> to vector<14x8xf32>
    %cst_142 = arith.constant dense<0.000000e+00> : vector<14x8xf32>
    %182 = tpu.matmul %180, %181, %cst_142 {dimension_numbers = #tpu.dot_dimension_numbers<[1], [0], [0], [1], [0, 0, 1, 1], [], []>} : vector<14x14xf32>, vector<14x8xf32>, vector<14x8xf32> -> vector<14x8xf32>
    %183 = tpu.concatenate %131, %148, %165, %182 in 1 : vector<14x8xf32>, vector<14x8xf32>, vector<14x8xf32>, vector<14x8xf32> -> vector<14x32xf32>
    %cst_143 = arith.constant dense<0.000000e+00> : vector<14x32xf32>
    %184 = tpu.matmul %183, %74, %cst_143 {dimension_numbers = #tpu.dot_dimension_numbers<[1], [0], [0], [1], [0, 0, 1, 1], [], []>} : vector<14x32xf32>, vector<32x32xf32>, vector<14x32xf32> -> vector<14x32xf32>
    %185 = vector.broadcast %75 : vector<1x32xf32> to vector<14x32xf32>
    %186 = arith.addf %184, %185 : vector<14x32xf32>
    %187 = arith.addf %108, %186 : vector<14x32xf32>
    %cst_144 = arith.constant dense<0.000000e+00> : vector<14xf32>
    %188 = vector.multi_reduction <add>, %187, %cst_144 [1] : vector<14x32xf32> to vector<14xf32>
    %189 = vector.shape_cast %188 : vector<14xf32> to vector<14x1xf32>
    %cst_145 = arith.constant 3.200000e+01 : f32
    %190 = vector.broadcast %cst_145 : f32 to vector<14x1xf32>
    %191 = arith.divf %189, %190 : vector<14x1xf32>
    %192 = vector.broadcast %191 : vector<14x1xf32> to vector<14x32xf32>
    %193 = arith.subf %187, %192 : vector<14x32xf32>
    %194 = arith.mulf %193, %193 : vector<14x32xf32>
    %cst_146 = arith.constant dense<0.000000e+00> : vector<14xf32>
    %195 = vector.multi_reduction <add>, %194, %cst_146 [1] : vector<14x32xf32> to vector<14xf32>
    %196 = vector.shape_cast %195 : vector<14xf32> to vector<14x1xf32>
    %cst_147 = arith.constant 3.200000e+01 : f32
    %197 = vector.broadcast %cst_147 : f32 to vector<14x1xf32>
    %198 = arith.divf %196, %197 : vector<14x1xf32>
    %199 = vector.broadcast %191 : vector<14x1xf32> to vector<14x32xf32>
    %200 = arith.subf %187, %199 : vector<14x32xf32>
    %cst_148 = arith.constant 9.99999974E-6 : f32
    %201 = vector.broadcast %cst_148 : f32 to vector<14x1xf32>
    %202 = arith.addf %198, %201 : vector<14x1xf32>
    %203 = math.rsqrt %202 : vector<14x1xf32>
    %204 = vector.broadcast %203 : vector<14x1xf32> to vector<14x32xf32>
    %205 = arith.mulf %200, %204 : vector<14x32xf32>
    %206 = vector.broadcast %80 : vector<1x32xf32> to vector<14x32xf32>
    %207 = arith.mulf %205, %206 : vector<14x32xf32>
    %208 = vector.broadcast %81 : vector<1x32xf32> to vector<14x32xf32>
    %209 = arith.addf %207, %208 : vector<14x32xf32>
    %cst_149 = arith.constant dense<0.000000e+00> : vector<14x128xf32>
    %210 = tpu.matmul %209, %76, %cst_149 {dimension_numbers = #tpu.dot_dimension_numbers<[1], [0], [0], [1], [0, 0, 1, 1], [], []>} : vector<14x32xf32>, vector<32x128xf32>, vector<14x128xf32> -> vector<14x128xf32>
    %211 = vector.broadcast %77 : vector<1x128xf32> to vector<14x128xf32>
    %212 = arith.addf %210, %211 : vector<14x128xf32>
    %cst_150 = arith.constant 5.000000e-01 : f32
    %213 = vector.broadcast %cst_150 : f32 to vector<14x128xf32>
    %214 = arith.mulf %213, %212 : vector<14x128xf32>
    %cst_151 = arith.constant 0.707106769 : f32
    %215 = vector.broadcast %cst_151 : f32 to vector<14x128xf32>
    %216 = arith.mulf %212, %215 : vector<14x128xf32>
    %217 = math.absf %216 : vector<14x128xf32>
    %cst_152 = arith.constant 0.327591091 : f32
    %218 = vector.broadcast %cst_152 : f32 to vector<14x128xf32>
    %219 = arith.mulf %218, %217 : vector<14x128xf32>
    %cst_153 = arith.constant 1.000000e+00 : f32
    %220 = vector.broadcast %cst_153 : f32 to vector<14x128xf32>
    %221 = arith.addf %220, %219 : vector<14x128xf32>
    %cst_154 = arith.constant 1.000000e+00 : f32
    %222 = vector.broadcast %cst_154 : f32 to vector<14x128xf32>
    %223 = arith.divf %222, %221 : vector<14x128xf32>
    %cst_155 = arith.constant 1.06140542 : f32
    %224 = vector.broadcast %cst_155 : f32 to vector<14x128xf32>
    %225 = arith.mulf %224, %223 : vector<14x128xf32>
    %cst_156 = arith.constant -1.45315206 : f32
    %226 = vector.broadcast %cst_156 : f32 to vector<14x128xf32>
    %227 = arith.addf %225, %226 : vector<14x128xf32>
    %228 = arith.mulf %227, %223 : vector<14x128xf32>
    %cst_157 = arith.constant 1.42141378 : f32
    %229 = vector.broadcast %cst_157 : f32 to vector<14x128xf32>
    %230 = arith.addf %228, %229 : vector<14x128xf32>
    %231 = arith.mulf %230, %223 : vector<14x128xf32>
    %cst_158 = arith.constant -0.284496725 : f32
    %232 = vector.broadcast %cst_158 : f32 to vector<14x128xf32>
    %233 = arith.addf %231, %232 : vector<14x128xf32>
    %234 = arith.mulf %233, %223 : vector<14x128xf32>
    %cst_159 = arith.constant 0.254829586 : f32
    %235 = vector.broadcast %cst_159 : f32 to vector<14x128xf32>
    %236 = arith.addf %234, %235 : vector<14x128xf32>
    %237 = arith.mulf %236, %223 : vector<14x128xf32>
    %cst_160 = arith.constant 0.000000e+00 : f32
    %238 = vector.broadcast %cst_160 : f32 to vector<14x128xf32>
    %239 = arith.subf %238, %217 : vector<14x128xf32>
    %240 = arith.mulf %239, %217 : vector<14x128xf32>
    %241 = math.exp %240 : vector<14x128xf32>
    %242 = arith.mulf %237, %241 : vector<14x128xf32>
    %cst_161 = arith.constant 1.000000e+00 : f32
    %243 = vector.broadcast %cst_161 : f32 to vector<14x128xf32>
    %244 = arith.subf %243, %242 : vector<14x128xf32>
    %cst_162 = arith.constant 0.000000e+00 : f32
    %245 = vector.broadcast %cst_162 : f32 to vector<14x128xf32>
    %246 = arith.cmpf oge, %216, %245 : vector<14x128xf32>
    %cst_163 = arith.constant 0.000000e+00 : f32
    %247 = vector.broadcast %cst_163 : f32 to vector<14x128xf32>
    %248 = arith.subf %247, %244 : vector<14x128xf32>
    %249 = arith.select %246, %244, %248 : vector<14x128xi1>, vector<14x128xf32>
    %cst_164 = arith.constant 1.000000e+00 : f32
    %250 = vector.broadcast %cst_164 : f32 to vector<14x128xf32>
    %251 = arith.addf %250, %249 : vector<14x128xf32>
    %252 = arith.mulf %214, %251 : vector<14x128xf32>
    %cst_165 = arith.constant dense<0.000000e+00> : vector<14x32xf32>
    %253 = tpu.matmul %252, %78, %cst_165 {dimension_numbers = #tpu.dot_dimension_numbers<[1], [0], [0], [1], [0, 0, 1, 1], [], []>} : vector<14x128xf32>, vector<128x32xf32>, vector<14x32xf32> -> vector<14x32xf32>
    %254 = vector.broadcast %79 : vector<1x32xf32> to vector<14x32xf32>
    %255 = arith.addf %253, %254 : vector<14x32xf32>
    %256 = arith.addf %209, %255 : vector<14x32xf32>
    %cst_166 = arith.constant dense<0.000000e+00> : vector<14xf32>
    %257 = vector.multi_reduction <add>, %256, %cst_166 [1] : vector<14x32xf32> to vector<14xf32>
    %258 = vector.shape_cast %257 : vector<14xf32> to vector<14x1xf32>
    %cst_167 = arith.constant 3.200000e+01 : f32
    %259 = vector.broadcast %cst_167 : f32 to vector<14x1xf32>
    %260 = arith.divf %258, %259 : vector<14x1xf32>
    %261 = vector.broadcast %260 : vector<14x1xf32> to vector<14x32xf32>
    %262 = arith.subf %256, %261 : vector<14x32xf32>
    %263 = arith.mulf %262, %262 : vector<14x32xf32>
    %cst_168 = arith.constant dense<0.000000e+00> : vector<14xf32>
    %264 = vector.multi_reduction <add>, %263, %cst_168 [1] : vector<14x32xf32> to vector<14xf32>
    %265 = vector.shape_cast %264 : vector<14xf32> to vector<14x1xf32>
    %cst_169 = arith.constant 3.200000e+01 : f32
    %266 = vector.broadcast %cst_169 : f32 to vector<14x1xf32>
    %267 = arith.divf %265, %266 : vector<14x1xf32>
    %268 = vector.broadcast %260 : vector<14x1xf32> to vector<14x32xf32>
    %269 = arith.subf %256, %268 : vector<14x32xf32>
    %cst_170 = arith.constant 9.99999974E-6 : f32
    %270 = vector.broadcast %cst_170 : f32 to vector<14x1xf32>
    %271 = arith.addf %267, %270 : vector<14x1xf32>
    %272 = math.rsqrt %271 : vector<14x1xf32>
    %273 = vector.broadcast %272 : vector<14x1xf32> to vector<14x32xf32>
    %274 = arith.mulf %269, %273 : vector<14x32xf32>
    %275 = vector.broadcast %82 : vector<1x32xf32> to vector<14x32xf32>
    %276 = arith.mulf %274, %275 : vector<14x32xf32>
    %277 = vector.broadcast %83 : vector<1x32xf32> to vector<14x32xf32>
    %278 = arith.addf %276, %277 : vector<14x32xf32>
    %cst_171 = arith.constant dense<0.000000e+00> : vector<11x32xf32>
    %279 = tpu.matmul %5, %278, %cst_171 {dimension_numbers = #tpu.dot_dimension_numbers<[1], [0], [0], [1], [0, 0, 1, 1], [], []>} : vector<11x14xf32>, vector<14x32xf32>, vector<11x32xf32> -> vector<11x32xf32>
    %cst_172 = arith.constant dense<0.000000e+00> : vector<14x32xf32>
    %280 = tpu.matmul %3, %279, %cst_172 {dimension_numbers = #tpu.dot_dimension_numbers<[1], [0], [0], [1], [0, 0, 1, 1], [], []>} : vector<14x11xf32>, vector<11x32xf32>, vector<14x32xf32> -> vector<14x32xf32>
    %281 = vector.broadcast %4 : vector<14x1xf32> to vector<14x32xf32>
    %282 = vector.broadcast %71 : vector<1x32xf32> to vector<14x32xf32>
    %283 = arith.mulf %281, %282 : vector<14x32xf32>
    %284 = arith.addf %280, %283 : vector<14x32xf32>
    %cst_173 = arith.constant dense<0.000000e+00> : vector<14x96xf32>
    %285 = tpu.matmul %284, %84, %cst_173 {dimension_numbers = #tpu.dot_dimension_numbers<[1], [0], [0], [1], [0, 0, 1, 1], [], []>} : vector<14x32xf32>, vector<32x96xf32>, vector<14x96xf32> -> vector<14x96xf32>
    %286 = vector.broadcast %85 : vector<1x96xf32> to vector<14x96xf32>
    %287 = arith.addf %285, %286 : vector<14x96xf32>
    %288 = vector.extract_strided_slice %287 {offsets = [0, 0], sizes = [14, 32], strides = [1, 1]} : vector<14x96xf32> to vector<14x32xf32>
    %289 = vector.extract_strided_slice %287 {offsets = [0, 32], sizes = [14, 32], strides = [1, 1]} : vector<14x96xf32> to vector<14x32xf32>
    %290 = vector.extract_strided_slice %287 {offsets = [0, 64], sizes = [14, 32], strides = [1, 1]} : vector<14x96xf32> to vector<14x32xf32>
    %291 = vector.extract_strided_slice %288 {offsets = [0, 0], sizes = [14, 8], strides = [1, 1]} : vector<14x32xf32> to vector<14x8xf32>
    %292 = vector.extract_strided_slice %289 {offsets = [0, 0], sizes = [14, 8], strides = [1, 1]} : vector<14x32xf32> to vector<14x8xf32>
    %cst_174 = arith.constant dense<0.000000e+00> : vector<14x14xf32>
    %293 = tpu.matmul %291, %292, %cst_174 {dimension_numbers = #tpu.dot_dimension_numbers<[1], [1], [0], [0], [0, 0, 1, 0], [], []>} : vector<14x8xf32>, vector<14x8xf32>, vector<14x14xf32> -> vector<14x14xf32>
    %cst_175 = arith.constant 0.353553385 : f32
    %294 = vector.broadcast %cst_175 : f32 to vector<14x14xf32>
    %295 = arith.mulf %293, %294 : vector<14x14xf32>
    %296 = arith.addf %295, %7 : vector<14x14xf32>
    %cst_176 = arith.constant dense<0xFF800000> : vector<14xf32>
    %297 = vector.multi_reduction <maximumf>, %296, %cst_176 [1] : vector<14x14xf32> to vector<14xf32>
    %298 = vector.shape_cast %297 : vector<14xf32> to vector<14x1xf32>
    %299 = vector.broadcast %298 : vector<14x1xf32> to vector<14x14xf32>
    %300 = arith.subf %296, %299 : vector<14x14xf32>
    %301 = math.exp %300 : vector<14x14xf32>
    %cst_177 = arith.constant dense<0.000000e+00> : vector<14xf32>
    %302 = vector.multi_reduction <add>, %301, %cst_177 [1] : vector<14x14xf32> to vector<14xf32>
    %303 = vector.shape_cast %302 : vector<14xf32> to vector<14x1xf32>
    %304 = vector.broadcast %303 : vector<14x1xf32> to vector<14x14xf32>
    %305 = arith.divf %301, %304 : vector<14x14xf32>
    %306 = vector.extract_strided_slice %290 {offsets = [0, 0], sizes = [14, 8], strides = [1, 1]} : vector<14x32xf32> to vector<14x8xf32>
    %cst_178 = arith.constant dense<0.000000e+00> : vector<14x8xf32>
    %307 = tpu.matmul %305, %306, %cst_178 {dimension_numbers = #tpu.dot_dimension_numbers<[1], [0], [0], [1], [0, 0, 1, 1], [], []>} : vector<14x14xf32>, vector<14x8xf32>, vector<14x8xf32> -> vector<14x8xf32>
    %308 = vector.extract_strided_slice %288 {offsets = [0, 8], sizes = [14, 8], strides = [1, 1]} : vector<14x32xf32> to vector<14x8xf32>
    %309 = vector.extract_strided_slice %289 {offsets = [0, 8], sizes = [14, 8], strides = [1, 1]} : vector<14x32xf32> to vector<14x8xf32>
    %cst_179 = arith.constant dense<0.000000e+00> : vector<14x14xf32>
    %310 = tpu.matmul %308, %309, %cst_179 {dimension_numbers = #tpu.dot_dimension_numbers<[1], [1], [0], [0], [0, 0, 1, 0], [], []>} : vector<14x8xf32>, vector<14x8xf32>, vector<14x14xf32> -> vector<14x14xf32>
    %cst_180 = arith.constant 0.353553385 : f32
    %311 = vector.broadcast %cst_180 : f32 to vector<14x14xf32>
    %312 = arith.mulf %310, %311 : vector<14x14xf32>
    %313 = arith.addf %312, %7 : vector<14x14xf32>
    %cst_181 = arith.constant dense<0xFF800000> : vector<14xf32>
    %314 = vector.multi_reduction <maximumf>, %313, %cst_181 [1] : vector<14x14xf32> to vector<14xf32>
    %315 = vector.shape_cast %314 : vector<14xf32> to vector<14x1xf32>
    %316 = vector.broadcast %315 : vector<14x1xf32> to vector<14x14xf32>
    %317 = arith.subf %313, %316 : vector<14x14xf32>
    %318 = math.exp %317 : vector<14x14xf32>
    %cst_182 = arith.constant dense<0.000000e+00> : vector<14xf32>
    %319 = vector.multi_reduction <add>, %318, %cst_182 [1] : vector<14x14xf32> to vector<14xf32>
    %320 = vector.shape_cast %319 : vector<14xf32> to vector<14x1xf32>
    %321 = vector.broadcast %320 : vector<14x1xf32> to vector<14x14xf32>
    %322 = arith.divf %318, %321 : vector<14x14xf32>
    %323 = vector.extract_strided_slice %290 {offsets = [0, 8], sizes = [14, 8], strides = [1, 1]} : vector<14x32xf32> to vector<14x8xf32>
    %cst_183 = arith.constant dense<0.000000e+00> : vector<14x8xf32>
    %324 = tpu.matmul %322, %323, %cst_183 {dimension_numbers = #tpu.dot_dimension_numbers<[1], [0], [0], [1], [0, 0, 1, 1], [], []>} : vector<14x14xf32>, vector<14x8xf32>, vector<14x8xf32> -> vector<14x8xf32>
    %325 = vector.extract_strided_slice %288 {offsets = [0, 16], sizes = [14, 8], strides = [1, 1]} : vector<14x32xf32> to vector<14x8xf32>
    %326 = vector.extract_strided_slice %289 {offsets = [0, 16], sizes = [14, 8], strides = [1, 1]} : vector<14x32xf32> to vector<14x8xf32>
    %cst_184 = arith.constant dense<0.000000e+00> : vector<14x14xf32>
    %327 = tpu.matmul %325, %326, %cst_184 {dimension_numbers = #tpu.dot_dimension_numbers<[1], [1], [0], [0], [0, 0, 1, 0], [], []>} : vector<14x8xf32>, vector<14x8xf32>, vector<14x14xf32> -> vector<14x14xf32>
    %cst_185 = arith.constant 0.353553385 : f32
    %328 = vector.broadcast %cst_185 : f32 to vector<14x14xf32>
    %329 = arith.mulf %327, %328 : vector<14x14xf32>
    %330 = arith.addf %329, %7 : vector<14x14xf32>
    %cst_186 = arith.constant dense<0xFF800000> : vector<14xf32>
    %331 = vector.multi_reduction <maximumf>, %330, %cst_186 [1] : vector<14x14xf32> to vector<14xf32>
    %332 = vector.shape_cast %331 : vector<14xf32> to vector<14x1xf32>
    %333 = vector.broadcast %332 : vector<14x1xf32> to vector<14x14xf32>
    %334 = arith.subf %330, %333 : vector<14x14xf32>
    %335 = math.exp %334 : vector<14x14xf32>
    %cst_187 = arith.constant dense<0.000000e+00> : vector<14xf32>
    %336 = vector.multi_reduction <add>, %335, %cst_187 [1] : vector<14x14xf32> to vector<14xf32>
    %337 = vector.shape_cast %336 : vector<14xf32> to vector<14x1xf32>
    %338 = vector.broadcast %337 : vector<14x1xf32> to vector<14x14xf32>
    %339 = arith.divf %335, %338 : vector<14x14xf32>
    %340 = vector.extract_strided_slice %290 {offsets = [0, 16], sizes = [14, 8], strides = [1, 1]} : vector<14x32xf32> to vector<14x8xf32>
    %cst_188 = arith.constant dense<0.000000e+00> : vector<14x8xf32>
    %341 = tpu.matmul %339, %340, %cst_188 {dimension_numbers = #tpu.dot_dimension_numbers<[1], [0], [0], [1], [0, 0, 1, 1], [], []>} : vector<14x14xf32>, vector<14x8xf32>, vector<14x8xf32> -> vector<14x8xf32>
    %342 = vector.extract_strided_slice %288 {offsets = [0, 24], sizes = [14, 8], strides = [1, 1]} : vector<14x32xf32> to vector<14x8xf32>
    %343 = vector.extract_strided_slice %289 {offsets = [0, 24], sizes = [14, 8], strides = [1, 1]} : vector<14x32xf32> to vector<14x8xf32>
    %cst_189 = arith.constant dense<0.000000e+00> : vector<14x14xf32>
    %344 = tpu.matmul %342, %343, %cst_189 {dimension_numbers = #tpu.dot_dimension_numbers<[1], [1], [0], [0], [0, 0, 1, 0], [], []>} : vector<14x8xf32>, vector<14x8xf32>, vector<14x14xf32> -> vector<14x14xf32>
    %cst_190 = arith.constant 0.353553385 : f32
    %345 = vector.broadcast %cst_190 : f32 to vector<14x14xf32>
    %346 = arith.mulf %344, %345 : vector<14x14xf32>
    %347 = arith.addf %346, %7 : vector<14x14xf32>
    %cst_191 = arith.constant dense<0xFF800000> : vector<14xf32>
    %348 = vector.multi_reduction <maximumf>, %347, %cst_191 [1] : vector<14x14xf32> to vector<14xf32>
    %349 = vector.shape_cast %348 : vector<14xf32> to vector<14x1xf32>
    %350 = vector.broadcast %349 : vector<14x1xf32> to vector<14x14xf32>
    %351 = arith.subf %347, %350 : vector<14x14xf32>
    %352 = math.exp %351 : vector<14x14xf32>
    %cst_192 = arith.constant dense<0.000000e+00> : vector<14xf32>
    %353 = vector.multi_reduction <add>, %352, %cst_192 [1] : vector<14x14xf32> to vector<14xf32>
    %354 = vector.shape_cast %353 : vector<14xf32> to vector<14x1xf32>
    %355 = vector.broadcast %354 : vector<14x1xf32> to vector<14x14xf32>
    %356 = arith.divf %352, %355 : vector<14x14xf32>
    %357 = vector.extract_strided_slice %290 {offsets = [0, 24], sizes = [14, 8], strides = [1, 1]} : vector<14x32xf32> to vector<14x8xf32>
    %cst_193 = arith.constant dense<0.000000e+00> : vector<14x8xf32>
    %358 = tpu.matmul %356, %357, %cst_193 {dimension_numbers = #tpu.dot_dimension_numbers<[1], [0], [0], [1], [0, 0, 1, 1], [], []>} : vector<14x14xf32>, vector<14x8xf32>, vector<14x8xf32> -> vector<14x8xf32>
    %359 = tpu.concatenate %307, %324, %341, %358 in 1 : vector<14x8xf32>, vector<14x8xf32>, vector<14x8xf32>, vector<14x8xf32> -> vector<14x32xf32>
    %cst_194 = arith.constant dense<0.000000e+00> : vector<14x32xf32>
    %360 = tpu.matmul %359, %86, %cst_194 {dimension_numbers = #tpu.dot_dimension_numbers<[1], [0], [0], [1], [0, 0, 1, 1], [], []>} : vector<14x32xf32>, vector<32x32xf32>, vector<14x32xf32> -> vector<14x32xf32>
    %361 = vector.broadcast %87 : vector<1x32xf32> to vector<14x32xf32>
    %362 = arith.addf %360, %361 : vector<14x32xf32>
    %363 = arith.addf %284, %362 : vector<14x32xf32>
    %cst_195 = arith.constant dense<0.000000e+00> : vector<14xf32>
    %364 = vector.multi_reduction <add>, %363, %cst_195 [1] : vector<14x32xf32> to vector<14xf32>
    %365 = vector.shape_cast %364 : vector<14xf32> to vector<14x1xf32>
    %cst_196 = arith.constant 3.200000e+01 : f32
    %366 = vector.broadcast %cst_196 : f32 to vector<14x1xf32>
    %367 = arith.divf %365, %366 : vector<14x1xf32>
    %368 = vector.broadcast %367 : vector<14x1xf32> to vector<14x32xf32>
    %369 = arith.subf %363, %368 : vector<14x32xf32>
    %370 = arith.mulf %369, %369 : vector<14x32xf32>
    %cst_197 = arith.constant dense<0.000000e+00> : vector<14xf32>
    %371 = vector.multi_reduction <add>, %370, %cst_197 [1] : vector<14x32xf32> to vector<14xf32>
    %372 = vector.shape_cast %371 : vector<14xf32> to vector<14x1xf32>
    %cst_198 = arith.constant 3.200000e+01 : f32
    %373 = vector.broadcast %cst_198 : f32 to vector<14x1xf32>
    %374 = arith.divf %372, %373 : vector<14x1xf32>
    %375 = vector.broadcast %367 : vector<14x1xf32> to vector<14x32xf32>
    %376 = arith.subf %363, %375 : vector<14x32xf32>
    %cst_199 = arith.constant 9.99999974E-6 : f32
    %377 = vector.broadcast %cst_199 : f32 to vector<14x1xf32>
    %378 = arith.addf %374, %377 : vector<14x1xf32>
    %379 = math.rsqrt %378 : vector<14x1xf32>
    %380 = vector.broadcast %379 : vector<14x1xf32> to vector<14x32xf32>
    %381 = arith.mulf %376, %380 : vector<14x32xf32>
    %382 = vector.broadcast %92 : vector<1x32xf32> to vector<14x32xf32>
    %383 = arith.mulf %381, %382 : vector<14x32xf32>
    %384 = vector.broadcast %93 : vector<1x32xf32> to vector<14x32xf32>
    %385 = arith.addf %383, %384 : vector<14x32xf32>
    %cst_200 = arith.constant dense<0.000000e+00> : vector<14x128xf32>
    %386 = tpu.matmul %385, %88, %cst_200 {dimension_numbers = #tpu.dot_dimension_numbers<[1], [0], [0], [1], [0, 0, 1, 1], [], []>} : vector<14x32xf32>, vector<32x128xf32>, vector<14x128xf32> -> vector<14x128xf32>
    %387 = vector.broadcast %89 : vector<1x128xf32> to vector<14x128xf32>
    %388 = arith.addf %386, %387 : vector<14x128xf32>
    %cst_201 = arith.constant 0.000000e+00 : f32
    %389 = vector.broadcast %cst_201 : f32 to vector<14x128xf32>
    %390 = arith.maximumf %388, %389 : vector<14x128xf32>
    %cst_202 = arith.constant dense<0.000000e+00> : vector<14x32xf32>
    %391 = tpu.matmul %390, %90, %cst_202 {dimension_numbers = #tpu.dot_dimension_numbers<[1], [0], [0], [1], [0, 0, 1, 1], [], []>} : vector<14x128xf32>, vector<128x32xf32>, vector<14x32xf32> -> vector<14x32xf32>
    %392 = vector.broadcast %91 : vector<1x32xf32> to vector<14x32xf32>
    %393 = arith.addf %391, %392 : vector<14x32xf32>
    %394 = arith.addf %385, %393 : vector<14x32xf32>
    %cst_203 = arith.constant dense<0.000000e+00> : vector<14xf32>
    %395 = vector.multi_reduction <add>, %394, %cst_203 [1] : vector<14x32xf32> to vector<14xf32>
    %396 = vector.shape_cast %395 : vector<14xf32> to vector<14x1xf32>
    %cst_204 = arith.constant 3.200000e+01 : f32
    %397 = vector.broadcast %cst_204 : f32 to vector<14x1xf32>
    %398 = arith.divf %396, %397 : vector<14x1xf32>
    %399 = vector.broadcast %398 : vector<14x1xf32> to vector<14x32xf32>
    %400 = arith.subf %394, %399 : vector<14x32xf32>
    %401 = arith.mulf %400, %400 : vector<14x32xf32>
    %cst_205 = arith.constant dense<0.000000e+00> : vector<14xf32>
    %402 = vector.multi_reduction <add>, %401, %cst_205 [1] : vector<14x32xf32> to vector<14xf32>
    %403 = vector.shape_cast %402 : vector<14xf32> to vector<14x1xf32>
    %cst_206 = arith.constant 3.200000e+01 : f32
    %404 = vector.broadcast %cst_206 : f32 to vector<14x1xf32>
    %405 = arith.divf %403, %404 : vector<14x1xf32>
    %406 = vector.broadcast %398 : vector<14x1xf32> to vector<14x32xf32>
    %407 = arith.subf %394, %406 : vector<14x32xf32>
    %cst_207 = arith.constant 9.99999974E-6 : f32
    %408 = vector.broadcast %cst_207 : f32 to vector<14x1xf32>
    %409 = arith.addf %405, %408 : vector<14x1xf32>
    %410 = math.rsqrt %409 : vector<14x1xf32>
    %411 = vector.broadcast %410 : vector<14x1xf32> to vector<14x32xf32>
    %412 = arith.mulf %407, %411 : vector<14x32xf32>
    %413 = vector.broadcast %94 : vector<1x32xf32> to vector<14x32xf32>
    %414 = arith.mulf %412, %413 : vector<14x32xf32>
    %415 = vector.broadcast %95 : vector<1x32xf32> to vector<14x32xf32>
    %416 = arith.addf %414, %415 : vector<14x32xf32>
    %cst_208 = arith.constant dense<0.000000e+00> : vector<2x32xf32>
    %417 = tpu.matmul %6, %416, %cst_208 {dimension_numbers = #tpu.dot_dimension_numbers<[1], [0], [0], [1], [0, 0, 1, 1], [], []>} : vector<2x14xf32>, vector<14x32xf32>, vector<2x32xf32> -> vector<2x32xf32>
    %c0_209 = arith.constant 0 : index
    %c0_210 = arith.constant 0 : index
    %418 = vector.load %arg52[%c0_209, %c0_210] : memref<2x32xf32, #tpu.memory_space<vmem>>, vector<2x32xf32>
    tpu.vector_store %arg52[%c0_209, %c0_210], %417 {strides = array<i32>} : memref<2x32xf32, #tpu.memory_space<vmem>>, vector<2x32xf32>,
    %cst_211 = arith.constant dense<0.000000e+00> : vector<11x32xf32>
    %419 = tpu.matmul %5, %416, %cst_211 {dimension_numbers = #tpu.dot_dimension_numbers<[1], [0], [0], [1], [0, 0, 1, 1], [], []>} : vector<11x14xf32>, vector<14x32xf32>, vector<11x32xf32> -> vector<11x32xf32>
    %cst_212 = arith.constant dense<0.000000e+00> : vector<11x32xf32>
    %420 = tpu.matmul %419, %96, %cst_212 {dimension_numbers = #tpu.dot_dimension_numbers<[1], [0], [0], [1], [0, 0, 1, 1], [], []>} : vector<11x32xf32>, vector<32x32xf32>, vector<11x32xf32> -> vector<11x32xf32>
    %421 = vector.broadcast %97 : vector<1x32xf32> to vector<11x32xf32>
    %422 = arith.addf %420, %421 : vector<11x32xf32>
    %cst_213 = arith.constant 0.000000e+00 : f32
    %423 = vector.broadcast %cst_213 : f32 to vector<11x32xf32>
    %424 = arith.maximumf %422, %423 : vector<11x32xf32>
    %cst_214 = arith.constant dense<0.000000e+00> : vector<11x32xf32>
    %425 = tpu.matmul %424, %98, %cst_214 {dimension_numbers = #tpu.dot_dimension_numbers<[1], [0], [0], [1], [0, 0, 1, 1], [], []>} : vector<11x32xf32>, vector<32x32xf32>, vector<11x32xf32> -> vector<11x32xf32>
    %426 = vector.broadcast %99 : vector<1x32xf32> to vector<11x32xf32>
    %427 = arith.addf %425, %426 : vector<11x32xf32>
    %cst_215 = arith.constant dense<0.000000e+00> : vector<11x16xf32>
    %428 = tpu.matmul %427, %100, %cst_215 {dimension_numbers = #tpu.dot_dimension_numbers<[1], [0], [0], [1], [0, 0, 1, 1], [], []>} : vector<11x32xf32>, vector<32x16xf32>, vector<11x16xf32> -> vector<11x16xf32>
    %429 = vector.broadcast %101 : vector<1x16xf32> to vector<11x16xf32>
    %430 = arith.addf %428, %429 : vector<11x16xf32>
    %cst_216 = arith.constant 0.000000e+00 : f32
    %431 = vector.broadcast %cst_216 : f32 to vector<11x16xf32>
    %432 = arith.cmpf ogt, %430, %431 : vector<11x16xf32>
    %cst_217 = arith.constant 1.000000e-01 : f32
    %433 = vector.broadcast %cst_217 : f32 to vector<11x16xf32>
    %434 = arith.mulf %433, %430 : vector<11x16xf32>
    %435 = arith.select %432, %430, %434 : vector<11x16xi1>, vector<11x16xf32>
    %cst_218 = arith.constant dense<0.000000e+00> : vector<11x4xf32>
    %436 = tpu.matmul %435, %102, %cst_218 {dimension_numbers = #tpu.dot_dimension_numbers<[1], [0], [0], [1], [0, 0, 1, 1], [], []>} : vector<11x16xf32>, vector<16x4xf32>, vector<11x4xf32> -> vector<11x4xf32>
    %437 = vector.broadcast %103 : vector<1x4xf32> to vector<11x4xf32>
    %438 = arith.addf %436, %437 : vector<11x4xf32>
    %c0_219 = arith.constant 0 : index
    %c0_220 = arith.constant 0 : index
    %439 = vector.load %arg53[%c0_219, %c0_220] : memref<11x4xf32, #tpu.memory_space<vmem>>, vector<11x4xf32>
    tpu.vector_store %arg53[%c0_219, %c0_220], %438 {strides = array<i32>} : memref<11x4xf32, #tpu.memory_space<vmem>>, vector<11x4xf32>,
    return
  }
}

</mosaic_0001>

<llo_original>
// kernel: tpu_custom_call.1
$region0: #{tpu_custom_call.1}
  #allocation0 [shape = 'u32[]', space=smem, size = 0x4, offset = 0x4, fixed_abs, tag = 'smem constant byte address 0x4 - core index']
  #allocation1 [shape = 'u32[72,128]{1,0:T(1,128)}', space=vmem, size = 0x9000, scoped, tag = 'internal scratch']
  %s0 = inlined_call_operand.smem [shape: u32[54], index: -1, kind: input, shape index: {}]
  %s1 = sld [smem:[%s0]]
  %s2 = scalar_lea.smem %s0, 1
  %s3 = sld [smem:[%s2]]
  %s4 = scalar_lea.smem %s0, 2
  %s5 = sld [smem:[%s4]]
  %s6 = scalar_lea.smem %s0, 3
  %s7 = sld [smem:[%s6]]
  %s8 = scalar_lea.smem %s0, 4
  %s9 = sld [smem:[%s8]]
  %s10 = scalar_lea.smem %s0, 5
  %s11 = sld [smem:[%s10]]
  %s12 = scalar_lea.smem %s0, 6
  %s13 = sld [smem:[%s12]]
  %s14 = scalar_lea.smem %s0, 7
  %s15 = sld [smem:[%s14]]
  %s16 = scalar_lea.smem %s0, 8
  %s17 = sld [smem:[%s16]]
  %s18 = scalar_lea.smem %s0, 9
  %s19 = sld [smem:[%s18]]
  %s20 = scalar_lea.smem %s0, 10
  %s21 = sld [smem:[%s20]]
  %s22 = scalar_lea.smem %s0, 11
  %s23 = sld [smem:[%s22]]
  %s24 = scalar_lea.smem %s0, 12
  %s25 = sld [smem:[%s24]]
  %s26 = scalar_lea.smem %s0, 13
  %s27 = sld [smem:[%s26]]
  %s28 = scalar_lea.smem %s0, 14
  %s29 = sld [smem:[%s28]]
  %s30 = scalar_lea.smem %s0, 15
  %s31 = sld [smem:[%s30]]
  %s32 = scalar_lea.smem %s0, 16
  %s33 = sld [smem:[%s32]]
  %s34 = scalar_lea.smem %s0, 17
  %s35 = sld [smem:[%s34]]
  %s36 = scalar_lea.smem %s0, 18
  %s37 = sld [smem:[%s36]]
  %s38 = scalar_lea.smem %s0, 19
  %s39 = sld [smem:[%s38]]
  %s40 = scalar_lea.smem %s0, 20
  %s41 = sld [smem:[%s40]]
  %s42 = scalar_lea.smem %s0, 21
  %s43 = sld [smem:[%s42]]
  %s44 = scalar_lea.smem %s0, 22
  %s45 = sld [smem:[%s44]]
  %s46 = scalar_lea.smem %s0, 23
  %s47 = sld [smem:[%s46]]
  %s48 = scalar_lea.smem %s0, 24
  %s49 = sld [smem:[%s48]]
  %s50 = scalar_lea.smem %s0, 25
  %s51 = sld [smem:[%s50]]
  %s52 = scalar_lea.smem %s0, 26
  %s53 = sld [smem:[%s52]]
  %s54 = scalar_lea.smem %s0, 27
  %s55 = sld [smem:[%s54]]
  %s56 = scalar_lea.smem %s0, 28
  %s57 = sld [smem:[%s56]]
  %s58 = scalar_lea.smem %s0, 29
  %s59 = sld [smem:[%s58]]
  %s60 = scalar_lea.smem %s0, 30
  %s61 = sld [smem:[%s60]]
  %s62 = scalar_lea.smem %s0, 31
  %s63 = sld [smem:[%s62]]
  %s64 = scalar_lea.smem %s0, 32
  %s65 = sld [smem:[%s64]]
  %s66 = scalar_lea.smem %s0, 33
  %s67 = sld [smem:[%s66]]
  %s68 = scalar_lea.smem %s0, 34
  %s69 = sld [smem:[%s68]]
  %s70 = scalar_lea.smem %s0, 35
  %s71 = sld [smem:[%s70]]
  %s72 = scalar_lea.smem %s0, 36
  %s73 = sld [smem:[%s72]]
  %s74 = scalar_lea.smem %s0, 37
  %s75 = sld [smem:[%s74]]
  %s76 = scalar_lea.smem %s0, 38
  %s77 = sld [smem:[%s76]]
  %s78 = scalar_lea.smem %s0, 39
  %s79 = sld [smem:[%s78]]
  %s80 = scalar_lea.smem %s0, 40
  %s81 = sld [smem:[%s80]]
  %s82 = scalar_lea.smem %s0, 41
  %s83 = sld [smem:[%s82]]
  %s84 = scalar_lea.smem %s0, 42
  %s85 = sld [smem:[%s84]]
  %s86 = scalar_lea.smem %s0, 43
  %s87 = sld [smem:[%s86]]
  %s88 = scalar_lea.smem %s0, 44
  %s89 = sld [smem:[%s88]]
  %s90 = scalar_lea.smem %s0, 45
  %s91 = sld [smem:[%s90]]
  %s92 = scalar_lea.smem %s0, 46
  %s93 = sld [smem:[%s92]]
  %s94 = scalar_lea.smem %s0, 47
  %s95 = sld [smem:[%s94]]
  %s96 = scalar_lea.smem %s0, 48
  %s97 = sld [smem:[%s96]]
  %s98 = scalar_lea.smem %s0, 49
  %s99 = sld [smem:[%s98]]
  %s100 = scalar_lea.smem %s0, 50
  %s101 = sld [smem:[%s100]]
  %s102 = scalar_lea.smem %s0, 51
  %s103 = sld [smem:[%s102]]
  %s104 = scalar_lea.smem %s0, 52
  %s105 = sld [smem:[%s104]]
  %s106 = scalar_lea.smem %s0, 53
  %s107 = sld [smem:[%s106]]
  %108 = xla_tuple %s105, %s107
  %s109 = sld [smem:[#allocation0]]
  $region270: #{tpu_custom_call.1} parent=0
    _
  %s111 = ssub.s32 1, %s109
  %s112 = scalar_select 0, %s111, %s109
  $region1: #{tpu_custom_call.1} parent=0
    #allocation2 [shape = 'u8[1024]{0}', space=vmem, size = 0x400, scoped, tag = 'input window, operand 6, single buffered']
    #allocation3 [shape = 's32[1]{0}', space=sflag, size = 0x4, scoped, tag = 'scoped memory for tpu_custom_call.1']
    #allocation4 [shape = 's32[1]{0}', space=sflag, size = 0x4, scoped, tag = 'scoped memory for tpu_custom_call.1']
    #allocation5 [shape = 'u8[8192]{0}', space=vmem, size = 0x2000, scoped, tag = 'input window, operand 7, single buffered']
    #allocation6 [shape = 's32[1]{0}', space=sflag, size = 0x4, scoped, tag = 'scoped memory for tpu_custom_call.1']
    #allocation7 [shape = 'u8[2048]{0}', space=vmem, size = 0x800, scoped, tag = 'input window, operand 8, single buffered']
    #allocation8 [shape = 'u8[512]{0}', space=vmem, size = 0x400, scoped, tag = 'input window, operand 9, single buffered']
    #allocation9 [shape = 's32[1]{0}', space=sflag, size = 0x4, scoped, tag = 'scoped memory for tpu_custom_call.1']
    #allocation10 [shape = 'u8[8192]{0}', space=vmem, size = 0x2000, scoped, tag = 'input window, operand 12, single buffered']
    #allocation11 [shape = 'u8[512]{0}', space=vmem, size = 0x400, scoped, tag = 'input window, operand 13, single buffered']
    #allocation12 [shape = 's32[1]{0}', space=sflag, size = 0x4, scoped, tag = 'scoped memory for tpu_custom_call.1']
    #allocation13 [shape = 'u8[8192]{0}', space=vmem, size = 0x2000, scoped, tag = 'input window, operand 14, single buffered']
    #allocation14 [shape = 'u8[512]{0}', space=vmem, size = 0x400, scoped, tag = 'input window, operand 45, single buffered']
    #allocation15 [shape = 's32[1]{0}', space=sflag, size = 0x4, scoped, tag = 'scoped memory for tpu_custom_call.1']
    #allocation16 [shape = 'u8[512]{0}', space=vmem, size = 0x400, scoped, tag = 'input window, operand 47, single buffered']
    #allocation17 [shape = 'u8[512]{0}', space=vmem, size = 0x400, scoped, tag = 'input window, operand 49, single buffered']
    #allocation18 [shape = 's32[1]{0}', space=sflag, size = 0x4, scoped, tag = 'scoped memory for tpu_custom_call.1']
    #allocation19 [shape = 'u8[512]{0}', space=vmem, size = 0x400, scoped, tag = 'input window, operand 51, single buffered']
    #allocation20 [shape = 'u8[1024]{0}', space=vmem, size = 0x400, scoped, tag = 'output window, operand 0, single buffered']
    %113 = vsyncpa [#allocation3], 0
    %114 = vsyncpa [#allocation6], 0
    %115 = vsyncpa [#allocation9], 0
    %116 = vsyncpa [#allocation12], 0
    %117 = vsyncpa [#allocation15], 0
    %118 = vsyncpa [#allocation18], 0
    %119 = vsyncpa [#allocation4], 0
    // Predicated region
    $region2: #{tpu_custom_call.1} parent=1 // pred_check
      _
    $region3: #{tpu_custom_call.1} parent=1 // pred_check_branch
      %121 = sbr.rel (0) target = $region5
    $region4: #{tpu_custom_call.1} parent=1 // pred_region
      _
    $region5: #{tpu_custom_call.1} parent=1 // pred_fallthru
      _
    // Predicated region
    $region6: #{tpu_custom_call.1} parent=1 // pred_check
      _
    $region7: #{tpu_custom_call.1} parent=1 // pred_check_branch
      %123 = sbr.rel (0) target = $region9
    $region8: #{tpu_custom_call.1} parent=1 // pred_region
      _
    $region9: #{tpu_custom_call.1} parent=1 // pred_fallthru
      _
    // Predicated region
    $region10: #{tpu_custom_call.1} parent=1 // pred_check
      _
    $region11: #{tpu_custom_call.1} parent=1 // pred_check_branch
      %125 = sbr.rel (0) target = $region13
    $region12: #{tpu_custom_call.1} parent=1 // pred_region
      _
    $region13: #{tpu_custom_call.1} parent=1 // pred_fallthru
      _
    // Predicated region
    $region14: #{tpu_custom_call.1} parent=1 // pred_check
      _
    $region15: #{tpu_custom_call.1} parent=1 // pred_check_branch
      %127 = sbr.rel (0) target = $region17
    $region16: #{tpu_custom_call.1} parent=1 // pred_region
      _
    $region17: #{tpu_custom_call.1} parent=1 // pred_fallthru
      _
    // Predicated region
    $region18: #{tpu_custom_call.1} parent=1 // pred_check
      _
    $region19: #{tpu_custom_call.1} parent=1 // pred_check_branch
      %129 = sbr.rel (0) target = $region21
    $region20: #{tpu_custom_call.1} parent=1 // pred_region
      _
    $region21: #{tpu_custom_call.1} parent=1 // pred_fallthru
      _
    // Predicated region
    $region22: #{tpu_custom_call.1} parent=1 // pred_check
      _
    $region23: #{tpu_custom_call.1} parent=1 // pred_check_branch
      %131 = sbr.rel (0) target = $region25
    $region24: #{tpu_custom_call.1} parent=1 // pred_region
      _
    $region25: #{tpu_custom_call.1} parent=1 // pred_fallthru
      _
    // Predicated region
    $region26: #{tpu_custom_call.1} parent=1 // pred_check
      _
    $region27: #{tpu_custom_call.1} parent=1 // pred_check_branch
      %133 = sbr.rel (0) target = $region29
    $region28: #{tpu_custom_call.1} parent=1 // pred_region
      %135 = vsyncadd [#allocation3], 0
      %s137 = sshll.u32 %s13, 4
      %s138 = int_to_ptr.hbm [resolvable:$true] %s137
      %s139 = sshll.u32 [#allocation2], 4
      %s140 = int_to_ptr.vmem [resolvable:$true] %s139
      %142 = dma.hbm_to_vmem [thread:$0]  %s138, 32, %s140, [#allocation3]
    $region29: #{tpu_custom_call.1} parent=1 // pred_fallthru
      _
    // Predicated region
    $region30: #{tpu_custom_call.1} parent=1 // pred_check
      _
    $region31: #{tpu_custom_call.1} parent=1 // pred_check_branch
      %144 = sbr.rel (0) target = $region33
    $region32: #{tpu_custom_call.1} parent=1 // pred_region
      %146 = vsyncadd [#allocation6], 0
      %s147 = sshll.u32 %s15, 4
      %s148 = int_to_ptr.hbm [resolvable:$true] %s147
      %s149 = sshll.u32 [#allocation5], 4
      %s150 = int_to_ptr.vmem [resolvable:$true] %s149
      %155 = dma.hbm_to_vmem [thread:$0]  %s148, 256, %s150, [#allocation6], 128, 128, 8
    $region33: #{tpu_custom_call.1} parent=1 // pred_fallthru
      _
    // Predicated region
    $region34: #{tpu_custom_call.1} parent=1 // pred_check
      _
    $region35: #{tpu_custom_call.1} parent=1 // pred_check_branch
      %157 = sbr.rel (0) target = $region37
    $region36: #{tpu_custom_call.1} parent=1 // pred_region
      %159 = vsyncadd [#allocation6], 0
      %s161 = sshll.u32 %s17, 4
      %s162 = int_to_ptr.hbm [resolvable:$true] %s161
      %s163 = sshll.u32 [#allocation7], 4
      %s164 = int_to_ptr.vmem [resolvable:$true] %s163
      %166 = dma.hbm_to_vmem [thread:$0]  %s162, 64, %s164, [#allocation6]
    $region37: #{tpu_custom_call.1} parent=1 // pred_fallthru
      _
    // Predicated region
    $region38: #{tpu_custom_call.1} parent=1 // pred_check
      _
    $region39: #{tpu_custom_call.1} parent=1 // pred_check_branch
      %168 = sbr.rel (0) target = $region41
    $region40: #{tpu_custom_call.1} parent=1 // pred_region
      %170 = vsyncadd [#allocation9], 0
      %s172 = sshll.u32 %s19, 4
      %s173 = int_to_ptr.hbm [resolvable:$true] %s172
      %s174 = sshll.u32 [#allocation8], 4
      %s175 = int_to_ptr.vmem [resolvable:$true] %s174
      %177 = dma.hbm_to_vmem [thread:$0]  %s173, 16, %s175, [#allocation9]
    $region41: #{tpu_custom_call.1} parent=1 // pred_fallthru
      _
    // Predicated region
    $region42: #{tpu_custom_call.1} parent=1 // pred_check
      _
    $region43: #{tpu_custom_call.1} parent=1 // pred_check_branch
      %179 = sbr.rel (0) target = $region45
    $region44: #{tpu_custom_call.1} parent=1 // pred_region
      _
    $region45: #{tpu_custom_call.1} parent=1 // pred_fallthru
      _
    // Predicated region
    $region46: #{tpu_custom_call.1} parent=1 // pred_check
      _
    $region47: #{tpu_custom_call.1} parent=1 // pred_check_branch
      %181 = sbr.rel (0) target = $region49
    $region48: #{tpu_custom_call.1} parent=1 // pred_region
      _
    $region49: #{tpu_custom_call.1} parent=1 // pred_fallthru
      _
    // Predicated region
    $region50: #{tpu_custom_call.1} parent=1 // pred_check
      _
    $region51: #{tpu_custom_call.1} parent=1 // pred_check_branch
      %183 = sbr.rel (0) target = $region53
    $region52: #{tpu_custom_call.1} parent=1 // pred_region
      %185 = vsyncadd [#allocation9], 0
      %s186 = sshll.u32 %s25, 4
      %s187 = int_to_ptr.hbm [resolvable:$true] %s186
      %s188 = sshll.u32 [#allocation10], 4
      %s189 = int_to_ptr.vmem [resolvable:$true] %s188
      %194 = dma.hbm_to_vmem [thread:$0]  %s187, 256, %s189, [#allocation9], 128, 128, 8
    $region53: #{tpu_custom_call.1} parent=1 // pred_fallthru
      _
    // Predicated region
    $region54: #{tpu_custom_call.1} parent=1 // pred_check
      _
    $region55: #{tpu_custom_call.1} parent=1 // pred_check_branch
      %196 = sbr.rel (0) target = $region57
    $region56: #{tpu_custom_call.1} parent=1 // pred_region
      %198 = vsyncadd [#allocation12], 0
      %s200 = sshll.u32 %s27, 4
      %s201 = int_to_ptr.hbm [resolvable:$true] %s200
      %s202 = sshll.u32 [#allocation11], 4
      %s203 = int_to_ptr.vmem [resolvable:$true] %s202
      %205 = dma.hbm_to_vmem [thread:$0]  %s201, 16, %s203, [#allocation12]
    $region57: #{tpu_custom_call.1} parent=1 // pred_fallthru
      _
    // Predicated region
    $region58: #{tpu_custom_call.1} parent=1 // pred_check
      _
    $region59: #{tpu_custom_call.1} parent=1 // pred_check_branch
      %207 = sbr.rel (0) target = $region61
    $region60: #{tpu_custom_call.1} parent=1 // pred_region
      %209 = vsyncadd [#allocation12], 0
      %s210 = sshll.u32 %s29, 4
      %s211 = int_to_ptr.hbm [resolvable:$true] %s210
      %s212 = sshll.u32 [#allocation13], 4
      %s213 = int_to_ptr.vmem [resolvable:$true] %s212
      %218 = dma.hbm_to_vmem [thread:$0]  %s211, 256, %s213, [#allocation12], 128, 128, 8
    $region61: #{tpu_custom_call.1} parent=1 // pred_fallthru
      _
    // Predicated region
    $region62: #{tpu_custom_call.1} parent=1 // pred_check
      _
    $region63: #{tpu_custom_call.1} parent=1 // pred_check_branch
      %220 = sbr.rel (0) target = $region65
    $region64: #{tpu_custom_call.1} parent=1 // pred_region
      _
    $region65: #{tpu_custom_call.1} parent=1 // pred_fallthru
      _
    // Predicated region
    $region66: #{tpu_custom_call.1} parent=1 // pred_check
      _
    $region67: #{tpu_custom_call.1} parent=1 // pred_check_branch
      %222 = sbr.rel (0) target = $region69
    $region68: #{tpu_custom_call.1} parent=1 // pred_region
      _
    $region69: #{tpu_custom_call.1} parent=1 // pred_fallthru
      _
    // Predicated region
    $region70: #{tpu_custom_call.1} parent=1 // pred_check
      _
    $region71: #{tpu_custom_call.1} parent=1 // pred_check_branch
      %224 = sbr.rel (0) target = $region73
    $region72: #{tpu_custom_call.1} parent=1 // pred_region
      _
    $region73: #{tpu_custom_call.1} parent=1 // pred_fallthru
      _
    // Predicated region
    $region74: #{tpu_custom_call.1} parent=1 // pred_check
      _
    $region75: #{tpu_custom_call.1} parent=1 // pred_check_branch
      %226 = sbr.rel (0) target = $region77
    $region76: #{tpu_custom_call.1} parent=1 // pred_region
      _
    $region77: #{tpu_custom_call.1} parent=1 // pred_fallthru
      _
    // Predicated region
    $region78: #{tpu_custom_call.1} parent=1 // pred_check
      _
    $region79: #{tpu_custom_call.1} parent=1 // pred_check_branch
      %228 = sbr.rel (0) target = $region81
    $region80: #{tpu_custom_call.1} parent=1 // pred_region
      _
    $region81: #{tpu_custom_call.1} parent=1 // pred_fallthru
      _
    // Predicated region
    $region82: #{tpu_custom_call.1} parent=1 // pred_check
      _
    $region83: #{tpu_custom_call.1} parent=1 // pred_check_branch
      %230 = sbr.rel (0) target = $region85
    $region84: #{tpu_custom_call.1} parent=1 // pred_region
      _
    $region85: #{tpu_custom_call.1} parent=1 // pred_fallthru
      _
    // Predicated region
    $region86: #{tpu_custom_call.1} parent=1 // pred_check
      _
    $region87: #{tpu_custom_call.1} parent=1 // pred_check_branch
      %232 = sbr.rel (0) target = $region89
    $region88: #{tpu_custom_call.1} parent=1 // pred_region
      _
    $region89: #{tpu_custom_call.1} parent=1 // pred_fallthru
      _
    // Predicated region
    $region90: #{tpu_custom_call.1} parent=1 // pred_check
      _
    $region91: #{tpu_custom_call.1} parent=1 // pred_check_branch
      %234 = sbr.rel (0) target = $region93
    $region92: #{tpu_custom_call.1} parent=1 // pred_region
      _
    $region93: #{tpu_custom_call.1} parent=1 // pred_fallthru
      _
    // Predicated region
    $region94: #{tpu_custom_call.1} parent=1 // pred_check
      _
    $region95: #{tpu_custom_call.1} parent=1 // pred_check_branch
      %236 = sbr.rel (0) target = $region97
    $region96: #{tpu_custom_call.1} parent=1 // pred_region
      _
    $region97: #{tpu_custom_call.1} parent=1 // pred_fallthru
      _
    // Predicated region
    $region98: #{tpu_custom_call.1} parent=1 // pred_check
      _
    $region99: #{tpu_custom_call.1} parent=1 // pred_check_branch
      %238 = sbr.rel (0) target = $region101
    $region100: #{tpu_custom_call.1} parent=1 // pred_region
      _
    $region101: #{tpu_custom_call.1} parent=1 // pred_fallthru
      _
    // Predicated region
    $region102: #{tpu_custom_call.1} parent=1 // pred_check
      _
    $region103: #{tpu_custom_call.1} parent=1 // pred_check_branch
      %240 = sbr.rel (0) target = $region105
    $region104: #{tpu_custom_call.1} parent=1 // pred_region
      _
    $region105: #{tpu_custom_call.1} parent=1 // pred_fallthru
      _
    // Predicated region
    $region106: #{tpu_custom_call.1} parent=1 // pred_check
      _
    $region107: #{tpu_custom_call.1} parent=1 // pred_check_branch
      %242 = sbr.rel (0) target = $region109
    $region108: #{tpu_custom_call.1} parent=1 // pred_region
      _
    $region109: #{tpu_custom_call.1} parent=1 // pred_fallthru
      _
    // Predicated region
    $region110: #{tpu_custom_call.1} parent=1 // pred_check
      _
    $region111: #{tpu_custom_call.1} parent=1 // pred_check_branch
      %244 = sbr.rel (0) target = $region113
    $region112: #{tpu_custom_call.1} parent=1 // pred_region
      _
    $region113: #{tpu_custom_call.1} parent=1 // pred_fallthru
      _
    // Predicated region
    $region114: #{tpu_custom_call.1} parent=1 // pred_check
      _
    $region115: #{tpu_custom_call.1} parent=1 // pred_check_branch
      %246 = sbr.rel (0) target = $region117
    $region116: #{tpu_custom_call.1} parent=1 // pred_region
      _
    $region117: #{tpu_custom_call.1} parent=1 // pred_fallthru
      _
    // Predicated region
    $region118: #{tpu_custom_call.1} parent=1 // pred_check
      _
    $region119: #{tpu_custom_call.1} parent=1 // pred_check_branch
      %248 = sbr.rel (0) target = $region121
    $region120: #{tpu_custom_call.1} parent=1 // pred_region
      _
    $region121: #{tpu_custom_call.1} parent=1 // pred_fallthru
      _
    // Predicated region
    $region122: #{tpu_custom_call.1} parent=1 // pred_check
      _
    $region123: #{tpu_custom_call.1} parent=1 // pred_check_branch
      %250 = sbr.rel (0) target = $region125
    $region124: #{tpu_custom_call.1} parent=1 // pred_region
      _
    $region125: #{tpu_custom_call.1} parent=1 // pred_fallthru
      _
    // Predicated region
    $region126: #{tpu_custom_call.1} parent=1 // pred_check
      _
    $region127: #{tpu_custom_call.1} parent=1 // pred_check_branch
      %252 = sbr.rel (0) target = $region129
    $region128: #{tpu_custom_call.1} parent=1 // pred_region
      _
    $region129: #{tpu_custom_call.1} parent=1 // pred_fallthru
      _
    // Predicated region
    $region130: #{tpu_custom_call.1} parent=1 // pred_check
      _
    $region131: #{tpu_custom_call.1} parent=1 // pred_check_branch
      %254 = sbr.rel (0) target = $region133
    $region132: #{tpu_custom_call.1} parent=1 // pred_region
      _
    $region133: #{tpu_custom_call.1} parent=1 // pred_fallthru
      _
    // Predicated region
    $region134: #{tpu_custom_call.1} parent=1 // pred_check
      _
    $region135: #{tpu_custom_call.1} parent=1 // pred_check_branch
      %256 = sbr.rel (0) target = $region137
    $region136: #{tpu_custom_call.1} parent=1 // pred_region
      _
    $region137: #{tpu_custom_call.1} parent=1 // pred_fallthru
      _
    // Predicated region
    $region138: #{tpu_custom_call.1} parent=1 // pred_check
      _
    $region139: #{tpu_custom_call.1} parent=1 // pred_check_branch
      %258 = sbr.rel (0) target = $region141
    $region140: #{tpu_custom_call.1} parent=1 // pred_region
      _
    $region141: #{tpu_custom_call.1} parent=1 // pred_fallthru
      _
    // Predicated region
    $region142: #{tpu_custom_call.1} parent=1 // pred_check
      _
    $region143: #{tpu_custom_call.1} parent=1 // pred_check_branch
      %260 = sbr.rel (0) target = $region145
    $region144: #{tpu_custom_call.1} parent=1 // pred_region
      _
    $region145: #{tpu_custom_call.1} parent=1 // pred_fallthru
      _
    // Predicated region
    $region146: #{tpu_custom_call.1} parent=1 // pred_check
      _
    $region147: #{tpu_custom_call.1} parent=1 // pred_check_branch
      %262 = sbr.rel (0) target = $region149
    $region148: #{tpu_custom_call.1} parent=1 // pred_region
      _
    $region149: #{tpu_custom_call.1} parent=1 // pred_fallthru
      _
    // Predicated region
    $region150: #{tpu_custom_call.1} parent=1 // pred_check
      _
    $region151: #{tpu_custom_call.1} parent=1 // pred_check_branch
      %264 = sbr.rel (0) target = $region153
    $region152: #{tpu_custom_call.1} parent=1 // pred_region
      _
    $region153: #{tpu_custom_call.1} parent=1 // pred_fallthru
      _
    // Predicated region
    $region154: #{tpu_custom_call.1} parent=1 // pred_check
      _
    $region155: #{tpu_custom_call.1} parent=1 // pred_check_branch
      %266 = sbr.rel (0) target = $region157
    $region156: #{tpu_custom_call.1} parent=1 // pred_region
      _
    $region157: #{tpu_custom_call.1} parent=1 // pred_fallthru
      _
    // Predicated region
    $region158: #{tpu_custom_call.1} parent=1 // pred_check
      _
    $region159: #{tpu_custom_call.1} parent=1 // pred_check_branch
      %268 = sbr.rel (0) target = $region161
    $region160: #{tpu_custom_call.1} parent=1 // pred_region
      _
    $region161: #{tpu_custom_call.1} parent=1 // pred_fallthru
      _
    // Predicated region
    $region162: #{tpu_custom_call.1} parent=1 // pred_check
      _
    $region163: #{tpu_custom_call.1} parent=1 // pred_check_branch
      %270 = sbr.rel (0) target = $region165
    $region164: #{tpu_custom_call.1} parent=1 // pred_region
      _
    $region165: #{tpu_custom_call.1} parent=1 // pred_fallthru
      _
    // Predicated region
    $region166: #{tpu_custom_call.1} parent=1 // pred_check
      _
    $region167: #{tpu_custom_call.1} parent=1 // pred_check_branch
      %272 = sbr.rel (0) target = $region169
    $region168: #{tpu_custom_call.1} parent=1 // pred_region
      _
    $region169: #{tpu_custom_call.1} parent=1 // pred_fallthru
      _
    // Predicated region
    $region170: #{tpu_custom_call.1} parent=1 // pred_check
      _
    $region171: #{tpu_custom_call.1} parent=1 // pred_check_branch
      %274 = sbr.rel (0) target = $region173
    $region172: #{tpu_custom_call.1} parent=1 // pred_region
      _
    $region173: #{tpu_custom_call.1} parent=1 // pred_fallthru
      _
    // Predicated region
    $region174: #{tpu_custom_call.1} parent=1 // pred_check
      _
    $region175: #{tpu_custom_call.1} parent=1 // pred_check_branch
      %276 = sbr.rel (0) target = $region177
    $region176: #{tpu_custom_call.1} parent=1 // pred_region
      _
    $region177: #{tpu_custom_call.1} parent=1 // pred_fallthru
      _
    // Predicated region
    $region178: #{tpu_custom_call.1} parent=1 // pred_check
      _
    $region179: #{tpu_custom_call.1} parent=1 // pred_check_branch
      %278 = sbr.rel (0) target = $region181
    $region180: #{tpu_custom_call.1} parent=1 // pred_region
      _
    $region181: #{tpu_custom_call.1} parent=1 // pred_fallthru
      _
    // Predicated region
    $region182: #{tpu_custom_call.1} parent=1 // pred_check
      _
    $region183: #{tpu_custom_call.1} parent=1 // pred_check_branch
      %280 = sbr.rel (0) target = $region185
    $region184: #{tpu_custom_call.1} parent=1 // pred_region
      %282 = vsyncadd [#allocation15], 0
      %s284 = sshll.u32 %s91, 4
      %s285 = int_to_ptr.hbm [resolvable:$true] %s284
      %s286 = sshll.u32 [#allocation14], 4
      %s287 = int_to_ptr.vmem [resolvable:$true] %s286
      %289 = dma.hbm_to_vmem [thread:$0]  %s285, 16, %s287, [#allocation15]
    $region185: #{tpu_custom_call.1} parent=1 // pred_fallthru
      _
    // Predicated region
    $region186: #{tpu_custom_call.1} parent=1 // pred_check
      _
    $region187: #{tpu_custom_call.1} parent=1 // pred_check_branch
      %291 = sbr.rel (0) target = $region189
    $region188: #{tpu_custom_call.1} parent=1 // pred_region
      _
    $region189: #{tpu_custom_call.1} parent=1 // pred_fallthru
      _
    // Predicated region
    $region190: #{tpu_custom_call.1} parent=1 // pred_check
      _
    $region191: #{tpu_custom_call.1} parent=1 // pred_check_branch
      %293 = sbr.rel (0) target = $region193
    $region192: #{tpu_custom_call.1} parent=1 // pred_region
      %295 = vsyncadd [#allocation15], 0
      %s297 = sshll.u32 %s95, 4
      %s298 = int_to_ptr.hbm [resolvable:$true] %s297
      %s299 = sshll.u32 [#allocation16], 4
      %s300 = int_to_ptr.vmem [resolvable:$true] %s299
      %302 = dma.hbm_to_vmem [thread:$0]  %s298, 16, %s300, [#allocation15]
    $region193: #{tpu_custom_call.1} parent=1 // pred_fallthru
      _
    // Predicated region
    $region194: #{tpu_custom_call.1} parent=1 // pred_check
      _
    $region195: #{tpu_custom_call.1} parent=1 // pred_check_branch
      %304 = sbr.rel (0) target = $region197
    $region196: #{tpu_custom_call.1} parent=1 // pred_region
      _
    $region197: #{tpu_custom_call.1} parent=1 // pred_fallthru
      _
    // Predicated region
    $region198: #{tpu_custom_call.1} parent=1 // pred_check
      _
    $region199: #{tpu_custom_call.1} parent=1 // pred_check_branch
      %306 = sbr.rel (0) target = $region201
    $region200: #{tpu_custom_call.1} parent=1 // pred_region
      %308 = vsyncadd [#allocation18], 0
      %s310 = sshll.u32 %s99, 4
      %s311 = int_to_ptr.hbm [resolvable:$true] %s310
      %s312 = sshll.u32 [#allocation17], 4
      %s313 = int_to_ptr.vmem [resolvable:$true] %s312
      %315 = dma.hbm_to_vmem [thread:$0]  %s311, 16, %s313, [#allocation18]
    $region201: #{tpu_custom_call.1} parent=1 // pred_fallthru
      _
    // Predicated region
    $region202: #{tpu_custom_call.1} parent=1 // pred_check
      _
    $region203: #{tpu_custom_call.1} parent=1 // pred_check_branch
      %317 = sbr.rel (0) target = $region205
    $region204: #{tpu_custom_call.1} parent=1 // pred_region
      _
    $region205: #{tpu_custom_call.1} parent=1 // pred_fallthru
      _
    // Predicated region
    $region206: #{tpu_custom_call.1} parent=1 // pred_check
      _
    $region207: #{tpu_custom_call.1} parent=1 // pred_check_branch
      %319 = sbr.rel (0) target = $region209
    $region208: #{tpu_custom_call.1} parent=1 // pred_region
      %321 = vsyncadd [#allocation18], 0
      %s323 = sshll.u32 %s103, 4
      %s324 = int_to_ptr.hbm [resolvable:$true] %s323
      %s325 = sshll.u32 [#allocation19], 4
      %s326 = int_to_ptr.vmem [resolvable:$true] %s325
      %328 = dma.hbm_to_vmem [thread:$0]  %s324, 16, %s326, [#allocation18]
    $region209: #{tpu_custom_call.1} parent=1 // pred_fallthru
      _
    // Predicated region
    $region210: #{tpu_custom_call.1} parent=1 // pred_check
      _
    $region211: #{tpu_custom_call.1} parent=1 // pred_check_branch
      %330 = sbr.rel (0) target = $region213
    $region212: #{tpu_custom_call.1} parent=1 // pred_region
      %332 = dma.done [#allocation3], 32
    $region213: #{tpu_custom_call.1} parent=1 // pred_fallthru
      _
    // Predicated region
    $region214: #{tpu_custom_call.1} parent=1 // pred_check
      _
    $region215: #{tpu_custom_call.1} parent=1 // pred_check_branch
      %334 = sbr.rel (0) target = $region217
    $region216: #{tpu_custom_call.1} parent=1 // pred_region
      %336 = dma.done [#allocation6], 256
    $region217: #{tpu_custom_call.1} parent=1 // pred_fallthru
      _
    // Predicated region
    $region218: #{tpu_custom_call.1} parent=1 // pred_check
      _
    $region219: #{tpu_custom_call.1} parent=1 // pred_check_branch
      %338 = sbr.rel (0) target = $region221
    $region220: #{tpu_custom_call.1} parent=1 // pred_region
      %340 = dma.done [#allocation6], 64
    $region221: #{tpu_custom_call.1} parent=1 // pred_fallthru
      _
    // Predicated region
    $region222: #{tpu_custom_call.1} parent=1 // pred_check
      _
    $region223: #{tpu_custom_call.1} parent=1 // pred_check_branch
      %342 = sbr.rel (0) target = $region225
    $region224: #{tpu_custom_call.1} parent=1 // pred_region
      %344 = dma.done [#allocation9], 16
    $region225: #{tpu_custom_call.1} parent=1 // pred_fallthru
      _
    // Predicated region
    $region226: #{tpu_custom_call.1} parent=1 // pred_check
      _
    $region227: #{tpu_custom_call.1} parent=1 // pred_check_branch
      %346 = sbr.rel (0) target = $region229
    $region228: #{tpu_custom_call.1} parent=1 // pred_region
      %348 = dma.done [#allocation9], 256
    $region229: #{tpu_custom_call.1} parent=1 // pred_fallthru
      _
    // Predicated region
    $region230: #{tpu_custom_call.1} parent=1 // pred_check
      _
    $region231: #{tpu_custom_call.1} parent=1 // pred_check_branch
      %350 = sbr.rel (0) target = $region233
    $region232: #{tpu_custom_call.1} parent=1 // pred_region
      %352 = dma.done [#allocation12], 16
    $region233: #{tpu_custom_call.1} parent=1 // pred_fallthru
      _
    // Predicated region
    $region234: #{tpu_custom_call.1} parent=1 // pred_check
      _
    $region235: #{tpu_custom_call.1} parent=1 // pred_check_branch
      %354 = sbr.rel (0) target = $region237
    $region236: #{tpu_custom_call.1} parent=1 // pred_region
      %356 = dma.done [#allocation12], 256
    $region237: #{tpu_custom_call.1} parent=1 // pred_fallthru
      _
    // Predicated region
    $region238: #{tpu_custom_call.1} parent=1 // pred_check
      _
    $region239: #{tpu_custom_call.1} parent=1 // pred_check_branch
      %358 = sbr.rel (0) target = $region241
    $region240: #{tpu_custom_call.1} parent=1 // pred_region
      %360 = dma.done [#allocation15], 16
    $region241: #{tpu_custom_call.1} parent=1 // pred_fallthru
      _
    // Predicated region
    $region242: #{tpu_custom_call.1} parent=1 // pred_check
      _
    $region243: #{tpu_custom_call.1} parent=1 // pred_check_branch
      %362 = sbr.rel (0) target = $region245
    $region244: #{tpu_custom_call.1} parent=1 // pred_region
      %364 = dma.done [#allocation15], 16
    $region245: #{tpu_custom_call.1} parent=1 // pred_fallthru
      _
    // Predicated region
    $region246: #{tpu_custom_call.1} parent=1 // pred_check
      _
    $region247: #{tpu_custom_call.1} parent=1 // pred_check_branch
      %366 = sbr.rel (0) target = $region249
    $region248: #{tpu_custom_call.1} parent=1 // pred_region
      %368 = dma.done [#allocation18], 16
    $region249: #{tpu_custom_call.1} parent=1 // pred_fallthru
      _
    // Predicated region
    $region250: #{tpu_custom_call.1} parent=1 // pred_check
      _
    $region251: #{tpu_custom_call.1} parent=1 // pred_check_branch
      %370 = sbr.rel (0) target = $region253
    $region252: #{tpu_custom_call.1} parent=1 // pred_region
      %372 = dma.done [#allocation18], 16
    $region253: #{tpu_custom_call.1} parent=1 // pred_fallthru
      _
    %v373 = vld [vmem:[%s1] sm:$0xff]
    %v374 = vld [vmem:[%s1 + $0x8] sm:$0x7]
    %v375 = vld [vmem:[%s3] sm:$0xff]
    %v376 = vld [vmem:[%s3 + $0x8] sm:$0x7]
    %v377 = vld [vmem:[%s5] sm:$0xff]
    %v378 = vld [vmem:[%s5 + $0x8] sm:$0x7]
    %v379 = vld [vmem:[%s7] sm:$0xff]
    %v380 = vld [vmem:[%s7 + $0x8] sm:$0x3f]
    %v381 = vld [vmem:[%s9] sm:$0xff]
    %v382 = vld [vmem:[%s9 + $0x8] sm:$0x3f]
    %v383 = vld [vmem:[%s11] sm:$0xff]
    %v384 = vld [vmem:[%s11 + $0x8] sm:$0x7]
    %v385 = vld [vmem:[#allocation2] sm:$0x3]
    %v386 = vld [vmem:[#allocation5] sm:$0xff]
    %v387 = vld [vmem:[#allocation5 + $0x8] sm:$0x3f]
    %v388 = vld [vmem:[#allocation7] sm:$0xf]
    %v389 = vld [vmem:[#allocation8] sm:$0x1]
    %v390 = vld [vmem:[%s21] sm:$0xf]
    %v391 = vld [vmem:[%s23] sm:$0x1]
    %v393 = vperm.slane %v391, 0
    %vm395 = vcmask 31744
    %v397 = vsel %vm395, %v375, 0
    %v400 = vsel %vm395, %v376, 0
    %vm402 = vcmask 1043456
    %v404 = vsel %vm402, %v390, 0
    %406 = vmatpush.msra.mxu0 0.0
    %407 = vmatpush.msra.mxu0 0.0
    %408 = vmatpush.msra.mxu0 0.0
    %409 = vmatpush.msra.mxu0 0.0
    %410 = vmatpush.msra.mxu0 0.0
    %411 = vmatpush.msra.mxu0 0.0
    %412 = vmatpush.msra.mxu0 0.0
    %413 = vmatpush.msra.mxu0 0.0
    %414 = vmatpush.msra.mxu0 0.0
    %415 = vmatpush.msra.mxu0 0.0
    %416 = vmatpush.msra.mxu0 0.0
    %417 = vmatpush.msra.mxu0 0.0
    %418 = vmatpush.msra.mxu0 0.0
    %419 = vmatpush.msra.mxu0 0.0
    %420 = vmatpush.msra.mxu0 0.0
    %421 = vmatpush.msra.mxu0 %v404
    %422 = vmatmul.f32.gmra.mxu0 %v397
    %v423 = vpop.f32.mrf.mxu0
    %v424 = vadd.f32 %v393, %v423
    %425 = vmatmul.f32.gmra.mxu0 %v400
    %v426 = vpop.f32.mrf.mxu0
    %v427 = vadd.f32 %v393, %v426
    %428 = vdwg.mxu0
    %v430 = vsel %vm402, %v388, 0
    %432 = vmatpush.msra.mxu0 0.0
    %433 = vmatpush.msra.mxu0 0.0
    %434 = vmatpush.msra.mxu0 0.0
    %435 = vmatpush.msra.mxu0 0.0
    %436 = vmatpush.msra.mxu0 0.0
    %437 = vmatpush.msra.mxu0 0.0
    %438 = vmatpush.msra.mxu0 0.0
    %439 = vmatpush.msra.mxu0 0.0
    %440 = vmatpush.msra.mxu0 0.0
    %441 = vmatpush.msra.mxu0 0.0
    %442 = vmatpush.msra.mxu0 0.0
    %443 = vmatpush.msra.mxu0 0.0
    %444 = vmatpush.msra.mxu0 0.0
    %445 = vmatpush.msra.mxu0 0.0
    %446 = vmatpush.msra.mxu0 0.0
    %447 = vmatpush.msra.mxu0 %v430
    %448 = vmatmul.f32.gmra.mxu0 %v397
    %v449 = vpop.f32.mrf.mxu0
    %v450 = vadd.f32 0.0, %v449
    %451 = vmatmul.f32.gmra.mxu0 %v400
    %v452 = vpop.f32.mrf.mxu0
    %v453 = vadd.f32 0.0, %v452
    %454 = vdwg.mxu0
    %v456 = vperm.slane %v389, 0
    %vm458 = vcmask 89088
    %v460 = vsel %vm458, %v373, 0
    %v463 = vsel %vm458, %v374, 0
    %vm465 = vcmask 1042432
    %v467 = vsel %vm465, %v453, 0
    %469 = vmatpush.msra.mxu0 0.0
    %470 = vmatpush.msra.mxu0 0.0
    %471 = vmatpush.msra.mxu0 0.0
    %472 = vmatpush.msra.mxu0 0.0
    %473 = vmatpush.msra.mxu0 0.0
    %474 = vmatpush.msra.mxu0 0.0
    %475 = vmatpush.msra.mxu0 0.0
    %476 = vmatpush.msra.mxu0 0.0
    %477 = vmatpush.msra.mxu0 0.0
    %478 = vmatpush.msra.mxu0 0.0
    %479 = vmatpush.msra.mxu0 0.0
    %480 = vmatpush.msra.mxu0 0.0
    %481 = vmatpush.msra.mxu0 0.0
    %482 = vmatpush.msra.mxu0 0.0
    %483 = vmatpush.msra.mxu0 %v467
    %484 = vmatpush.msra.mxu0 %v450
    %485 = vmatmul.f32.gmra.mxu0 %v460
    %v486 = vpop.f32.mrf.mxu0
    %v487 = vadd.f32 %v456, %v486
    %488 = vmatmul.f32.gmra.mxu0 %v463
    %v489 = vpop.f32.mrf.mxu0
    %v490 = vadd.f32 %v456, %v489
    %491 = vdwg.mxu0
    %v492 = vmul.f32 %v487, 0.999995
    %v493 = vmul.f32 %v490, 0.999995
    %vm494 = vcmp.gt.f32.partialorder %v492, 0.0
    %vm495 = vcmp.gt.f32.partialorder %v493, 0.0
    %v496 = vmul.f32 %v492, 0.1
    %v497 = vmul.f32 %v493, 0.1
    %v498 = vsel %vm494, %v492, %v496
    %v499 = vsel %vm495, %v493, %v497
    %v500 = vadd.f32 %v498, %v424
    %v501 = vadd.f32 %v499, %v427
    %vm502 = vcmp.gt.f32.partialorder %v500, 0.0
    %vm503 = vcmp.gt.f32.partialorder %v501, 0.0
    %v504 = vmul.f32 %v500, 0.1
    %v505 = vmul.f32 %v501, 0.1
    %v506 = vsel %vm502, %v500, %v504
    %v507 = vsel %vm503, %v501, %v505
    %v508 = vld [vmem:[#allocation10] sm:$0xff]
    %v509 = vld [vmem:[#allocation10 + $0x8] sm:$0xff]
    %v510 = vld [vmem:[#allocation11] sm:$0x1]
    %v511 = vld [vmem:[#allocation13] sm:$0xff]
    %v512 = vld [vmem:[#allocation13 + $0x8] sm:$0xff]
    %v513 = vld [vmem:[%s31] sm:$0x1]
    %v515 = vperm.slane %v513, 0
    %vm517 = vcmask 130048
    %v519 = vsel %vm517, %v506, 0
    %v522 = vsel %vm517, %v507, 0
    %524 = vmatpush.msra.mxu0 0.0
    %525 = vmatpush.msra.mxu0 0.0
    %526 = vmatpush.msra.mxu0 0.0
    %527 = vmatpush.msra.mxu0 0.0
    %528 = vmatpush.msra.mxu0 0.0
    %529 = vmatpush.msra.mxu0 0.0
    %530 = vmatpush.msra.mxu0 0.0
    %531 = vmatpush.msra.mxu0 0.0
    %532 = vmatpush.msra.mxu0 0.0
    %533 = vmatpush.msra.mxu0 0.0
    %534 = vmatpush.msra.mxu0 0.0
    %535 = vmatpush.msra.mxu0 0.0
    %536 = vmatpush.msra.mxu0 0.0
    %537 = vmatpush.msra.mxu0 0.0
    %538 = vmatpush.msra.mxu0 %v512
    %539 = vmatpush.msra.mxu0 %v511
    %540 = vmatmul.f32.gmra.mxu0 %v519
    %v541 = vpop.f32.mrf.mxu0
    %v542 = vadd.f32 %v515, %v541
    %543 = vmatmul.f32.gmra.mxu0 %v522
    %v544 = vpop.f32.mrf.mxu0
    %v545 = vadd.f32 %v515, %v544
    %546 = vdwg.mxu0
    %547 = vmatpush.msra.mxu0 0.0
    %548 = vmatpush.msra.mxu0 0.0
    %549 = vmatpush.msra.mxu0 0.0
    %550 = vmatpush.msra.mxu0 0.0
    %551 = vmatpush.msra.mxu0 0.0
    %552 = vmatpush.msra.mxu0 0.0
    %553 = vmatpush.msra.mxu0 0.0
    %554 = vmatpush.msra.mxu0 0.0
    %555 = vmatpush.msra.mxu0 0.0
    %556 = vmatpush.msra.mxu0 0.0
    %557 = vmatpush.msra.mxu0 0.0
    %558 = vmatpush.msra.mxu0 0.0
    %559 = vmatpush.msra.mxu0 0.0
    %560 = vmatpush.msra.mxu0 0.0
    %561 = vmatpush.msra.mxu0 %v509
    %562 = vmatpush.msra.mxu0 %v508
    %563 = vmatmul.f32.gmra.mxu0 %v519
    %v564 = vpop.f32.mrf.mxu0
    %v565 = vadd.f32 0.0, %v564
    %566 = vmatmul.f32.gmra.mxu0 %v522
    %v567 = vpop.f32.mrf.mxu0
    %v568 = vadd.f32 0.0, %v567
    %569 = vdwg.mxu0
    %v571 = vperm.slane %v510, 0
    %v574 = vsel %vm465, %v568, 0
    %576 = vmatpush.msra.mxu0 0.0
    %577 = vmatpush.msra.mxu0 0.0
    %578 = vmatpush.msra.mxu0 0.0
    %579 = vmatpush.msra.mxu0 0.0
    %580 = vmatpush.msra.mxu0 0.0
    %581 = vmatpush.msra.mxu0 0.0
    %582 = vmatpush.msra.mxu0 0.0
    %583 = vmatpush.msra.mxu0 0.0
    %584 = vmatpush.msra.mxu0 0.0
    %585 = vmatpush.msra.mxu0 0.0
    %586 = vmatpush.msra.mxu0 0.0
    %587 = vmatpush.msra.mxu0 0.0
    %588 = vmatpush.msra.mxu0 0.0
    %589 = vmatpush.msra.mxu0 0.0
    %590 = vmatpush.msra.mxu0 %v574
    %591 = vmatpush.msra.mxu0 %v565
    %592 = vmatmul.f32.gmra.mxu0 %v460
    %v593 = vpop.f32.mrf.mxu0
    %v594 = vadd.f32 %v571, %v593
    %595 = vmatmul.f32.gmra.mxu0 %v463
    %v596 = vpop.f32.mrf.mxu0
    %v597 = vadd.f32 %v571, %v596
    %598 = vdwg.mxu0
    %v599 = vmul.f32 %v594, 0.999995
    %v600 = vmul.f32 %v597, 0.999995
    %vm601 = vcmp.gt.f32.partialorder %v599, 0.0
    %vm602 = vcmp.gt.f32.partialorder %v600, 0.0
    %v603 = vmul.f32 %v599, 0.1
    %v604 = vmul.f32 %v600, 0.1
    %v605 = vsel %vm601, %v599, %v603
    %v606 = vsel %vm602, %v600, %v604
    %v607 = vadd.f32 %v605, %v542
    %v608 = vadd.f32 %v606, %v545
    %vm609 = vcmp.gt.f32.partialorder %v607, 0.0
    %vm610 = vcmp.gt.f32.partialorder %v608, 0.0
    %v611 = vmul.f32 %v607, 0.1
    %v612 = vmul.f32 %v608, 0.1
    %v613 = vsel %vm609, %v607, %v611
    %v614 = vsel %vm610, %v608, %v612
    %v615 = vmul.f32 %v613, %v613
    %v616 = vmul.f32 %v614, %v614
    %vm617 = vcmask 261120
    %v618 = vsel %vm617, %v615, 0.0
    %619 = vadd.xlane.f32.xlu0 %v618
    %v620 = vpop.xlane.xlu0 %619
    %vm621 = vcmask 256000
    %v622 = vsel %vm621, %v616, 0.0
    %623 = vadd.xlane.f32.xlu0 %v622
    %v624 = vpop.xlane.xlu0 %623
    %v625 = vmax.f32 %v620, 1e-24
    %v626 = vmax.f32 %v624, 1e-24
    %v627 = vrsqrt.pop %v625
    %v628 = vmul.f32 %v627, %v625
    %v629 = vmul.f32 %v628, %v627
    %v630 = vmul.f32 0.5, %v629
    %v631 = vsub.f32 1.5, %v630
    %v632 = vmul.f32 %v627, %v631
    %vm633 = vweird.f32 %v625
    %vm634 = vweird.f32 %v627
    %vm635 = vmor %vm633, %vm634
    %v636 = vsel %vm635, %v627, %v632
    %v637 = vrsqrt.pop %v626
    %v638 = vmul.f32 %v637, %v626
    %v639 = vmul.f32 %v638, %v637
    %v640 = vmul.f32 0.5, %v639
    %v641 = vsub.f32 1.5, %v640
    %v642 = vmul.f32 %v637, %v641
    %vm643 = vweird.f32 %v626
    %vm644 = vweird.f32 %v637
    %vm645 = vmor %vm643, %vm644
    %v646 = vsel %vm645, %v637, %v642
    %v647 = vmul.f32 %v613, %v636
    %v648 = vmul.f32 %v614, %v646
    %v649 = vld [vmem:[%s33] sm:$0xff]
    %v650 = vld [vmem:[%s33 + $0x8] sm:$0xff]
    %v651 = vld [vmem:[%s33 + $0x10] sm:$0xff]
    %v652 = vld [vmem:[%s35] sm:$0x1]
    %vm653 = vcmask 195584
    %v655 = vsel %vm653, %v377, 0
    %v658 = vsel %vm653, %v378, 0
    %660 = vmatpush.msra.mxu0 0.0
    %661 = vmatpush.msra.mxu0 0.0
    %662 = vmatpush.msra.mxu0 0.0
    %663 = vmatpush.msra.mxu0 0.0
    %664 = vmatpush.msra.mxu0 0.0
    %665 = vmatpush.msra.mxu0 0.0
    %666 = vmatpush.msra.mxu0 0.0
    %667 = vmatpush.msra.mxu0 0.0
    %668 = vmatpush.msra.mxu0 0.0
    %669 = vmatpush.msra.mxu0 0.0
    %670 = vmatpush.msra.mxu0 0.0
    %671 = vmatpush.msra.mxu0 0.0
    %672 = vmatpush.msra.mxu0 0.0
    %673 = vmatpush.msra.mxu0 %v651
    %674 = vmatpush.msra.mxu0 %v650
    %675 = vmatpush.msra.mxu0 %v649
    %676 = vmatmul.f32.gmra.mxu0 %v655
    %v677 = vpop.f32.mrf.mxu0
    %v678 = vadd.f32 0.0, %v677
    %679 = vmatmul.f32.gmra.mxu0 %v658
    %v680 = vpop.f32.mrf.mxu0
    %v681 = vadd.f32 0.0, %v680
    %682 = vdwg.mxu0
    %v683 = vadd.f32 %v647, %v678
    %v684 = vadd.f32 %v648, %v681
    %v686 = vperm.slane %v652, 0
    %v688 = vadd.f32 %v683, %v686
    %v689 = vadd.f32 %v684, %v686
    %v690 = vld [vmem:[%s37] sm:$0x1]
    %v691 = vld [vmem:[%s39] sm:$0x1]
    %v692 = vld [vmem:[%s41] sm:$0xff]
    %v693 = vld [vmem:[%s41 + $0x8] sm:$0xff]
    %v694 = vld [vmem:[%s41 + $0x10] sm:$0xff]
    %v695 = vld [vmem:[%s41 + $0x18] sm:$0xff]
    %v696 = vld [vmem:[%s43] sm:$0x1]
    %v697 = vld [vmem:[%s45] sm:$0xff]
    %v698 = vld [vmem:[%s45 + $0x8] sm:$0xff]
    %v699 = vld [vmem:[%s45 + $0x10] sm:$0xff]
    %v700 = vld [vmem:[%s45 + $0x18] sm:$0xff]
    %v701 = vld [vmem:[%s47] sm:$0x1]
    %v702 = vld [vmem:[%s49] sm:$0xff]
    %v703 = vld [vmem:[%s49 + $0x8] sm:$0xff]
    %v704 = vld [vmem:[%s49 + $0x10] sm:$0xff]
    %v705 = vld [vmem:[%s49 + $0x18] sm:$0xff]
    %v706 = vld [vmem:[%s51] sm:$0x1]
    %v707 = vld [vmem:[%s53] sm:$0xff]
    %v708 = vld [vmem:[%s53 + $0x8] sm:$0xff]
    %v709 = vld [vmem:[%s53 + $0x10] sm:$0xff]
    %v710 = vld [vmem:[%s53 + $0x18] sm:$0xff]
    %v711 = vld [vmem:[%s53 + $0x20] sm:$0xff]
    %v712 = vld [vmem:[%s53 + $0x28] sm:$0xff]
    %v713 = vld [vmem:[%s53 + $0x30] sm:$0xff]
    %v714 = vld [vmem:[%s53 + $0x38] sm:$0xff]
    %v715 = vld [vmem:[%s53 + $0x40] sm:$0xff]
    %v716 = vld [vmem:[%s53 + $0x48] sm:$0xff]
    %v717 = vld [vmem:[%s53 + $0x50] sm:$0xff]
    %v718 = vld [vmem:[%s53 + $0x58] sm:$0xff]
    %v719 = vld [vmem:[%s53 + $0x60] sm:$0xff]
    %v720 = vld [vmem:[%s53 + $0x68] sm:$0xff]
    %v721 = vld [vmem:[%s53 + $0x70] sm:$0xff]
    %v722 = vld [vmem:[%s53 + $0x78] sm:$0xff]
    %v723 = vld [vmem:[%s55] sm:$0x1]
    %v724 = vld [vmem:[%s57] sm:$0x1]
    %v725 = vld [vmem:[%s59] sm:$0x1]
    %v726 = vld [vmem:[%s61] sm:$0x1]
    %v727 = vld [vmem:[%s63] sm:$0x1]
    %v728 = vld [vmem:[%s65] sm:$0xff]
    %v729 = vld [vmem:[%s65 + $0x8] sm:$0xff]
    %v730 = vld [vmem:[%s65 + $0x10] sm:$0xff]
    %v731 = vld [vmem:[%s65 + $0x18] sm:$0xff]
    %v732 = vld [vmem:[%s67] sm:$0x1]
    %v733 = vld [vmem:[%s69] sm:$0xff]
    %v734 = vld [vmem:[%s69 + $0x8] sm:$0xff]
    %v735 = vld [vmem:[%s69 + $0x10] sm:$0xff]
    %v736 = vld [vmem:[%s69 + $0x18] sm:$0xff]
    %v737 = vld [vmem:[%s71] sm:$0x1]
    %v738 = vld [vmem:[%s73] sm:$0xff]
    %v739 = vld [vmem:[%s73 + $0x8] sm:$0xff]
    %v740 = vld [vmem:[%s73 + $0x10] sm:$0xff]
    %v741 = vld [vmem:[%s73 + $0x18] sm:$0xff]
    %v742 = vld [vmem:[%s75] sm:$0x1]
    %v743 = vld [vmem:[%s77] sm:$0xff]
    %v744 = vld [vmem:[%s77 + $0x8] sm:$0xff]
    %v745 = vld [vmem:[%s77 + $0x10] sm:$0xff]
    %v746 = vld [vmem:[%s77 + $0x18] sm:$0xff]
    %v747 = vld [vmem:[%s77 + $0x20] sm:$0xff]
    %v748 = vld [vmem:[%s77 + $0x28] sm:$0xff]
    %v749 = vld [vmem:[%s77 + $0x30] sm:$0xff]
    %v750 = vld [vmem:[%s77 + $0x38] sm:$0xff]
    %v751 = vld [vmem:[%s77 + $0x40] sm:$0xff]
    %v752 = vld [vmem:[%s77 + $0x48] sm:$0xff]
    %v753 = vld [vmem:[%s77 + $0x50] sm:$0xff]
    %v754 = vld [vmem:[%s77 + $0x58] sm:$0xff]
    %v755 = vld [vmem:[%s77 + $0x60] sm:$0xff]
    %v756 = vld [vmem:[%s77 + $0x68] sm:$0xff]
    %v757 = vld [vmem:[%s77 + $0x70] sm:$0xff]
    %v758 = vld [vmem:[%s77 + $0x78] sm:$0xff]
    %v759 = vld [vmem:[%s79] sm:$0x1]
    %v760 = vld [vmem:[%s81] sm:$0x1]
    %v761 = vld [vmem:[%s83] sm:$0x1]
    %v762 = vld [vmem:[%s85] sm:$0x1]
    %v763 = vld [vmem:[%s87] sm:$0x1]
    %v764 = vld [vmem:[%s89] sm:$0xff]
    %v765 = vld [vmem:[%s89 + $0x8] sm:$0xff]
    %v766 = vld [vmem:[%s89 + $0x10] sm:$0xff]
    %v767 = vld [vmem:[%s89 + $0x18] sm:$0xff]
    %v768 = vld [vmem:[#allocation14] sm:$0x1]
    %v769 = vld [vmem:[%s93] sm:$0xff]
    %v770 = vld [vmem:[%s93 + $0x8] sm:$0xff]
    %v771 = vld [vmem:[%s93 + $0x10] sm:$0xff]
    %v772 = vld [vmem:[%s93 + $0x18] sm:$0xff]
    %v773 = vld [vmem:[#allocation16] sm:$0x1]
    %v774 = vld [vmem:[%s97] sm:$0xff]
    %v775 = vld [vmem:[%s97 + $0x8] sm:$0xff]
    %v776 = vld [vmem:[%s97 + $0x10] sm:$0xff]
    %v777 = vld [vmem:[%s97 + $0x18] sm:$0xff]
    %v778 = vld [vmem:[#allocation17] sm:$0x1]
    %v779 = vld [vmem:[%s101] sm:$0xff]
    %v780 = vld [vmem:[%s101 + $0x8] sm:$0xff]
    %v781 = vld [vmem:[#allocation19] sm:$0x1]
    %783 = vset.pattern.permute.xlu0 0
    %784 = vperm.xlu0 %783, %v381
    %v785 = vpop.permute.xlu0 %784
    %788 = vset.pattern.permute.xlu0 0
    %789 = vperm.xlu0 %788, %v382
    %v790 = vpop.permute.xlu0 %789
    %v793 = vperm.slane %v690, 0
    %v795 = vmul.f32 %v785, %v793
    %v796 = vmul.f32 %v790, %v793
    %v798 = vsel %vm458, %v379, 0
    %v801 = vsel %vm458, %v380, 0
    %v804 = vsel %vm465, %v689, 0
    %806 = vmatpush.msra.mxu0 0.0
    %807 = vmatpush.msra.mxu0 0.0
    %808 = vmatpush.msra.mxu0 0.0
    %809 = vmatpush.msra.mxu0 0.0
    %810 = vmatpush.msra.mxu0 0.0
    %811 = vmatpush.msra.mxu0 0.0
    %812 = vmatpush.msra.mxu0 0.0
    %813 = vmatpush.msra.mxu0 0.0
    %814 = vmatpush.msra.mxu0 0.0
    %815 = vmatpush.msra.mxu0 0.0
    %816 = vmatpush.msra.mxu0 0.0
    %817 = vmatpush.msra.mxu0 0.0
    %818 = vmatpush.msra.mxu0 0.0
    %819 = vmatpush.msra.mxu0 0.0
    %820 = vmatpush.msra.mxu0 %v804
    %821 = vmatpush.msra.mxu0 %v688
    %822 = vmatmul.f32.gmra.mxu0 %v798
    %v823 = vpop.f32.mrf.mxu0
    %v824 = vadd.f32 %v795, %v823
    %825 = vmatmul.f32.gmra.mxu0 %v801
    %v826 = vpop.f32.mrf.mxu0
    %v827 = vadd.f32 %v796, %v826
    %828 = vdwg.mxu0
    %v830 = vperm.slane %v696, 0
    %v833 = vsel %vm617, %v824, 0
    %v836 = vsel %vm617, %v827, 0
    %838 = vmatpush.msra.mxu0 0.0
    %839 = vmatpush.msra.mxu0 0.0
    %840 = vmatpush.msra.mxu0 0.0
    %841 = vmatpush.msra.mxu0 0.0
    %842 = vmatpush.msra.mxu0 0.0
    %843 = vmatpush.msra.mxu0 0.0
    %844 = vmatpush.msra.mxu0 0.0
    %845 = vmatpush.msra.mxu0 0.0
    %846 = vmatpush.msra.mxu0 0.0
    %847 = vmatpush.msra.mxu0 0.0
    %848 = vmatpush.msra.mxu0 0.0
    %849 = vmatpush.msra.mxu0 0.0
    %850 = vmatpush.msra.mxu0 %v695
    %851 = vmatpush.msra.mxu0 %v694
    %852 = vmatpush.msra.mxu0 %v693
    %853 = vmatpush.msra.mxu0 %v692
    %854 = vmatmul.f32.gmra.mxu0 %v833
    %v855 = vpop.f32.mrf.mxu0
    %v856 = vadd.f32 %v830, %v855
    %857 = vmatmul.f32.gmra.mxu0 %v836
    %v858 = vpop.f32.mrf.mxu0
    %v859 = vadd.f32 %v830, %v858
    %860 = vdwg.mxu0
    %863 = vrot.lane.b32.xlu0 %v856, 96
    %v864 = vpop.permute.xlu0 %863
    %865 = vrot.lane.b32.xlu0 %v859, 96
    %v866 = vpop.permute.xlu0 %865
    %vm867 = vcmask 64512
    %v868 = vsel %vm867, %v856, 0
    %v870 = vsel %vm867, %v859, 0
    %v872 = vsel %vm867, %v864, 0
    %v874 = vsel %vm867, %v866, 0
    %876 = vmatpush.xpose.msra.mxu0 0.0
    %877 = vmatpush.xpose.msra.mxu0 0.0
    %878 = vmatpush.xpose.msra.mxu0 0.0
    %879 = vmatpush.xpose.msra.mxu0 0.0
    %880 = vmatpush.xpose.msra.mxu0 0.0
    %881 = vmatpush.xpose.msra.mxu0 0.0
    %882 = vmatpush.xpose.msra.mxu0 0.0
    %883 = vmatpush.xpose.msra.mxu0 0.0
    %884 = vmatpush.xpose.msra.mxu0 0.0
    %885 = vmatpush.xpose.msra.mxu0 0.0
    %886 = vmatpush.xpose.msra.mxu0 0.0
    %887 = vmatpush.xpose.msra.mxu0 0.0
    %888 = vmatpush.xpose.msra.mxu0 0.0
    %889 = vmatpush.xpose.msra.mxu0 0.0
    %890 = vmatpush.xpose.msra.mxu0 %v874
    %891 = vmatpush.xpose.msra.mxu0 %v872
    %892 = vmatmul.f32.gmra.mxu0 %v868
    %v893 = vpop.f32.mrf.mxu0
    %v894 = vadd.f32 0.0, %v893
    %895 = vmatmul.f32.gmra.mxu0 %v870
    %v896 = vpop.f32.mrf.mxu0
    %v897 = vadd.f32 0.0, %v896
    %898 = vdwg.mxu0
    %v899 = vmul.f32 %v894, 0.35355338
    %v900 = vmul.f32 %v897, 0.35355338
    %v901 = vadd.f32 %v899, %v386
    %v902 = vadd.f32 %v900, %v387
    %vm903 = vcmask 113664
    %v904 = vsel %vm903, %v901, -inf
    %905 = vmax.xlane.f32.xlu0 %v904
    %v906 = vpop.xlane.xlu0 %905
    %vm907 = vcmask 111616
    %v908 = vsel %vm907, %v902, -inf
    %909 = vmax.xlane.f32.xlu0 %v908
    %v910 = vpop.xlane.xlu0 %909
    %v911 = vsub.f32 %v901, %v906
    %v912 = vsub.f32 %v902, %v910
    %v913 = vmul.f32 %v911, 1.442695
    %v914 = vpow.pop %v913
    %v915 = vmul.f32 %v912, 1.442695
    %v916 = vpow.pop %v915
    %v917 = vsel %vm903, %v914, 0.0
    %918 = vadd.xlane.f32.xlu0 %v917
    %v919 = vpop.xlane.xlu0 %918
    %v920 = vsel %vm907, %v916, 0.0
    %921 = vadd.xlane.f32.xlu0 %v920
    %v922 = vpop.xlane.xlu0 %921
    %v923 = vrcp.pop %v919
    %v924 = vmul.f32 %v919, %v923
    %v925 = vsub.f32 1.0, %v924
    %v926 = vmul.f32 %v923, %v925
    %v927 = vadd.f32 %v923, %v926
    %vm928 = vweird.f32 %v919
    %vm929 = vweird.f32 %v923
    %vm930 = vmor %vm928, %vm929
    %v931 = vsel %vm930, %v923, %v927
    %v932 = vand.u32 2147483647, %v919
    %vm933 = vcmp.eq.f32.partialorder %v932, 8.507059e+37
    %v934 = vand.u32 %v919, 2147483648
    %v935 = vor.u32 1.1754944e-38, %v934
    %v936 = vsel %vm933, %v935, %v931
    %v937 = vmul.f32 %v914, %v936
    %v938 = vrcp.pop %v922
    %v939 = vmul.f32 %v922, %v938
    %v940 = vsub.f32 1.0, %v939
    %v941 = vmul.f32 %v938, %v940
    %v942 = vadd.f32 %v938, %v941
    %vm943 = vweird.f32 %v922
    %vm944 = vweird.f32 %v938
    %vm945 = vmor %vm943, %vm944
    %v946 = vsel %vm945, %v938, %v942
    %v947 = vand.u32 2147483647, %v922
    %vm948 = vcmp.eq.f32.partialorder %v947, 8.507059e+37
    %v949 = vand.u32 %v922, 2147483648
    %v950 = vor.u32 1.1754944e-38, %v949
    %v951 = vsel %vm948, %v950, %v946
    %v952 = vmul.f32 %v916, %v951
    %953 = vrot.lane.b32.xlu0 %v856, 64
    %v954 = vpop.permute.xlu0 %953
    %955 = vrot.lane.b32.xlu0 %v859, 64
    %v956 = vpop.permute.xlu0 %955
    %v959 = vsel %vm903, %v937, 0
    %v962 = vsel %vm903, %v952, 0
    %vm964 = vcmask 1045504
    %v965 = vsel %vm964, %v956, 0
    %967 = vmatpush.msra.mxu0 0.0
    %968 = vmatpush.msra.mxu0 0.0
    %969 = vmatpush.msra.mxu0 0.0
    %970 = vmatpush.msra.mxu0 0.0
    %971 = vmatpush.msra.mxu0 0.0
    %972 = vmatpush.msra.mxu0 0.0
    %973 = vmatpush.msra.mxu0 0.0
    %974 = vmatpush.msra.mxu0 0.0
    %975 = vmatpush.msra.mxu0 0.0
    %976 = vmatpush.msra.mxu0 0.0
    %977 = vmatpush.msra.mxu0 0.0
    %978 = vmatpush.msra.mxu0 0.0
    %979 = vmatpush.msra.mxu0 0.0
    %980 = vmatpush.msra.mxu0 0.0
    %981 = vmatpush.msra.mxu0 %v965
    %982 = vmatpush.msra.mxu0 %v954
    %983 = vmatmul.f32.gmra.mxu0 %v959
    %v984 = vpop.f32.mrf.mxu0
    %v985 = vadd.f32 0.0, %v984
    %986 = vmatmul.f32.gmra.mxu0 %v962
    %v987 = vpop.f32.mrf.mxu0
    %v988 = vadd.f32 0.0, %v987
    %989 = vdwg.mxu0
    %990 = vrot.lane.b32.xlu0 %v856, 120
    %v991 = vpop.permute.xlu0 %990
    %992 = vrot.lane.b32.xlu0 %v859, 120
    %v993 = vpop.permute.xlu0 %992
    %994 = vrot.lane.b32.xlu0 %v856, 88
    %v995 = vpop.permute.xlu0 %994
    %996 = vrot.lane.b32.xlu0 %v859, 88
    %v997 = vpop.permute.xlu0 %996
    %v998 = vsel %vm867, %v991, 0
    %v1000 = vsel %vm867, %v993, 0
    %v1002 = vsel %vm867, %v995, 0
    %v1004 = vsel %vm867, %v997, 0
    %1006 = vmatpush.xpose.msra.mxu0 0.0
    %1007 = vmatpush.xpose.msra.mxu0 0.0
    %1008 = vmatpush.xpose.msra.mxu0 0.0
    %1009 = vmatpush.xpose.msra.mxu0 0.0
    %1010 = vmatpush.xpose.msra.mxu0 0.0
    %1011 = vmatpush.xpose.msra.mxu0 0.0
    %1012 = vmatpush.xpose.msra.mxu0 0.0
    %1013 = vmatpush.xpose.msra.mxu0 0.0
    %1014 = vmatpush.xpose.msra.mxu0 0.0
    %1015 = vmatpush.xpose.msra.mxu0 0.0
    %1016 = vmatpush.xpose.msra.mxu0 0.0
    %1017 = vmatpush.xpose.msra.mxu0 0.0
    %1018 = vmatpush.xpose.msra.mxu0 0.0
    %1019 = vmatpush.xpose.msra.mxu0 0.0
    %1020 = vmatpush.xpose.msra.mxu0 %v1004
    %1021 = vmatpush.xpose.msra.mxu0 %v1002
    %1022 = vmatmul.f32.gmra.mxu0 %v998
    %v1023 = vpop.f32.mrf.mxu0
    %v1024 = vadd.f32 0.0, %v1023
    %1025 = vmatmul.f32.gmra.mxu0 %v1000
    %v1026 = vpop.f32.mrf.mxu0
    %v1027 = vadd.f32 0.0, %v1026
    %1028 = vdwg.mxu0
    %v1029 = vmul.f32 %v1024, 0.35355338
    %v1030 = vmul.f32 %v1027, 0.35355338
    %v1031 = vadd.f32 %v1029, %v386
    %v1032 = vadd.f32 %v1030, %v387
    %v1033 = vsel %vm903, %v1031, -inf
    %1034 = vmax.xlane.f32.xlu0 %v1033
    %v1035 = vpop.xlane.xlu0 %1034
    %v1036 = vsel %vm907, %v1032, -inf
    %1037 = vmax.xlane.f32.xlu0 %v1036
    %v1038 = vpop.xlane.xlu0 %1037
    %v1039 = vsub.f32 %v1031, %v1035
    %v1040 = vsub.f32 %v1032, %v1038
    %v1041 = vmul.f32 %v1039, 1.442695
    %v1042 = vpow.pop %v1041
    %v1043 = vmul.f32 %v1040, 1.442695
    %v1044 = vpow.pop %v1043
    %v1045 = vsel %vm903, %v1042, 0.0
    %1046 = vadd.xlane.f32.xlu0 %v1045
    %v1047 = vpop.xlane.xlu0 %1046
    %v1048 = vsel %vm907, %v1044, 0.0
    %1049 = vadd.xlane.f32.xlu0 %v1048
    %v1050 = vpop.xlane.xlu0 %1049
    %v1051 = vrcp.pop %v1047
    %v1052 = vmul.f32 %v1047, %v1051
    %v1053 = vsub.f32 1.0, %v1052
    %v1054 = vmul.f32 %v1051, %v1053
    %v1055 = vadd.f32 %v1051, %v1054
    %vm1056 = vweird.f32 %v1047
    %vm1057 = vweird.f32 %v1051
    %vm1058 = vmor %vm1056, %vm1057
    %v1059 = vsel %vm1058, %v1051, %v1055
    %v1060 = vand.u32 2147483647, %v1047
    %vm1061 = vcmp.eq.f32.partialorder %v1060, 8.507059e+37
    %v1062 = vand.u32 %v1047, 2147483648
    %v1063 = vor.u32 1.1754944e-38, %v1062
    %v1064 = vsel %vm1061, %v1063, %v1059
    %v1065 = vmul.f32 %v1042, %v1064
    %v1066 = vrcp.pop %v1050
    %v1067 = vmul.f32 %v1050, %v1066
    %v1068 = vsub.f32 1.0, %v1067
    %v1069 = vmul.f32 %v1066, %v1068
    %v1070 = vadd.f32 %v1066, %v1069
    %vm1071 = vweird.f32 %v1050
    %vm1072 = vweird.f32 %v1066
    %vm1073 = vmor %vm1071, %vm1072
    %v1074 = vsel %vm1073, %v1066, %v1070
    %v1075 = vand.u32 2147483647, %v1050
    %vm1076 = vcmp.eq.f32.partialorder %v1075, 8.507059e+37
    %v1077 = vand.u32 %v1050, 2147483648
    %v1078 = vor.u32 1.1754944e-38, %v1077
    %v1079 = vsel %vm1076, %v1078, %v1074
    %v1080 = vmul.f32 %v1044, %v1079
    %1081 = vrot.lane.b32.xlu0 %v856, 56
    %v1082 = vpop.permute.xlu0 %1081
    %1083 = vrot.lane.b32.xlu0 %v859, 56
    %v1084 = vpop.permute.xlu0 %1083
    %v1087 = vsel %vm903, %v1065, 0
    %v1090 = vsel %vm903, %v1080, 0
    %v1092 = vsel %vm964, %v1084, 0
    %1094 = vmatpush.msra.mxu0 0.0
    %1095 = vmatpush.msra.mxu0 0.0
    %1096 = vmatpush.msra.mxu0 0.0
    %1097 = vmatpush.msra.mxu0 0.0
    %1098 = vmatpush.msra.mxu0 0.0
    %1099 = vmatpush.msra.mxu0 0.0
    %1100 = vmatpush.msra.mxu0 0.0
    %1101 = vmatpush.msra.mxu0 0.0
    %1102 = vmatpush.msra.mxu0 0.0
    %1103 = vmatpush.msra.mxu0 0.0
    %1104 = vmatpush.msra.mxu0 0.0
    %1105 = vmatpush.msra.mxu0 0.0
    %1106 = vmatpush.msra.mxu0 0.0
    %1107 = vmatpush.msra.mxu0 0.0
    %1108 = vmatpush.msra.mxu0 %v1092
    %1109 = vmatpush.msra.mxu0 %v1082
    %1110 = vmatmul.f32.gmra.mxu0 %v1087
    %v1111 = vpop.f32.mrf.mxu0
    %v1112 = vadd.f32 0.0, %v1111
    %1113 = vmatmul.f32.gmra.mxu0 %v1090
    %v1114 = vpop.f32.mrf.mxu0
    %v1115 = vadd.f32 0.0, %v1114
    %1116 = vdwg.mxu0
    %1117 = vrot.lane.b32.xlu0 %v856, 112
    %v1118 = vpop.permute.xlu0 %1117
    %1119 = vrot.lane.b32.xlu0 %v859, 112
    %v1120 = vpop.permute.xlu0 %1119
    %1121 = vrot.lane.b32.xlu0 %v856, 80
    %v1122 = vpop.permute.xlu0 %1121
    %1123 = vrot.lane.b32.xlu0 %v859, 80
    %v1124 = vpop.permute.xlu0 %1123
    %v1125 = vsel %vm867, %v1118, 0
    %v1127 = vsel %vm867, %v1120, 0
    %v1129 = vsel %vm867, %v1122, 0
    %v1131 = vsel %vm867, %v1124, 0
    %1133 = vmatpush.xpose.msra.mxu0 0.0
    %1134 = vmatpush.xpose.msra.mxu0 0.0
    %1135 = vmatpush.xpose.msra.mxu0 0.0
    %1136 = vmatpush.xpose.msra.mxu0 0.0
    %1137 = vmatpush.xpose.msra.mxu0 0.0
    %1138 = vmatpush.xpose.msra.mxu0 0.0
    %1139 = vmatpush.xpose.msra.mxu0 0.0
    %1140 = vmatpush.xpose.msra.mxu0 0.0
    %1141 = vmatpush.xpose.msra.mxu0 0.0
    %1142 = vmatpush.xpose.msra.mxu0 0.0
    %1143 = vmatpush.xpose.msra.mxu0 0.0
    %1144 = vmatpush.xpose.msra.mxu0 0.0
    %1145 = vmatpush.xpose.msra.mxu0 0.0
    %1146 = vmatpush.xpose.msra.mxu0 0.0
    %1147 = vmatpush.xpose.msra.mxu0 %v1131
    %1148 = vmatpush.xpose.msra.mxu0 %v1129
    %1149 = vmatmul.f32.gmra.mxu0 %v1125
    %v1150 = vpop.f32.mrf.mxu0
    %v1151 = vadd.f32 0.0, %v1150
    %1152 = vmatmul.f32.gmra.mxu0 %v1127
    %v1153 = vpop.f32.mrf.mxu0
    %v1154 = vadd.f32 0.0, %v1153
    %1155 = vdwg.mxu0
    %v1156 = vmul.f32 %v1151, 0.35355338
    %v1157 = vmul.f32 %v1154, 0.35355338
    %v1158 = vadd.f32 %v1156, %v386
    %v1159 = vadd.f32 %v1157, %v387
    %v1160 = vsel %vm903, %v1158, -inf
    %1161 = vmax.xlane.f32.xlu0 %v1160
    %v1162 = vpop.xlane.xlu0 %1161
    %v1163 = vsel %vm907, %v1159, -inf
    %1164 = vmax.xlane.f32.xlu0 %v1163
    %v1165 = vpop.xlane.xlu0 %1164
    %v1166 = vsub.f32 %v1158, %v1162
    %v1167 = vsub.f32 %v1159, %v1165
    %v1168 = vmul.f32 %v1166, 1.442695
    %v1169 = vpow.pop %v1168
    %v1170 = vmul.f32 %v1167, 1.442695
    %v1171 = vpow.pop %v1170
    %v1172 = vsel %vm903, %v1169, 0.0
    %1173 = vadd.xlane.f32.xlu0 %v1172
    %v1174 = vpop.xlane.xlu0 %1173
    %v1175 = vsel %vm907, %v1171, 0.0
    %1176 = vadd.xlane.f32.xlu0 %v1175
    %v1177 = vpop.xlane.xlu0 %1176
    %v1178 = vrcp.pop %v1174
    %v1179 = vmul.f32 %v1174, %v1178
    %v1180 = vsub.f32 1.0, %v1179
    %v1181 = vmul.f32 %v1178, %v1180
    %v1182 = vadd.f32 %v1178, %v1181
    %vm1183 = vweird.f32 %v1174
    %vm1184 = vweird.f32 %v1178
    %vm1185 = vmor %vm1183, %vm1184
    %v1186 = vsel %vm1185, %v1178, %v1182
    %v1187 = vand.u32 2147483647, %v1174
    %vm1188 = vcmp.eq.f32.partialorder %v1187, 8.507059e+37
    %v1189 = vand.u32 %v1174, 2147483648
    %v1190 = vor.u32 1.1754944e-38, %v1189
    %v1191 = vsel %vm1188, %v1190, %v1186
    %v1192 = vmul.f32 %v1169, %v1191
    %v1193 = vrcp.pop %v1177
    %v1194 = vmul.f32 %v1177, %v1193
    %v1195 = vsub.f32 1.0, %v1194
    %v1196 = vmul.f32 %v1193, %v1195
    %v1197 = vadd.f32 %v1193, %v1196
    %vm1198 = vweird.f32 %v1177
    %vm1199 = vweird.f32 %v1193
    %vm1200 = vmor %vm1198, %vm1199
    %v1201 = vsel %vm1200, %v1193, %v1197
    %v1202 = vand.u32 2147483647, %v1177
    %vm1203 = vcmp.eq.f32.partialorder %v1202, 8.507059e+37
    %v1204 = vand.u32 %v1177, 2147483648
    %v1205 = vor.u32 1.1754944e-38, %v1204
    %v1206 = vsel %vm1203, %v1205, %v1201
    %v1207 = vmul.f32 %v1171, %v1206
    %1208 = vrot.lane.b32.xlu0 %v856, 48
    %v1209 = vpop.permute.xlu0 %1208
    %1210 = vrot.lane.b32.xlu0 %v859, 48
    %v1211 = vpop.permute.xlu0 %1210
    %v1214 = vsel %vm903, %v1192, 0
    %v1217 = vsel %vm903, %v1207, 0
    %v1219 = vsel %vm964, %v1211, 0
    %1221 = vmatpush.msra.mxu0 0.0
    %1222 = vmatpush.msra.mxu0 0.0
    %1223 = vmatpush.msra.mxu0 0.0
    %1224 = vmatpush.msra.mxu0 0.0
    %1225 = vmatpush.msra.mxu0 0.0
    %1226 = vmatpush.msra.mxu0 0.0
    %1227 = vmatpush.msra.mxu0 0.0
    %1228 = vmatpush.msra.mxu0 0.0
    %1229 = vmatpush.msra.mxu0 0.0
    %1230 = vmatpush.msra.mxu0 0.0
    %1231 = vmatpush.msra.mxu0 0.0
    %1232 = vmatpush.msra.mxu0 0.0
    %1233 = vmatpush.msra.mxu0 0.0
    %1234 = vmatpush.msra.mxu0 0.0
    %1235 = vmatpush.msra.mxu0 %v1219
    %1236 = vmatpush.msra.mxu0 %v1209
    %1237 = vmatmul.f32.gmra.mxu0 %v1214
    %v1238 = vpop.f32.mrf.mxu0
    %v1239 = vadd.f32 0.0, %v1238
    %1240 = vmatmul.f32.gmra.mxu0 %v1217
    %v1241 = vpop.f32.mrf.mxu0
    %v1242 = vadd.f32 0.0, %v1241
    %1243 = vdwg.mxu0
    %1244 = vrot.lane.b32.xlu0 %v856, 104
    %v1245 = vpop.permute.xlu0 %1244
    %1246 = vrot.lane.b32.xlu0 %v859, 104
    %v1247 = vpop.permute.xlu0 %1246
    %1248 = vrot.lane.b32.xlu0 %v856, 72
    %v1249 = vpop.permute.xlu0 %1248
    %1250 = vrot.lane.b32.xlu0 %v859, 72
    %v1251 = vpop.permute.xlu0 %1250
    %v1252 = vsel %vm867, %v1245, 0
    %v1254 = vsel %vm867, %v1247, 0
    %v1256 = vsel %vm867, %v1249, 0
    %v1258 = vsel %vm867, %v1251, 0
    %1260 = vmatpush.xpose.msra.mxu0 0.0
    %1261 = vmatpush.xpose.msra.mxu0 0.0
    %1262 = vmatpush.xpose.msra.mxu0 0.0
    %1263 = vmatpush.xpose.msra.mxu0 0.0
    %1264 = vmatpush.xpose.msra.mxu0 0.0
    %1265 = vmatpush.xpose.msra.mxu0 0.0
    %1266 = vmatpush.xpose.msra.mxu0 0.0
    %1267 = vmatpush.xpose.msra.mxu0 0.0
    %1268 = vmatpush.xpose.msra.mxu0 0.0
    %1269 = vmatpush.xpose.msra.mxu0 0.0
    %1270 = vmatpush.xpose.msra.mxu0 0.0
    %1271 = vmatpush.xpose.msra.mxu0 0.0
    %1272 = vmatpush.xpose.msra.mxu0 0.0
    %1273 = vmatpush.xpose.msra.mxu0 0.0
    %1274 = vmatpush.xpose.msra.mxu0 %v1258
    %1275 = vmatpush.xpose.msra.mxu0 %v1256
    %1276 = vmatmul.f32.gmra.mxu0 %v1252
    %v1277 = vpop.f32.mrf.mxu0
    %v1278 = vadd.f32 0.0, %v1277
    %1279 = vmatmul.f32.gmra.mxu0 %v1254
    %v1280 = vpop.f32.mrf.mxu0
    %v1281 = vadd.f32 0.0, %v1280
    %1282 = vdwg.mxu0
    %v1283 = vmul.f32 %v1278, 0.35355338
    %v1284 = vmul.f32 %v1281, 0.35355338
    %v1285 = vadd.f32 %v1283, %v386
    %v1286 = vadd.f32 %v1284, %v387
    %v1287 = vsel %vm903, %v1285, -inf
    %1288 = vmax.xlane.f32.xlu0 %v1287
    %v1289 = vpop.xlane.xlu0 %1288
    %v1290 = vsel %vm907, %v1286, -inf
    %1291 = vmax.xlane.f32.xlu0 %v1290
    %v1292 = vpop.xlane.xlu0 %1291
    %v1293 = vsub.f32 %v1285, %v1289
    %v1294 = vsub.f32 %v1286, %v1292
    %v1295 = vmul.f32 %v1293, 1.442695
    %v1296 = vpow.pop %v1295
    %v1297 = vmul.f32 %v1294, 1.442695
    %v1298 = vpow.pop %v1297
    %v1299 = vsel %vm903, %v1296, 0.0
    %1300 = vadd.xlane.f32.xlu0 %v1299
    %v1301 = vpop.xlane.xlu0 %1300
    %v1302 = vsel %vm907, %v1298, 0.0
    %1303 = vadd.xlane.f32.xlu0 %v1302
    %v1304 = vpop.xlane.xlu0 %1303
    %v1305 = vrcp.pop %v1301
    %v1306 = vmul.f32 %v1301, %v1305
    %v1307 = vsub.f32 1.0, %v1306
    %v1308 = vmul.f32 %v1305, %v1307
    %v1309 = vadd.f32 %v1305, %v1308
    %vm1310 = vweird.f32 %v1301
    %vm1311 = vweird.f32 %v1305
    %vm1312 = vmor %vm1310, %vm1311
    %v1313 = vsel %vm1312, %v1305, %v1309
    %v1314 = vand.u32 2147483647, %v1301
    %vm1315 = vcmp.eq.f32.partialorder %v1314, 8.507059e+37
    %v1316 = vand.u32 %v1301, 2147483648
    %v1317 = vor.u32 1.1754944e-38, %v1316
    %v1318 = vsel %vm1315, %v1317, %v1313
    %v1319 = vmul.f32 %v1296, %v1318
    %v1320 = vrcp.pop %v1304
    %v1321 = vmul.f32 %v1304, %v1320
    %v1322 = vsub.f32 1.0, %v1321
    %v1323 = vmul.f32 %v1320, %v1322
    %v1324 = vadd.f32 %v1320, %v1323
    %vm1325 = vweird.f32 %v1304
    %vm1326 = vweird.f32 %v1320
    %vm1327 = vmor %vm1325, %vm1326
    %v1328 = vsel %vm1327, %v1320, %v1324
    %v1329 = vand.u32 2147483647, %v1304
    %vm1330 = vcmp.eq.f32.partialorder %v1329, 8.507059e+37
    %v1331 = vand.u32 %v1304, 2147483648
    %v1332 = vor.u32 1.1754944e-38, %v1331
    %v1333 = vsel %vm1330, %v1332, %v1328
    %v1334 = vmul.f32 %v1298, %v1333
    %1335 = vrot.lane.b32.xlu0 %v856, 40
    %v1336 = vpop.permute.xlu0 %1335
    %1337 = vrot.lane.b32.xlu0 %v859, 40
    %v1338 = vpop.permute.xlu0 %1337
    %v1341 = vsel %vm903, %v1319, 0
    %v1344 = vsel %vm903, %v1334, 0
    %v1346 = vsel %vm964, %v1338, 0
    %1348 = vmatpush.msra.mxu0 0.0
    %1349 = vmatpush.msra.mxu0 0.0
    %1350 = vmatpush.msra.mxu0 0.0
    %1351 = vmatpush.msra.mxu0 0.0
    %1352 = vmatpush.msra.mxu0 0.0
    %1353 = vmatpush.msra.mxu0 0.0
    %1354 = vmatpush.msra.mxu0 0.0
    %1355 = vmatpush.msra.mxu0 0.0
    %1356 = vmatpush.msra.mxu0 0.0
    %1357 = vmatpush.msra.mxu0 0.0
    %1358 = vmatpush.msra.mxu0 0.0
    %1359 = vmatpush.msra.mxu0 0.0
    %1360 = vmatpush.msra.mxu0 0.0
    %1361 = vmatpush.msra.mxu0 0.0
    %1362 = vmatpush.msra.mxu0 %v1346
    %1363 = vmatpush.msra.mxu0 %v1336
    %1364 = vmatmul.f32.gmra.mxu0 %v1341
    %v1365 = vpop.f32.mrf.mxu0
    %v1366 = vadd.f32 0.0, %v1365
    %1367 = vmatmul.f32.gmra.mxu0 %v1344
    %v1368 = vpop.f32.mrf.mxu0
    %v1369 = vadd.f32 0.0, %v1368
    %1370 = vdwg.mxu0
    %1373 = vrot.lane.b32.xlu0 %v1112, 8
    %v1374 = vpop.permute.xlu0 %1373
    %1375 = vrot.lane.b32.xlu0 %v1115, 8
    %v1376 = vpop.permute.xlu0 %1375
    %1381 = vrot.lane.b32.xlu0 %v1239, 16
    %v1382 = vpop.permute.xlu0 %1381
    %1383 = vrot.lane.b32.xlu0 %v1242, 16
    %v1384 = vpop.permute.xlu0 %1383
    %1389 = vrot.lane.b32.xlu0 %v1366, 24
    %v1390 = vpop.permute.xlu0 %1389
    %1391 = vrot.lane.b32.xlu0 %v1369, 24
    %v1392 = vpop.permute.xlu0 %1391
    %v1395 = vsel %vm867, %v985, %v1374
    %v1396 = vsel %vm867, %v988, %v1376
    %v1397 = vsel %vm517, %v1395, %v1382
    %v1398 = vsel %vm517, %v1396, %v1384
    %v1399 = vsel %vm653, %v1397, %v1390
    %v1400 = vsel %vm653, %v1398, %v1392
    %v1402 = vperm.slane %v701, 0
    %v1405 = vsel %vm617, %v1399, 0
    %v1408 = vsel %vm617, %v1400, 0
    %1410 = vmatpush.msra.mxu0 0.0
    %1411 = vmatpush.msra.mxu0 0.0
    %1412 = vmatpush.msra.mxu0 0.0
    %1413 = vmatpush.msra.mxu0 0.0
    %1414 = vmatpush.msra.mxu0 0.0
    %1415 = vmatpush.msra.mxu0 0.0
    %1416 = vmatpush.msra.mxu0 0.0
    %1417 = vmatpush.msra.mxu0 0.0
    %1418 = vmatpush.msra.mxu0 0.0
    %1419 = vmatpush.msra.mxu0 0.0
    %1420 = vmatpush.msra.mxu0 0.0
    %1421 = vmatpush.msra.mxu0 0.0
    %1422 = vmatpush.msra.mxu0 %v700
    %1423 = vmatpush.msra.mxu0 %v699
    %1424 = vmatpush.msra.mxu0 %v698
    %1425 = vmatpush.msra.mxu0 %v697
    %1426 = vmatmul.f32.gmra.mxu0 %v1405
    %v1427 = vpop.f32.mrf.mxu0
    %v1428 = vadd.f32 %v1402, %v1427
    %1429 = vmatmul.f32.gmra.mxu0 %v1408
    %v1430 = vpop.f32.mrf.mxu0
    %v1431 = vadd.f32 %v1402, %v1430
    %1432 = vdwg.mxu0
    %v1433 = vadd.f32 %v824, %v1428
    %v1434 = vadd.f32 %v827, %v1431
    %v1435 = vsel %vm617, %v1433, 0.0
    %1436 = vadd.xlane.f32.xlu0 %v1435
    %v1437 = vpop.xlane.xlu0 %1436
    %vm1438 = vcmask 259072
    %v1439 = vsel %vm1438, %v1434, 0.0
    %1440 = vadd.xlane.f32.xlu0 %v1439
    %v1441 = vpop.xlane.xlu0 %1440
    %v1442 = vrcp.pop 32.0
    %v1443 = vmul.f32 32.0, %v1442
    %v1444 = vsub.f32 1.0, %v1443
    %v1445 = vmul.f32 %v1442, %v1444
    %v1446 = vadd.f32 %v1442, %v1445
    %vm1447 = vweird.f32 %v1442
    %v1448 = vsel %vm1447, %v1442, %v1446
    %v1449 = vmul.f32 %v1437, %v1448
    %v1450 = vmul.f32 %v1441, %v1448
    %v1451 = vsub.f32 %v1433, %v1449
    %v1452 = vsub.f32 %v1434, %v1450
    %v1453 = vmul.f32 %v1451, %v1451
    %v1454 = vmul.f32 %v1452, %v1452
    %v1455 = vsel %vm617, %v1453, 0.0
    %1456 = vadd.xlane.f32.xlu0 %v1455
    %v1457 = vpop.xlane.xlu0 %1456
    %v1458 = vsel %vm1438, %v1454, 0.0
    %1459 = vadd.xlane.f32.xlu0 %v1458
    %v1460 = vpop.xlane.xlu0 %1459
    %v1461 = vmul.f32 %v1457, %v1448
    %v1462 = vmul.f32 %v1460, %v1448
    %v1463 = vadd.f32 %v1461, 1e-05
    %v1464 = vadd.f32 %v1462, 1e-05
    %v1465 = vrsqrt.pop %v1463
    %v1466 = vmul.f32 %v1465, %v1463
    %v1467 = vmul.f32 %v1466, %v1465
    %v1468 = vmul.f32 0.5, %v1467
    %v1469 = vsub.f32 1.5, %v1468
    %v1470 = vmul.f32 %v1465, %v1469
    %vm1471 = vweird.f32 %v1463
    %vm1472 = vweird.f32 %v1465
    %vm1473 = vmor %vm1471, %vm1472
    %v1474 = vsel %vm1473, %v1465, %v1470
    %v1475 = vrsqrt.pop %v1464
    %v1476 = vmul.f32 %v1475, %v1464
    %v1477 = vmul.f32 %v1476, %v1475
    %v1478 = vmul.f32 0.5, %v1477
    %v1479 = vsub.f32 1.5, %v1478
    %v1480 = vmul.f32 %v1475, %v1479
    %vm1481 = vweird.f32 %v1464
    %vm1482 = vweird.f32 %v1475
    %vm1483 = vmor %vm1481, %vm1482
    %v1484 = vsel %vm1483, %v1475, %v1480
    %v1485 = vmul.f32 %v1451, %v1474
    %v1486 = vmul.f32 %v1452, %v1484
    %v1488 = vperm.slane %v724, 0
    %v1490 = vmul.f32 %v1485, %v1488
    %v1491 = vmul.f32 %v1486, %v1488
    %v1493 = vperm.slane %v725, 0
    %v1495 = vadd.f32 %v1490, %v1493
    %v1496 = vadd.f32 %v1491, %v1493
    %v1498 = vperm.slane %v706, 0
    %v1501 = vsel %vm617, %v1495, 0
    %v1504 = vsel %vm617, %v1496, 0
    %1506 = vmatpush.msra.mxu0 0.0
    %1507 = vmatpush.msra.mxu0 0.0
    %1508 = vmatpush.msra.mxu0 0.0
    %1509 = vmatpush.msra.mxu0 0.0
    %1510 = vmatpush.msra.mxu0 0.0
    %1511 = vmatpush.msra.mxu0 0.0
    %1512 = vmatpush.msra.mxu0 0.0
    %1513 = vmatpush.msra.mxu0 0.0
    %1514 = vmatpush.msra.mxu0 0.0
    %1515 = vmatpush.msra.mxu0 0.0
    %1516 = vmatpush.msra.mxu0 0.0
    %1517 = vmatpush.msra.mxu0 0.0
    %1518 = vmatpush.msra.mxu0 %v705
    %1519 = vmatpush.msra.mxu0 %v704
    %1520 = vmatpush.msra.mxu0 %v703
    %1521 = vmatpush.msra.mxu0 %v702
    %1522 = vmatmul.f32.gmra.mxu0 %v1501
    %v1523 = vpop.f32.mrf.mxu0
    %v1524 = vadd.f32 %v1498, %v1523
    %1525 = vmatmul.f32.gmra.mxu0 %v1504
    %v1526 = vpop.f32.mrf.mxu0
    %v1527 = vadd.f32 %v1498, %v1526
    %1528 = vdwg.mxu0
    %v1529 = vmul.f32 %v1524, 0.5
    %v1530 = vmul.f32 %v1527, 0.5
    %v1531 = vmul.f32 %v1524, 0.70710677
    %v1532 = vmul.f32 %v1527, 0.70710677
    %v1533 = vand.u32 2147483647, %v1531
    %v1534 = vand.u32 2147483647, %v1532
    %v1535 = vmul.f32 %v1533, 0.3275911
    %v1536 = vmul.f32 %v1534, 0.3275911
    %v1537 = vadd.f32 %v1535, 1.0
    %v1538 = vadd.f32 %v1536, 1.0
    %v1539 = vrcp.pop %v1537
    %v1540 = vmul.f32 %v1537, %v1539
    %v1541 = vsub.f32 1.0, %v1540
    %v1542 = vmul.f32 %v1539, %v1541
    %v1543 = vadd.f32 %v1539, %v1542
    %vm1544 = vweird.f32 %v1537
    %vm1545 = vweird.f32 %v1539
    %vm1546 = vmor %vm1544, %vm1545
    %v1547 = vsel %vm1546, %v1539, %v1543
    %v1548 = vand.u32 2147483647, %v1537
    %vm1549 = vcmp.eq.f32.partialorder %v1548, 8.507059e+37
    %v1550 = vand.u32 %v1537, 2147483648
    %v1551 = vor.u32 1.1754944e-38, %v1550
    %v1552 = vsel %vm1549, %v1551, %v1547
    %v1553 = vmul.f32 1.0, %v1552
    %v1554 = vrcp.pop %v1538
    %v1555 = vmul.f32 %v1538, %v1554
    %v1556 = vsub.f32 1.0, %v1555
    %v1557 = vmul.f32 %v1554, %v1556
    %v1558 = vadd.f32 %v1554, %v1557
    %vm1559 = vweird.f32 %v1538
    %vm1560 = vweird.f32 %v1554
    %vm1561 = vmor %vm1559, %vm1560
    %v1562 = vsel %vm1561, %v1554, %v1558
    %v1563 = vand.u32 2147483647, %v1538
    %vm1564 = vcmp.eq.f32.partialorder %v1563, 8.507059e+37
    %v1565 = vand.u32 %v1538, 2147483648
    %v1566 = vor.u32 1.1754944e-38, %v1565
    %v1567 = vsel %vm1564, %v1566, %v1562
    %v1568 = vmul.f32 1.0, %v1567
    %v1569 = vmul.f32 %v1553, 1.0614054
    %v1570 = vmul.f32 %v1568, 1.0614054
    %v1571 = vadd.f32 %v1569, -1.4531521
    %v1572 = vadd.f32 %v1570, -1.4531521
    %v1573 = vmul.f32 %v1571, %v1553
    %v1574 = vmul.f32 %v1572, %v1568
    %v1575 = vadd.f32 %v1573, 1.4214138
    %v1576 = vadd.f32 %v1574, 1.4214138
    %v1577 = vmul.f32 %v1575, %v1553
    %v1578 = vmul.f32 %v1576, %v1568
    %v1579 = vadd.f32 %v1577, -0.28449672
    %v1580 = vadd.f32 %v1578, -0.28449672
    %v1581 = vmul.f32 %v1579, %v1553
    %v1582 = vmul.f32 %v1580, %v1568
    %v1583 = vadd.f32 %v1581, 0.2548296
    %v1584 = vadd.f32 %v1582, 0.2548296
    %v1585 = vmul.f32 %v1583, %v1553
    %v1586 = vmul.f32 %v1584, %v1568
    %v1587 = vsub.f32 0.0, %v1533
    %v1588 = vsub.f32 0.0, %v1534
    %v1589 = vmul.f32 %v1587, %v1533
    %v1590 = vmul.f32 %v1588, %v1534
    %v1591 = vmul.f32 %v1589, 1.442695
    %v1592 = vpow.pop %v1591
    %v1593 = vmul.f32 %v1590, 1.442695
    %v1594 = vpow.pop %v1593
    %v1595 = vmul.f32 %v1585, %v1592
    %v1596 = vmul.f32 %v1586, %v1594
    %v1597 = vsub.f32 1.0, %v1595
    %v1598 = vsub.f32 1.0, %v1596
    %vm1599 = vcmp.ge.f32.partialorder %v1531, 0.0
    %vm1600 = vcmp.ge.f32.partialorder %v1532, 0.0
    %v1601 = vsub.f32 0.0, %v1597
    %v1602 = vsub.f32 0.0, %v1598
    %v1603 = vsel %vm1599, %v1597, %v1601
    %v1604 = vsel %vm1600, %v1598, %v1602
    %v1605 = vadd.f32 %v1603, 1.0
    %v1606 = vadd.f32 %v1604, 1.0
    %v1607 = vmul.f32 %v1529, %v1605
    %v1608 = vmul.f32 %v1530, %v1606
    %v1610 = vperm.slane %v723, 0
    %1612 = vmatpush.msra.mxu0 %v722
    %1613 = vmatpush.msra.mxu0 %v721
    %1614 = vmatpush.msra.mxu0 %v720
    %1615 = vmatpush.msra.mxu0 %v719
    %1616 = vmatpush.msra.mxu0 %v718
    %1617 = vmatpush.msra.mxu0 %v717
    %1618 = vmatpush.msra.mxu0 %v716
    %1619 = vmatpush.msra.mxu0 %v715
    %1620 = vmatpush.msra.mxu0 %v714
    %1621 = vmatpush.msra.mxu0 %v713
    %1622 = vmatpush.msra.mxu0 %v712
    %1623 = vmatpush.msra.mxu0 %v711
    %1624 = vmatpush.msra.mxu0 %v710
    %1625 = vmatpush.msra.mxu0 %v709
    %1626 = vmatpush.msra.mxu0 %v708
    %1627 = vmatpush.msra.mxu0 %v707
    %1628 = vmatmul.f32.gmra.mxu0 %v1607
    %v1629 = vpop.f32.mrf.mxu0
    %v1630 = vadd.f32 %v1610, %v1629
    %1631 = vmatmul.f32.gmra.mxu0 %v1608
    %v1632 = vpop.f32.mrf.mxu0
    %v1633 = vadd.f32 %v1610, %v1632
    %1634 = vdwg.mxu0
    %v1635 = vadd.f32 %v1495, %v1630
    %v1636 = vadd.f32 %v1496, %v1633
    %v1637 = vsel %vm617, %v1635, 0.0
    %1638 = vadd.xlane.f32.xlu0 %v1637
    %v1639 = vpop.xlane.xlu0 %1638
    %v1640 = vsel %vm1438, %v1636, 0.0
    %1641 = vadd.xlane.f32.xlu0 %v1640
    %v1642 = vpop.xlane.xlu0 %1641
    %v1643 = vmul.f32 %v1639, %v1448
    %v1644 = vmul.f32 %v1642, %v1448
    %v1645 = vsub.f32 %v1635, %v1643
    %v1646 = vsub.f32 %v1636, %v1644
    %v1647 = vmul.f32 %v1645, %v1645
    %v1648 = vmul.f32 %v1646, %v1646
    %v1649 = vsel %vm617, %v1647, 0.0
    %1650 = vadd.xlane.f32.xlu0 %v1649
    %v1651 = vpop.xlane.xlu0 %1650
    %v1652 = vsel %vm1438, %v1648, 0.0
    %1653 = vadd.xlane.f32.xlu0 %v1652
    %v1654 = vpop.xlane.xlu0 %1653
    %v1655 = vmul.f32 %v1651, %v1448
    %v1656 = vmul.f32 %v1654, %v1448
    %v1657 = vadd.f32 %v1655, 1e-05
    %v1658 = vadd.f32 %v1656, 1e-05
    %v1659 = vrsqrt.pop %v1657
    %v1660 = vmul.f32 %v1659, %v1657
    %v1661 = vmul.f32 %v1660, %v1659
    %v1662 = vmul.f32 0.5, %v1661
    %v1663 = vsub.f32 1.5, %v1662
    %v1664 = vmul.f32 %v1659, %v1663
    %vm1665 = vweird.f32 %v1657
    %vm1666 = vweird.f32 %v1659
    %vm1667 = vmor %vm1665, %vm1666
    %v1668 = vsel %vm1667, %v1659, %v1664
    %v1669 = vrsqrt.pop %v1658
    %v1670 = vmul.f32 %v1669, %v1658
    %v1671 = vmul.f32 %v1670, %v1669
    %v1672 = vmul.f32 0.5, %v1671
    %v1673 = vsub.f32 1.5, %v1672
    %v1674 = vmul.f32 %v1669, %v1673
    %vm1675 = vweird.f32 %v1658
    %vm1676 = vweird.f32 %v1669
    %vm1677 = vmor %vm1675, %vm1676
    %v1678 = vsel %vm1677, %v1669, %v1674
    %v1679 = vmul.f32 %v1645, %v1668
    %v1680 = vmul.f32 %v1646, %v1678
    %v1682 = vperm.slane %v726, 0
    %v1684 = vmul.f32 %v1679, %v1682
    %v1685 = vmul.f32 %v1680, %v1682
    %v1687 = vperm.slane %v727, 0
    %v1689 = vadd.f32 %v1684, %v1687
    %v1690 = vadd.f32 %v1685, %v1687
    %v1692 = vsel %vm903, %v383, 0
    %v1695 = vsel %vm903, %v384, 0
    %v1698 = vsel %vm964, %v1690, 0
    %1700 = vmatpush.msra.mxu0 0.0
    %1701 = vmatpush.msra.mxu0 0.0
    %1702 = vmatpush.msra.mxu0 0.0
    %1703 = vmatpush.msra.mxu0 0.0
    %1704 = vmatpush.msra.mxu0 0.0
    %1705 = vmatpush.msra.mxu0 0.0
    %1706 = vmatpush.msra.mxu0 0.0
    %1707 = vmatpush.msra.mxu0 0.0
    %1708 = vmatpush.msra.mxu0 0.0
    %1709 = vmatpush.msra.mxu0 0.0
    %1710 = vmatpush.msra.mxu0 0.0
    %1711 = vmatpush.msra.mxu0 0.0
    %1712 = vmatpush.msra.mxu0 0.0
    %1713 = vmatpush.msra.mxu0 0.0
    %1714 = vmatpush.msra.mxu0 %v1698
    %1715 = vmatpush.msra.mxu0 %v1689
    %1716 = vmatmul.f32.gmra.mxu0 %v1692
    %v1717 = vpop.f32.mrf.mxu0
    %v1718 = vadd.f32 0.0, %v1717
    %1719 = vmatmul.f32.gmra.mxu0 %v1695
    %v1720 = vpop.f32.mrf.mxu0
    %v1721 = vadd.f32 0.0, %v1720
    %1722 = vdwg.mxu0
    %v1724 = vperm.slane %v691, 0
    %v1726 = vmul.f32 %v785, %v1724
    %v1727 = vmul.f32 %v790, %v1724
    %v1729 = vsel %vm465, %v1721, 0
    %1731 = vmatpush.msra.mxu0 0.0
    %1732 = vmatpush.msra.mxu0 0.0
    %1733 = vmatpush.msra.mxu0 0.0
    %1734 = vmatpush.msra.mxu0 0.0
    %1735 = vmatpush.msra.mxu0 0.0
    %1736 = vmatpush.msra.mxu0 0.0
    %1737 = vmatpush.msra.mxu0 0.0
    %1738 = vmatpush.msra.mxu0 0.0
    %1739 = vmatpush.msra.mxu0 0.0
    %1740 = vmatpush.msra.mxu0 0.0
    %1741 = vmatpush.msra.mxu0 0.0
    %1742 = vmatpush.msra.mxu0 0.0
    %1743 = vmatpush.msra.mxu0 0.0
    %1744 = vmatpush.msra.mxu0 0.0
    %1745 = vmatpush.msra.mxu0 %v1729
    %1746 = vmatpush.msra.mxu0 %v1718
    %1747 = vmatmul.f32.gmra.mxu0 %v798
    %v1748 = vpop.f32.mrf.mxu0
    %v1749 = vadd.f32 %v1726, %v1748
    %1750 = vmatmul.f32.gmra.mxu0 %v801
    %v1751 = vpop.f32.mrf.mxu0
    %v1752 = vadd.f32 %v1727, %v1751
    %1753 = vdwg.mxu0
    %v1755 = vperm.slane %v732, 0
    %v1758 = vsel %vm617, %v1749, 0
    %v1761 = vsel %vm617, %v1752, 0
    %1763 = vmatpush.msra.mxu0 0.0
    %1764 = vmatpush.msra.mxu0 0.0
    %1765 = vmatpush.msra.mxu0 0.0
    %1766 = vmatpush.msra.mxu0 0.0
    %1767 = vmatpush.msra.mxu0 0.0
    %1768 = vmatpush.msra.mxu0 0.0
    %1769 = vmatpush.msra.mxu0 0.0
    %1770 = vmatpush.msra.mxu0 0.0
    %1771 = vmatpush.msra.mxu0 0.0
    %1772 = vmatpush.msra.mxu0 0.0
    %1773 = vmatpush.msra.mxu0 0.0
    %1774 = vmatpush.msra.mxu0 0.0
    %1775 = vmatpush.msra.mxu0 %v731
    %1776 = vmatpush.msra.mxu0 %v730
    %1777 = vmatpush.msra.mxu0 %v729
    %1778 = vmatpush.msra.mxu0 %v728
    %1779 = vmatmul.f32.gmra.mxu0 %v1758
    %v1780 = vpop.f32.mrf.mxu0
    %v1781 = vadd.f32 %v1755, %v1780
    %1782 = vmatmul.f32.gmra.mxu0 %v1761
    %v1783 = vpop.f32.mrf.mxu0
    %v1784 = vadd.f32 %v1755, %v1783
    %1785 = vdwg.mxu0
    %1788 = vrot.lane.b32.xlu0 %v1781, 96
    %v1789 = vpop.permute.xlu0 %1788
    %1790 = vrot.lane.b32.xlu0 %v1784, 96
    %v1791 = vpop.permute.xlu0 %1790
    %v1792 = vsel %vm867, %v1781, 0
    %v1794 = vsel %vm867, %v1784, 0
    %v1796 = vsel %vm867, %v1789, 0
    %v1798 = vsel %vm867, %v1791, 0
    %1800 = vmatpush.xpose.msra.mxu0 0.0
    %1801 = vmatpush.xpose.msra.mxu0 0.0
    %1802 = vmatpush.xpose.msra.mxu0 0.0
    %1803 = vmatpush.xpose.msra.mxu0 0.0
    %1804 = vmatpush.xpose.msra.mxu0 0.0
    %1805 = vmatpush.xpose.msra.mxu0 0.0
    %1806 = vmatpush.xpose.msra.mxu0 0.0
    %1807 = vmatpush.xpose.msra.mxu0 0.0
    %1808 = vmatpush.xpose.msra.mxu0 0.0
    %1809 = vmatpush.xpose.msra.mxu0 0.0
    %1810 = vmatpush.xpose.msra.mxu0 0.0
    %1811 = vmatpush.xpose.msra.mxu0 0.0
    %1812 = vmatpush.xpose.msra.mxu0 0.0
    %1813 = vmatpush.xpose.msra.mxu0 0.0
    %1814 = vmatpush.xpose.msra.mxu0 %v1798
    %1815 = vmatpush.xpose.msra.mxu0 %v1796
    %1816 = vmatmul.f32.gmra.mxu0 %v1792
    %v1817 = vpop.f32.mrf.mxu0
    %v1818 = vadd.f32 0.0, %v1817
    %1819 = vmatmul.f32.gmra.mxu0 %v1794
    %v1820 = vpop.f32.mrf.mxu0
    %v1821 = vadd.f32 0.0, %v1820
    %1822 = vdwg.mxu0
    %v1823 = vmul.f32 %v1818, 0.35355338
    %v1824 = vmul.f32 %v1821, 0.35355338
    %v1825 = vadd.f32 %v1823, %v386
    %v1826 = vadd.f32 %v1824, %v387
    %v1827 = vsel %vm903, %v1825, -inf
    %1828 = vmax.xlane.f32.xlu0 %v1827
    %v1829 = vpop.xlane.xlu0 %1828
    %v1830 = vsel %vm907, %v1826, -inf
    %1831 = vmax.xlane.f32.xlu0 %v1830
    %v1832 = vpop.xlane.xlu0 %1831
    %v1833 = vsub.f32 %v1825, %v1829
    %v1834 = vsub.f32 %v1826, %v1832
    %v1835 = vmul.f32 %v1833, 1.442695
    %v1836 = vpow.pop %v1835
    %v1837 = vmul.f32 %v1834, 1.442695
    %v1838 = vpow.pop %v1837
    %v1839 = vsel %vm903, %v1836, 0.0
    %1840 = vadd.xlane.f32.xlu0 %v1839
    %v1841 = vpop.xlane.xlu0 %1840
    %v1842 = vsel %vm907, %v1838, 0.0
    %1843 = vadd.xlane.f32.xlu0 %v1842
    %v1844 = vpop.xlane.xlu0 %1843
    %v1845 = vrcp.pop %v1841
    %v1846 = vmul.f32 %v1841, %v1845
    %v1847 = vsub.f32 1.0, %v1846
    %v1848 = vmul.f32 %v1845, %v1847
    %v1849 = vadd.f32 %v1845, %v1848
    %vm1850 = vweird.f32 %v1841
    %vm1851 = vweird.f32 %v1845
    %vm1852 = vmor %vm1850, %vm1851
    %v1853 = vsel %vm1852, %v1845, %v1849
    %v1854 = vand.u32 2147483647, %v1841
    %vm1855 = vcmp.eq.f32.partialorder %v1854, 8.507059e+37
    %v1856 = vand.u32 %v1841, 2147483648
    %v1857 = vor.u32 1.1754944e-38, %v1856
    %v1858 = vsel %vm1855, %v1857, %v1853
    %v1859 = vmul.f32 %v1836, %v1858
    %v1860 = vrcp.pop %v1844
    %v1861 = vmul.f32 %v1844, %v1860
    %v1862 = vsub.f32 1.0, %v1861
    %v1863 = vmul.f32 %v1860, %v1862
    %v1864 = vadd.f32 %v1860, %v1863
    %vm1865 = vweird.f32 %v1844
    %vm1866 = vweird.f32 %v1860
    %vm1867 = vmor %vm1865, %vm1866
    %v1868 = vsel %vm1867, %v1860, %v1864
    %v1869 = vand.u32 2147483647, %v1844
    %vm1870 = vcmp.eq.f32.partialorder %v1869, 8.507059e+37
    %v1871 = vand.u32 %v1844, 2147483648
    %v1872 = vor.u32 1.1754944e-38, %v1871
    %v1873 = vsel %vm1870, %v1872, %v1868
    %v1874 = vmul.f32 %v1838, %v1873
    %1875 = vrot.lane.b32.xlu0 %v1781, 64
    %v1876 = vpop.permute.xlu0 %1875
    %1877 = vrot.lane.b32.xlu0 %v1784, 64
    %v1878 = vpop.permute.xlu0 %1877
    %v1881 = vsel %vm903, %v1859, 0
    %v1884 = vsel %vm903, %v1874, 0
    %v1886 = vsel %vm964, %v1878, 0
    %1888 = vmatpush.msra.mxu0 0.0
    %1889 = vmatpush.msra.mxu0 0.0
    %1890 = vmatpush.msra.mxu0 0.0
    %1891 = vmatpush.msra.mxu0 0.0
    %1892 = vmatpush.msra.mxu0 0.0
    %1893 = vmatpush.msra.mxu0 0.0
    %1894 = vmatpush.msra.mxu0 0.0
    %1895 = vmatpush.msra.mxu0 0.0
    %1896 = vmatpush.msra.mxu0 0.0
    %1897 = vmatpush.msra.mxu0 0.0
    %1898 = vmatpush.msra.mxu0 0.0
    %1899 = vmatpush.msra.mxu0 0.0
    %1900 = vmatpush.msra.mxu0 0.0
    %1901 = vmatpush.msra.mxu0 0.0
    %1902 = vmatpush.msra.mxu0 %v1886
    %1903 = vmatpush.msra.mxu0 %v1876
    %1904 = vmatmul.f32.gmra.mxu0 %v1881
    %v1905 = vpop.f32.mrf.mxu0
    %v1906 = vadd.f32 0.0, %v1905
    %1907 = vmatmul.f32.gmra.mxu0 %v1884
    %v1908 = vpop.f32.mrf.mxu0
    %v1909 = vadd.f32 0.0, %v1908
    %1910 = vdwg.mxu0
    %1911 = vrot.lane.b32.xlu0 %v1781, 120
    %v1912 = vpop.permute.xlu0 %1911
    %1913 = vrot.lane.b32.xlu0 %v1784, 120
    %v1914 = vpop.permute.xlu0 %1913
    %1915 = vrot.lane.b32.xlu0 %v1781, 88
    %v1916 = vpop.permute.xlu0 %1915
    %1917 = vrot.lane.b32.xlu0 %v1784, 88
    %v1918 = vpop.permute.xlu0 %1917
    %v1919 = vsel %vm867, %v1912, 0
    %v1921 = vsel %vm867, %v1914, 0
    %v1923 = vsel %vm867, %v1916, 0
    %v1925 = vsel %vm867, %v1918, 0
    %1927 = vmatpush.xpose.msra.mxu0 0.0
    %1928 = vmatpush.xpose.msra.mxu0 0.0
    %1929 = vmatpush.xpose.msra.mxu0 0.0
    %1930 = vmatpush.xpose.msra.mxu0 0.0
    %1931 = vmatpush.xpose.msra.mxu0 0.0
    %1932 = vmatpush.xpose.msra.mxu0 0.0
    %1933 = vmatpush.xpose.msra.mxu0 0.0
    %1934 = vmatpush.xpose.msra.mxu0 0.0
    %1935 = vmatpush.xpose.msra.mxu0 0.0
    %1936 = vmatpush.xpose.msra.mxu0 0.0
    %1937 = vmatpush.xpose.msra.mxu0 0.0
    %1938 = vmatpush.xpose.msra.mxu0 0.0
    %1939 = vmatpush.xpose.msra.mxu0 0.0
    %1940 = vmatpush.xpose.msra.mxu0 0.0
    %1941 = vmatpush.xpose.msra.mxu0 %v1925
    %1942 = vmatpush.xpose.msra.mxu0 %v1923
    %1943 = vmatmul.f32.gmra.mxu0 %v1919
    %v1944 = vpop.f32.mrf.mxu0
    %v1945 = vadd.f32 0.0, %v1944
    %1946 = vmatmul.f32.gmra.mxu0 %v1921
    %v1947 = vpop.f32.mrf.mxu0
    %v1948 = vadd.f32 0.0, %v1947
    %1949 = vdwg.mxu0
    %v1950 = vmul.f32 %v1945, 0.35355338
    %v1951 = vmul.f32 %v1948, 0.35355338
    %v1952 = vadd.f32 %v1950, %v386
    %v1953 = vadd.f32 %v1951, %v387
    %v1954 = vsel %vm903, %v1952, -inf
    %1955 = vmax.xlane.f32.xlu0 %v1954
    %v1956 = vpop.xlane.xlu0 %1955
    %v1957 = vsel %vm907, %v1953, -inf
    %1958 = vmax.xlane.f32.xlu0 %v1957
    %v1959 = vpop.xlane.xlu0 %1958
    %v1960 = vsub.f32 %v1952, %v1956
    %v1961 = vsub.f32 %v1953, %v1959
    %v1962 = vmul.f32 %v1960, 1.442695
    %v1963 = vpow.pop %v1962
    %v1964 = vmul.f32 %v1961, 1.442695
    %v1965 = vpow.pop %v1964
    %v1966 = vsel %vm903, %v1963, 0.0
    %1967 = vadd.xlane.f32.xlu0 %v1966
    %v1968 = vpop.xlane.xlu0 %1967
    %v1969 = vsel %vm907, %v1965, 0.0
    %1970 = vadd.xlane.f32.xlu0 %v1969
    %v1971 = vpop.xlane.xlu0 %1970
    %v1972 = vrcp.pop %v1968
    %v1973 = vmul.f32 %v1968, %v1972
    %v1974 = vsub.f32 1.0, %v1973
    %v1975 = vmul.f32 %v1972, %v1974
    %v1976 = vadd.f32 %v1972, %v1975
    %vm1977 = vweird.f32 %v1968
    %vm1978 = vweird.f32 %v1972
    %vm1979 = vmor %vm1977, %vm1978
    %v1980 = vsel %vm1979, %v1972, %v1976
    %v1981 = vand.u32 2147483647, %v1968
    %vm1982 = vcmp.eq.f32.partialorder %v1981, 8.507059e+37
    %v1983 = vand.u32 %v1968, 2147483648
    %v1984 = vor.u32 1.1754944e-38, %v1983
    %v1985 = vsel %vm1982, %v1984, %v1980
    %v1986 = vmul.f32 %v1963, %v1985
    %v1987 = vrcp.pop %v1971
    %v1988 = vmul.f32 %v1971, %v1987
    %v1989 = vsub.f32 1.0, %v1988
    %v1990 = vmul.f32 %v1987, %v1989
    %v1991 = vadd.f32 %v1987, %v1990
    %vm1992 = vweird.f32 %v1971
    %vm1993 = vweird.f32 %v1987
    %vm1994 = vmor %vm1992, %vm1993
    %v1995 = vsel %vm1994, %v1987, %v1991
    %v1996 = vand.u32 2147483647, %v1971
    %vm1997 = vcmp.eq.f32.partialorder %v1996, 8.507059e+37
    %v1998 = vand.u32 %v1971, 2147483648
    %v1999 = vor.u32 1.1754944e-38, %v1998
    %v2000 = vsel %vm1997, %v1999, %v1995
    %v2001 = vmul.f32 %v1965, %v2000
    %2002 = vrot.lane.b32.xlu0 %v1781, 56
    %v2003 = vpop.permute.xlu0 %2002
    %2004 = vrot.lane.b32.xlu0 %v1784, 56
    %v2005 = vpop.permute.xlu0 %2004
    %v2008 = vsel %vm903, %v1986, 0
    %v2011 = vsel %vm903, %v2001, 0
    %v2013 = vsel %vm964, %v2005, 0
    %2015 = vmatpush.msra.mxu0 0.0
    %2016 = vmatpush.msra.mxu0 0.0
    %2017 = vmatpush.msra.mxu0 0.0
    %2018 = vmatpush.msra.mxu0 0.0
    %2019 = vmatpush.msra.mxu0 0.0
    %2020 = vmatpush.msra.mxu0 0.0
    %2021 = vmatpush.msra.mxu0 0.0
    %2022 = vmatpush.msra.mxu0 0.0
    %2023 = vmatpush.msra.mxu0 0.0
    %2024 = vmatpush.msra.mxu0 0.0
    %2025 = vmatpush.msra.mxu0 0.0
    %2026 = vmatpush.msra.mxu0 0.0
    %2027 = vmatpush.msra.mxu0 0.0
    %2028 = vmatpush.msra.mxu0 0.0
    %2029 = vmatpush.msra.mxu0 %v2013
    %2030 = vmatpush.msra.mxu0 %v2003
    %2031 = vmatmul.f32.gmra.mxu0 %v2008
    %v2032 = vpop.f32.mrf.mxu0
    %v2033 = vadd.f32 0.0, %v2032
    %2034 = vmatmul.f32.gmra.mxu0 %v2011
    %v2035 = vpop.f32.mrf.mxu0
    %v2036 = vadd.f32 0.0, %v2035
    %2037 = vdwg.mxu0
    %2038 = vrot.lane.b32.xlu0 %v1781, 112
    %v2039 = vpop.permute.xlu0 %2038
    %2040 = vrot.lane.b32.xlu0 %v1784, 112
    %v2041 = vpop.permute.xlu0 %2040
    %2042 = vrot.lane.b32.xlu0 %v1781, 80
    %v2043 = vpop.permute.xlu0 %2042
    %2044 = vrot.lane.b32.xlu0 %v1784, 80
    %v2045 = vpop.permute.xlu0 %2044
    %v2046 = vsel %vm867, %v2039, 0
    %v2048 = vsel %vm867, %v2041, 0
    %v2050 = vsel %vm867, %v2043, 0
    %v2052 = vsel %vm867, %v2045, 0
    %2054 = vmatpush.xpose.msra.mxu0 0.0
    %2055 = vmatpush.xpose.msra.mxu0 0.0
    %2056 = vmatpush.xpose.msra.mxu0 0.0
    %2057 = vmatpush.xpose.msra.mxu0 0.0
    %2058 = vmatpush.xpose.msra.mxu0 0.0
    %2059 = vmatpush.xpose.msra.mxu0 0.0
    %2060 = vmatpush.xpose.msra.mxu0 0.0
    %2061 = vmatpush.xpose.msra.mxu0 0.0
    %2062 = vmatpush.xpose.msra.mxu0 0.0
    %2063 = vmatpush.xpose.msra.mxu0 0.0
    %2064 = vmatpush.xpose.msra.mxu0 0.0
    %2065 = vmatpush.xpose.msra.mxu0 0.0
    %2066 = vmatpush.xpose.msra.mxu0 0.0
    %2067 = vmatpush.xpose.msra.mxu0 0.0
    %2068 = vmatpush.xpose.msra.mxu0 %v2052
    %2069 = vmatpush.xpose.msra.mxu0 %v2050
    %2070 = vmatmul.f32.gmra.mxu0 %v2046
    %v2071 = vpop.f32.mrf.mxu0
    %v2072 = vadd.f32 0.0, %v2071
    %2073 = vmatmul.f32.gmra.mxu0 %v2048
    %v2074 = vpop.f32.mrf.mxu0
    %v2075 = vadd.f32 0.0, %v2074
    %2076 = vdwg.mxu0
    %v2077 = vmul.f32 %v2072, 0.35355338
    %v2078 = vmul.f32 %v2075, 0.35355338
    %v2079 = vadd.f32 %v2077, %v386
    %v2080 = vadd.f32 %v2078, %v387
    %v2081 = vsel %vm903, %v2079, -inf
    %2082 = vmax.xlane.f32.xlu0 %v2081
    %v2083 = vpop.xlane.xlu0 %2082
    %v2084 = vsel %vm907, %v2080, -inf
    %2085 = vmax.xlane.f32.xlu0 %v2084
    %v2086 = vpop.xlane.xlu0 %2085
    %v2087 = vsub.f32 %v2079, %v2083
    %v2088 = vsub.f32 %v2080, %v2086
    %v2089 = vmul.f32 %v2087, 1.442695
    %v2090 = vpow.pop %v2089
    %v2091 = vmul.f32 %v2088, 1.442695
    %v2092 = vpow.pop %v2091
    %v2093 = vsel %vm903, %v2090, 0.0
    %2094 = vadd.xlane.f32.xlu0 %v2093
    %v2095 = vpop.xlane.xlu0 %2094
    %v2096 = vsel %vm907, %v2092, 0.0
    %2097 = vadd.xlane.f32.xlu0 %v2096
    %v2098 = vpop.xlane.xlu0 %2097
    %v2099 = vrcp.pop %v2095
    %v2100 = vmul.f32 %v2095, %v2099
    %v2101 = vsub.f32 1.0, %v2100
    %v2102 = vmul.f32 %v2099, %v2101
    %v2103 = vadd.f32 %v2099, %v2102
    %vm2104 = vweird.f32 %v2095
    %vm2105 = vweird.f32 %v2099
    %vm2106 = vmor %vm2104, %vm2105
    %v2107 = vsel %vm2106, %v2099, %v2103
    %v2108 = vand.u32 2147483647, %v2095
    %vm2109 = vcmp.eq.f32.partialorder %v2108, 8.507059e+37
    %v2110 = vand.u32 %v2095, 2147483648
    %v2111 = vor.u32 1.1754944e-38, %v2110
    %v2112 = vsel %vm2109, %v2111, %v2107
    %v2113 = vmul.f32 %v2090, %v2112
    %v2114 = vrcp.pop %v2098
    %v2115 = vmul.f32 %v2098, %v2114
    %v2116 = vsub.f32 1.0, %v2115
    %v2117 = vmul.f32 %v2114, %v2116
    %v2118 = vadd.f32 %v2114, %v2117
    %vm2119 = vweird.f32 %v2098
    %vm2120 = vweird.f32 %v2114
    %vm2121 = vmor %vm2119, %vm2120
    %v2122 = vsel %vm2121, %v2114, %v2118
    %v2123 = vand.u32 2147483647, %v2098
    %vm2124 = vcmp.eq.f32.partialorder %v2123, 8.507059e+37
    %v2125 = vand.u32 %v2098, 2147483648
    %v2126 = vor.u32 1.1754944e-38, %v2125
    %v2127 = vsel %vm2124, %v2126, %v2122
    %v2128 = vmul.f32 %v2092, %v2127
    %2129 = vrot.lane.b32.xlu0 %v1781, 48
    %v2130 = vpop.permute.xlu0 %2129
    %2131 = vrot.lane.b32.xlu0 %v1784, 48
    %v2132 = vpop.permute.xlu0 %2131
    %v2135 = vsel %vm903, %v2113, 0
    %v2138 = vsel %vm903, %v2128, 0
    %v2140 = vsel %vm964, %v2132, 0
    %2142 = vmatpush.msra.mxu0 0.0
    %2143 = vmatpush.msra.mxu0 0.0
    %2144 = vmatpush.msra.mxu0 0.0
    %2145 = vmatpush.msra.mxu0 0.0
    %2146 = vmatpush.msra.mxu0 0.0
    %2147 = vmatpush.msra.mxu0 0.0
    %2148 = vmatpush.msra.mxu0 0.0
    %2149 = vmatpush.msra.mxu0 0.0
    %2150 = vmatpush.msra.mxu0 0.0
    %2151 = vmatpush.msra.mxu0 0.0
    %2152 = vmatpush.msra.mxu0 0.0
    %2153 = vmatpush.msra.mxu0 0.0
    %2154 = vmatpush.msra.mxu0 0.0
    %2155 = vmatpush.msra.mxu0 0.0
    %2156 = vmatpush.msra.mxu0 %v2140
    %2157 = vmatpush.msra.mxu0 %v2130
    %2158 = vmatmul.f32.gmra.mxu0 %v2135
    %v2159 = vpop.f32.mrf.mxu0
    %v2160 = vadd.f32 0.0, %v2159
    %2161 = vmatmul.f32.gmra.mxu0 %v2138
    %v2162 = vpop.f32.mrf.mxu0
    %v2163 = vadd.f32 0.0, %v2162
    %2164 = vdwg.mxu0
    %2165 = vrot.lane.b32.xlu0 %v1781, 104
    %v2166 = vpop.permute.xlu0 %2165
    %2167 = vrot.lane.b32.xlu0 %v1784, 104
    %v2168 = vpop.permute.xlu0 %2167
    %2169 = vrot.lane.b32.xlu0 %v1781, 72
    %v2170 = vpop.permute.xlu0 %2169
    %2171 = vrot.lane.b32.xlu0 %v1784, 72
    %v2172 = vpop.permute.xlu0 %2171
    %v2173 = vsel %vm867, %v2166, 0
    %v2175 = vsel %vm867, %v2168, 0
    %v2177 = vsel %vm867, %v2170, 0
    %v2179 = vsel %vm867, %v2172, 0
    %2181 = vmatpush.xpose.msra.mxu0 0.0
    %2182 = vmatpush.xpose.msra.mxu0 0.0
    %2183 = vmatpush.xpose.msra.mxu0 0.0
    %2184 = vmatpush.xpose.msra.mxu0 0.0
    %2185 = vmatpush.xpose.msra.mxu0 0.0
    %2186 = vmatpush.xpose.msra.mxu0 0.0
    %2187 = vmatpush.xpose.msra.mxu0 0.0
    %2188 = vmatpush.xpose.msra.mxu0 0.0
    %2189 = vmatpush.xpose.msra.mxu0 0.0
    %2190 = vmatpush.xpose.msra.mxu0 0.0
    %2191 = vmatpush.xpose.msra.mxu0 0.0
    %2192 = vmatpush.xpose.msra.mxu0 0.0
    %2193 = vmatpush.xpose.msra.mxu0 0.0
    %2194 = vmatpush.xpose.msra.mxu0 0.0
    %2195 = vmatpush.xpose.msra.mxu0 %v2179
    %2196 = vmatpush.xpose.msra.mxu0 %v2177
    %2197 = vmatmul.f32.gmra.mxu0 %v2173
    %v2198 = vpop.f32.mrf.mxu0
    %v2199 = vadd.f32 0.0, %v2198
    %2200 = vmatmul.f32.gmra.mxu0 %v2175
    %v2201 = vpop.f32.mrf.mxu0
    %v2202 = vadd.f32 0.0, %v2201
    %2203 = vdwg.mxu0
    %v2204 = vmul.f32 %v2199, 0.35355338
    %v2205 = vmul.f32 %v2202, 0.35355338
    %v2206 = vadd.f32 %v2204, %v386
    %v2207 = vadd.f32 %v2205, %v387
    %v2208 = vsel %vm903, %v2206, -inf
    %2209 = vmax.xlane.f32.xlu0 %v2208
    %v2210 = vpop.xlane.xlu0 %2209
    %v2211 = vsel %vm907, %v2207, -inf
    %2212 = vmax.xlane.f32.xlu0 %v2211
    %v2213 = vpop.xlane.xlu0 %2212
    %v2214 = vsub.f32 %v2206, %v2210
    %v2215 = vsub.f32 %v2207, %v2213
    %v2216 = vmul.f32 %v2214, 1.442695
    %v2217 = vpow.pop %v2216
    %v2218 = vmul.f32 %v2215, 1.442695
    %v2219 = vpow.pop %v2218
    %v2220 = vsel %vm903, %v2217, 0.0
    %2221 = vadd.xlane.f32.xlu0 %v2220
    %v2222 = vpop.xlane.xlu0 %2221
    %v2223 = vsel %vm907, %v2219, 0.0
    %2224 = vadd.xlane.f32.xlu0 %v2223
    %v2225 = vpop.xlane.xlu0 %2224
    %v2226 = vrcp.pop %v2222
    %v2227 = vmul.f32 %v2222, %v2226
    %v2228 = vsub.f32 1.0, %v2227
    %v2229 = vmul.f32 %v2226, %v2228
    %v2230 = vadd.f32 %v2226, %v2229
    %vm2231 = vweird.f32 %v2222
    %vm2232 = vweird.f32 %v2226
    %vm2233 = vmor %vm2231, %vm2232
    %v2234 = vsel %vm2233, %v2226, %v2230
    %v2235 = vand.u32 2147483647, %v2222
    %vm2236 = vcmp.eq.f32.partialorder %v2235, 8.507059e+37
    %v2237 = vand.u32 %v2222, 2147483648
    %v2238 = vor.u32 1.1754944e-38, %v2237
    %v2239 = vsel %vm2236, %v2238, %v2234
    %v2240 = vmul.f32 %v2217, %v2239
    %v2241 = vrcp.pop %v2225
    %v2242 = vmul.f32 %v2225, %v2241
    %v2243 = vsub.f32 1.0, %v2242
    %v2244 = vmul.f32 %v2241, %v2243
    %v2245 = vadd.f32 %v2241, %v2244
    %vm2246 = vweird.f32 %v2225
    %vm2247 = vweird.f32 %v2241
    %vm2248 = vmor %vm2246, %vm2247
    %v2249 = vsel %vm2248, %v2241, %v2245
    %v2250 = vand.u32 2147483647, %v2225
    %vm2251 = vcmp.eq.f32.partialorder %v2250, 8.507059e+37
    %v2252 = vand.u32 %v2225, 2147483648
    %v2253 = vor.u32 1.1754944e-38, %v2252
    %v2254 = vsel %vm2251, %v2253, %v2249
    %v2255 = vmul.f32 %v2219, %v2254
    %2256 = vrot.lane.b32.xlu0 %v1781, 40
    %v2257 = vpop.permute.xlu0 %2256
    %2258 = vrot.lane.b32.xlu0 %v1784, 40
    %v2259 = vpop.permute.xlu0 %2258
    %v2262 = vsel %vm903, %v2240, 0
    %v2265 = vsel %vm903, %v2255, 0
    %v2267 = vsel %vm964, %v2259, 0
    %2269 = vmatpush.msra.mxu0 0.0
    %2270 = vmatpush.msra.mxu0 0.0
    %2271 = vmatpush.msra.mxu0 0.0
    %2272 = vmatpush.msra.mxu0 0.0
    %2273 = vmatpush.msra.mxu0 0.0
    %2274 = vmatpush.msra.mxu0 0.0
    %2275 = vmatpush.msra.mxu0 0.0
    %2276 = vmatpush.msra.mxu0 0.0
    %2277 = vmatpush.msra.mxu0 0.0
    %2278 = vmatpush.msra.mxu0 0.0
    %2279 = vmatpush.msra.mxu0 0.0
    %2280 = vmatpush.msra.mxu0 0.0
    %2281 = vmatpush.msra.mxu0 0.0
    %2282 = vmatpush.msra.mxu0 0.0
    %2283 = vmatpush.msra.mxu0 %v2267
    %2284 = vmatpush.msra.mxu0 %v2257
    %2285 = vmatmul.f32.gmra.mxu0 %v2262
    %v2286 = vpop.f32.mrf.mxu0
    %v2287 = vadd.f32 0.0, %v2286
    %2288 = vmatmul.f32.gmra.mxu0 %v2265
    %v2289 = vpop.f32.mrf.mxu0
    %v2290 = vadd.f32 0.0, %v2289
    %2291 = vdwg.mxu0
    %2294 = vrot.lane.b32.xlu0 %v2033, 8
    %v2295 = vpop.permute.xlu0 %2294
    %2296 = vrot.lane.b32.xlu0 %v2036, 8
    %v2297 = vpop.permute.xlu0 %2296
    %2302 = vrot.lane.b32.xlu0 %v2160, 16
    %v2303 = vpop.permute.xlu0 %2302
    %2304 = vrot.lane.b32.xlu0 %v2163, 16
    %v2305 = vpop.permute.xlu0 %2304
    %2310 = vrot.lane.b32.xlu0 %v2287, 24
    %v2311 = vpop.permute.xlu0 %2310
    %2312 = vrot.lane.b32.xlu0 %v2290, 24
    %v2313 = vpop.permute.xlu0 %2312
    %v2316 = vsel %vm867, %v1906, %v2295
    %v2317 = vsel %vm867, %v1909, %v2297
    %v2318 = vsel %vm517, %v2316, %v2303
    %v2319 = vsel %vm517, %v2317, %v2305
    %v2320 = vsel %vm653, %v2318, %v2311
    %v2321 = vsel %vm653, %v2319, %v2313
    %v2323 = vperm.slane %v737, 0
    %v2326 = vsel %vm617, %v2320, 0
    %v2329 = vsel %vm617, %v2321, 0
    %2331 = vmatpush.msra.mxu0 0.0
    %2332 = vmatpush.msra.mxu0 0.0
    %2333 = vmatpush.msra.mxu0 0.0
    %2334 = vmatpush.msra.mxu0 0.0
    %2335 = vmatpush.msra.mxu0 0.0
    %2336 = vmatpush.msra.mxu0 0.0
    %2337 = vmatpush.msra.mxu0 0.0
    %2338 = vmatpush.msra.mxu0 0.0
    %2339 = vmatpush.msra.mxu0 0.0
    %2340 = vmatpush.msra.mxu0 0.0
    %2341 = vmatpush.msra.mxu0 0.0
    %2342 = vmatpush.msra.mxu0 0.0
    %2343 = vmatpush.msra.mxu0 %v736
    %2344 = vmatpush.msra.mxu0 %v735
    %2345 = vmatpush.msra.mxu0 %v734
    %2346 = vmatpush.msra.mxu0 %v733
    %2347 = vmatmul.f32.gmra.mxu0 %v2326
    %v2348 = vpop.f32.mrf.mxu0
    %v2349 = vadd.f32 %v2323, %v2348
    %2350 = vmatmul.f32.gmra.mxu0 %v2329
    %v2351 = vpop.f32.mrf.mxu0
    %v2352 = vadd.f32 %v2323, %v2351
    %2353 = vdwg.mxu0
    %v2354 = vadd.f32 %v1749, %v2349
    %v2355 = vadd.f32 %v1752, %v2352
    %v2356 = vsel %vm617, %v2354, 0.0
    %2357 = vadd.xlane.f32.xlu0 %v2356
    %v2358 = vpop.xlane.xlu0 %2357
    %v2359 = vsel %vm1438, %v2355, 0.0
    %2360 = vadd.xlane.f32.xlu0 %v2359
    %v2361 = vpop.xlane.xlu0 %2360
    %v2362 = vmul.f32 %v2358, %v1448
    %v2363 = vmul.f32 %v2361, %v1448
    %v2364 = vsub.f32 %v2354, %v2362
    %v2365 = vsub.f32 %v2355, %v2363
    %v2366 = vmul.f32 %v2364, %v2364
    %v2367 = vmul.f32 %v2365, %v2365
    %v2368 = vsel %vm617, %v2366, 0.0
    %2369 = vadd.xlane.f32.xlu0 %v2368
    %v2370 = vpop.xlane.xlu0 %2369
    %v2371 = vsel %vm1438, %v2367, 0.0
    %2372 = vadd.xlane.f32.xlu0 %v2371
    %v2373 = vpop.xlane.xlu0 %2372
    %v2374 = vmul.f32 %v2370, %v1448
    %v2375 = vmul.f32 %v2373, %v1448
    %v2376 = vadd.f32 %v2374, 1e-05
    %v2377 = vadd.f32 %v2375, 1e-05
    %v2378 = vrsqrt.pop %v2376
    %v2379 = vmul.f32 %v2378, %v2376
    %v2380 = vmul.f32 %v2379, %v2378
    %v2381 = vmul.f32 0.5, %v2380
    %v2382 = vsub.f32 1.5, %v2381
    %v2383 = vmul.f32 %v2378, %v2382
    %vm2384 = vweird.f32 %v2376
    %vm2385 = vweird.f32 %v2378
    %vm2386 = vmor %vm2384, %vm2385
    %v2387 = vsel %vm2386, %v2378, %v2383
    %v2388 = vrsqrt.pop %v2377
    %v2389 = vmul.f32 %v2388, %v2377
    %v2390 = vmul.f32 %v2389, %v2388
    %v2391 = vmul.f32 0.5, %v2390
    %v2392 = vsub.f32 1.5, %v2391
    %v2393 = vmul.f32 %v2388, %v2392
    %vm2394 = vweird.f32 %v2377
    %vm2395 = vweird.f32 %v2388
    %vm2396 = vmor %vm2394, %vm2395
    %v2397 = vsel %vm2396, %v2388, %v2393
    %v2398 = vmul.f32 %v2364, %v2387
    %v2399 = vmul.f32 %v2365, %v2397
    %v2401 = vperm.slane %v760, 0
    %v2403 = vmul.f32 %v2398, %v2401
    %v2404 = vmul.f32 %v2399, %v2401
    %v2406 = vperm.slane %v761, 0
    %v2408 = vadd.f32 %v2403, %v2406
    %v2409 = vadd.f32 %v2404, %v2406
    %v2411 = vperm.slane %v742, 0
    %v2414 = vsel %vm617, %v2408, 0
    %v2417 = vsel %vm617, %v2409, 0
    %2419 = vmatpush.msra.mxu0 0.0
    %2420 = vmatpush.msra.mxu0 0.0
    %2421 = vmatpush.msra.mxu0 0.0
    %2422 = vmatpush.msra.mxu0 0.0
    %2423 = vmatpush.msra.mxu0 0.0
    %2424 = vmatpush.msra.mxu0 0.0
    %2425 = vmatpush.msra.mxu0 0.0
    %2426 = vmatpush.msra.mxu0 0.0
    %2427 = vmatpush.msra.mxu0 0.0
    %2428 = vmatpush.msra.mxu0 0.0
    %2429 = vmatpush.msra.mxu0 0.0
    %2430 = vmatpush.msra.mxu0 0.0
    %2431 = vmatpush.msra.mxu0 %v741
    %2432 = vmatpush.msra.mxu0 %v740
    %2433 = vmatpush.msra.mxu0 %v739
    %2434 = vmatpush.msra.mxu0 %v738
    %2435 = vmatmul.f32.gmra.mxu0 %v2414
    %v2436 = vpop.f32.mrf.mxu0
    %v2437 = vadd.f32 %v2411, %v2436
    %2438 = vmatmul.f32.gmra.mxu0 %v2417
    %v2439 = vpop.f32.mrf.mxu0
    %v2440 = vadd.f32 %v2411, %v2439
    %2441 = vdwg.mxu0
    %v2442 = vmax.f32 %v2437, 0.0
    %v2443 = vmax.f32 %v2440, 0.0
    %v2445 = vperm.slane %v759, 0
    %2447 = vmatpush.msra.mxu0 %v758
    %2448 = vmatpush.msra.mxu0 %v757
    %2449 = vmatpush.msra.mxu0 %v756
    %2450 = vmatpush.msra.mxu0 %v755
    %2451 = vmatpush.msra.mxu0 %v754
    %2452 = vmatpush.msra.mxu0 %v753
    %2453 = vmatpush.msra.mxu0 %v752
    %2454 = vmatpush.msra.mxu0 %v751
    %2455 = vmatpush.msra.mxu0 %v750
    %2456 = vmatpush.msra.mxu0 %v749
    %2457 = vmatpush.msra.mxu0 %v748
    %2458 = vmatpush.msra.mxu0 %v747
    %2459 = vmatpush.msra.mxu0 %v746
    %2460 = vmatpush.msra.mxu0 %v745
    %2461 = vmatpush.msra.mxu0 %v744
    %2462 = vmatpush.msra.mxu0 %v743
    %2463 = vmatmul.f32.gmra.mxu0 %v2442
    %v2464 = vpop.f32.mrf.mxu0
    %v2465 = vadd.f32 %v2445, %v2464
    %2466 = vmatmul.f32.gmra.mxu0 %v2443
    %v2467 = vpop.f32.mrf.mxu0
    %v2468 = vadd.f32 %v2445, %v2467
    %2469 = vdwg.mxu0
    %v2470 = vadd.f32 %v2408, %v2465
    %v2471 = vadd.f32 %v2409, %v2468
    %v2472 = vsel %vm617, %v2470, 0.0
    %2473 = vadd.xlane.f32.xlu0 %v2472
    %v2474 = vpop.xlane.xlu0 %2473
    %v2475 = vsel %vm1438, %v2471, 0.0
    %2476 = vadd.xlane.f32.xlu0 %v2475
    %v2477 = vpop.xlane.xlu0 %2476
    %v2478 = vmul.f32 %v2474, %v1448
    %v2479 = vmul.f32 %v2477, %v1448
    %v2480 = vsub.f32 %v2470, %v2478
    %v2481 = vsub.f32 %v2471, %v2479
    %v2482 = vmul.f32 %v2480, %v2480
    %v2483 = vmul.f32 %v2481, %v2481
    %v2484 = vsel %vm617, %v2482, 0.0
    %2485 = vadd.xlane.f32.xlu0 %v2484
    %v2486 = vpop.xlane.xlu0 %2485
    %v2487 = vsel %vm1438, %v2483, 0.0
    %2488 = vadd.xlane.f32.xlu0 %v2487
    %v2489 = vpop.xlane.xlu0 %2488
    %v2490 = vmul.f32 %v2486, %v1448
    %v2491 = vmul.f32 %v2489, %v1448
    %v2492 = vadd.f32 %v2490, 1e-05
    %v2493 = vadd.f32 %v2491, 1e-05
    %v2494 = vrsqrt.pop %v2492
    %v2495 = vmul.f32 %v2494, %v2492
    %v2496 = vmul.f32 %v2495, %v2494
    %v2497 = vmul.f32 0.5, %v2496
    %v2498 = vsub.f32 1.5, %v2497
    %v2499 = vmul.f32 %v2494, %v2498
    %vm2500 = vweird.f32 %v2492
    %vm2501 = vweird.f32 %v2494
    %vm2502 = vmor %vm2500, %vm2501
    %v2503 = vsel %vm2502, %v2494, %v2499
    %v2504 = vrsqrt.pop %v2493
    %v2505 = vmul.f32 %v2504, %v2493
    %v2506 = vmul.f32 %v2505, %v2504
    %v2507 = vmul.f32 0.5, %v2506
    %v2508 = vsub.f32 1.5, %v2507
    %v2509 = vmul.f32 %v2504, %v2508
    %vm2510 = vweird.f32 %v2493
    %vm2511 = vweird.f32 %v2504
    %vm2512 = vmor %vm2510, %vm2511
    %v2513 = vsel %vm2512, %v2504, %v2509
    %v2514 = vmul.f32 %v2480, %v2503
    %v2515 = vmul.f32 %v2481, %v2513
    %v2517 = vperm.slane %v762, 0
    %v2519 = vmul.f32 %v2514, %v2517
    %v2520 = vmul.f32 %v2515, %v2517
    %v2522 = vperm.slane %v763, 0
    %v2524 = vadd.f32 %v2519, %v2522
    %v2525 = vadd.f32 %v2520, %v2522
    %v2527 = vsel %vm903, %v385, 0
    %v2530 = vsel %vm964, %v2525, 0
    %2532 = vmatpush.msra.mxu0 0.0
    %2533 = vmatpush.msra.mxu0 0.0
    %2534 = vmatpush.msra.mxu0 0.0
    %2535 = vmatpush.msra.mxu0 0.0
    %2536 = vmatpush.msra.mxu0 0.0
    %2537 = vmatpush.msra.mxu0 0.0
    %2538 = vmatpush.msra.mxu0 0.0
    %2539 = vmatpush.msra.mxu0 0.0
    %2540 = vmatpush.msra.mxu0 0.0
    %2541 = vmatpush.msra.mxu0 0.0
    %2542 = vmatpush.msra.mxu0 0.0
    %2543 = vmatpush.msra.mxu0 0.0
    %2544 = vmatpush.msra.mxu0 0.0
    %2545 = vmatpush.msra.mxu0 0.0
    %2546 = vmatpush.msra.mxu0 %v2530
    %2547 = vmatpush.msra.mxu0 %v2524
    %2548 = vmatmul.f32.gmra.mxu0 %v2527
    %v2549 = vpop.f32.mrf.mxu0
    %v2550 = vadd.f32 0.0, %v2549
    %2551 = vdwg.mxu0
    %vm2552 = vcmask 254976
    %2553 = vst.msk [vmem:[#allocation20] sm:$0x3] %vm2552, %v2550
    %2554 = vmatpush.msra.mxu0 0.0
    %2555 = vmatpush.msra.mxu0 0.0
    %2556 = vmatpush.msra.mxu0 0.0
    %2557 = vmatpush.msra.mxu0 0.0
    %2558 = vmatpush.msra.mxu0 0.0
    %2559 = vmatpush.msra.mxu0 0.0
    %2560 = vmatpush.msra.mxu0 0.0
    %2561 = vmatpush.msra.mxu0 0.0
    %2562 = vmatpush.msra.mxu0 0.0
    %2563 = vmatpush.msra.mxu0 0.0
    %2564 = vmatpush.msra.mxu0 0.0
    %2565 = vmatpush.msra.mxu0 0.0
    %2566 = vmatpush.msra.mxu0 0.0
    %2567 = vmatpush.msra.mxu0 0.0
    %2568 = vmatpush.msra.mxu0 %v2530
    %2569 = vmatpush.msra.mxu0 %v2524
    %2570 = vmatmul.f32.gmra.mxu0 %v1692
    %v2571 = vpop.f32.mrf.mxu0
    %v2572 = vadd.f32 0.0, %v2571
    %2573 = vmatmul.f32.gmra.mxu0 %v1695
    %v2574 = vpop.f32.mrf.mxu0
    %v2575 = vadd.f32 0.0, %v2574
    %2576 = vdwg.mxu0
    %v2578 = vperm.slane %v768, 0
    %v2581 = vsel %vm617, %v2572, 0
    %v2584 = vsel %vm617, %v2575, 0
    %2586 = vmatpush.msra.mxu0 0.0
    %2587 = vmatpush.msra.mxu0 0.0
    %2588 = vmatpush.msra.mxu0 0.0
    %2589 = vmatpush.msra.mxu0 0.0
    %2590 = vmatpush.msra.mxu0 0.0
    %2591 = vmatpush.msra.mxu0 0.0
    %2592 = vmatpush.msra.mxu0 0.0
    %2593 = vmatpush.msra.mxu0 0.0
    %2594 = vmatpush.msra.mxu0 0.0
    %2595 = vmatpush.msra.mxu0 0.0
    %2596 = vmatpush.msra.mxu0 0.0
    %2597 = vmatpush.msra.mxu0 0.0
    %2598 = vmatpush.msra.mxu0 %v767
    %2599 = vmatpush.msra.mxu0 %v766
    %2600 = vmatpush.msra.mxu0 %v765
    %2601 = vmatpush.msra.mxu0 %v764
    %2602 = vmatmul.f32.gmra.mxu0 %v2581
    %v2603 = vpop.f32.mrf.mxu0
    %v2604 = vadd.f32 %v2578, %v2603
    %2605 = vmatmul.f32.gmra.mxu0 %v2584
    %v2606 = vpop.f32.mrf.mxu0
    %v2607 = vadd.f32 %v2578, %v2606
    %2608 = vdwg.mxu0
    %v2609 = vmax.f32 %v2604, 0.0
    %v2610 = vmax.f32 %v2607, 0.0
    %v2612 = vperm.slane %v773, 0
    %v2615 = vsel %vm617, %v2609, 0
    %v2618 = vsel %vm617, %v2610, 0
    %2620 = vmatpush.msra.mxu0 0.0
    %2621 = vmatpush.msra.mxu0 0.0
    %2622 = vmatpush.msra.mxu0 0.0
    %2623 = vmatpush.msra.mxu0 0.0
    %2624 = vmatpush.msra.mxu0 0.0
    %2625 = vmatpush.msra.mxu0 0.0
    %2626 = vmatpush.msra.mxu0 0.0
    %2627 = vmatpush.msra.mxu0 0.0
    %2628 = vmatpush.msra.mxu0 0.0
    %2629 = vmatpush.msra.mxu0 0.0
    %2630 = vmatpush.msra.mxu0 0.0
    %2631 = vmatpush.msra.mxu0 0.0
    %2632 = vmatpush.msra.mxu0 %v772
    %2633 = vmatpush.msra.mxu0 %v771
    %2634 = vmatpush.msra.mxu0 %v770
    %2635 = vmatpush.msra.mxu0 %v769
    %2636 = vmatmul.f32.gmra.mxu0 %v2615
    %v2637 = vpop.f32.mrf.mxu0
    %v2638 = vadd.f32 %v2612, %v2637
    %2639 = vmatmul.f32.gmra.mxu0 %v2618
    %v2640 = vpop.f32.mrf.mxu0
    %v2641 = vadd.f32 %v2612, %v2640
    %2642 = vdwg.mxu0
    %v2644 = vperm.slane %v778, 0
    %v2647 = vsel %vm617, %v2638, 0
    %v2650 = vsel %vm617, %v2641, 0
    %2652 = vmatpush.msra.mxu0 0.0
    %2653 = vmatpush.msra.mxu0 0.0
    %2654 = vmatpush.msra.mxu0 0.0
    %2655 = vmatpush.msra.mxu0 0.0
    %2656 = vmatpush.msra.mxu0 0.0
    %2657 = vmatpush.msra.mxu0 0.0
    %2658 = vmatpush.msra.mxu0 0.0
    %2659 = vmatpush.msra.mxu0 0.0
    %2660 = vmatpush.msra.mxu0 0.0
    %2661 = vmatpush.msra.mxu0 0.0
    %2662 = vmatpush.msra.mxu0 0.0
    %2663 = vmatpush.msra.mxu0 0.0
    %2664 = vmatpush.msra.mxu0 %v777
    %2665 = vmatpush.msra.mxu0 %v776
    %2666 = vmatpush.msra.mxu0 %v775
    %2667 = vmatpush.msra.mxu0 %v774
    %2668 = vmatmul.f32.gmra.mxu0 %v2647
    %v2669 = vpop.f32.mrf.mxu0
    %v2670 = vadd.f32 %v2644, %v2669
    %2671 = vmatmul.f32.gmra.mxu0 %v2650
    %v2672 = vpop.f32.mrf.mxu0
    %v2673 = vadd.f32 %v2644, %v2672
    %2674 = vdwg.mxu0
    %vm2675 = vcmp.gt.f32.partialorder %v2670, 0.0
    %vm2676 = vcmp.gt.f32.partialorder %v2673, 0.0
    %v2677 = vmul.f32 %v2670, 0.1
    %v2678 = vmul.f32 %v2673, 0.1
    %v2679 = vsel %vm2675, %v2670, %v2677
    %v2680 = vsel %vm2676, %v2673, %v2678
    %v2682 = vperm.slane %v781, 0
    %v2685 = vsel %vm517, %v2679, 0
    %v2688 = vsel %vm517, %v2680, 0
    %2690 = vmatpush.msra.mxu0 0.0
    %2691 = vmatpush.msra.mxu0 0.0
    %2692 = vmatpush.msra.mxu0 0.0
    %2693 = vmatpush.msra.mxu0 0.0
    %2694 = vmatpush.msra.mxu0 0.0
    %2695 = vmatpush.msra.mxu0 0.0
    %2696 = vmatpush.msra.mxu0 0.0
    %2697 = vmatpush.msra.mxu0 0.0
    %2698 = vmatpush.msra.mxu0 0.0
    %2699 = vmatpush.msra.mxu0 0.0
    %2700 = vmatpush.msra.mxu0 0.0
    %2701 = vmatpush.msra.mxu0 0.0
    %2702 = vmatpush.msra.mxu0 0.0
    %2703 = vmatpush.msra.mxu0 0.0
    %2704 = vmatpush.msra.mxu0 %v780
    %2705 = vmatpush.msra.mxu0 %v779
    %2706 = vmatmul.f32.gmra.mxu0 %v2685
    %v2707 = vpop.f32.mrf.mxu0
    %v2708 = vadd.f32 %v2682, %v2707
    %2709 = vmatmul.f32.gmra.mxu0 %v2688
    %v2710 = vpop.f32.mrf.mxu0
    %v2711 = vadd.f32 %v2682, %v2710
    %2712 = vdwg.mxu0
    %2713 = vst.msk [vmem:[%s107] sm:$0xff] %vm395, %v2708
    %vm2714 = vcmask 26624
    %2715 = vst.msk [vmem:[%s107 + $0x8] sm:$0x7] %vm2714, %v2711
    // Predicated region
    $region254: #{tpu_custom_call.1} parent=1 // pred_check
      _
    $region255: #{tpu_custom_call.1} parent=1 // pred_check_branch
      %2717 = sbr.rel (0) target = $region257
    $region256: #{tpu_custom_call.1} parent=1 // pred_region
      %2719 = vsyncadd [#allocation4], 0
      %s2721 = sshll.u32 [#allocation20], 4
      %s2722 = int_to_ptr.vmem [resolvable:$true] %s2721
      %s2723 = sshll.u32 %s105, 4
      %s2724 = int_to_ptr.hbm [resolvable:$true] %s2723
      %2726 = dma.vmem_to_hbm [thread:$0]  %s2722, 32, %s2724, [#allocation4]
    $region257: #{tpu_custom_call.1} parent=1 // pred_fallthru
      _
    // Predicated region
    $region258: #{tpu_custom_call.1} parent=1 // pred_check
      _
    $region259: #{tpu_custom_call.1} parent=1 // pred_check_branch
      %2728 = sbr.rel (0) target = $region261
    $region260: #{tpu_custom_call.1} parent=1 // pred_region
      _
    $region261: #{tpu_custom_call.1} parent=1 // pred_fallthru
      _
    // Predicated region
    $region262: #{tpu_custom_call.1} parent=1 // pred_check
      _
    $region263: #{tpu_custom_call.1} parent=1 // pred_check_branch
      %2730 = sbr.rel (0) target = $region265
    $region264: #{tpu_custom_call.1} parent=1 // pred_region
      %2732 = dma.done [#allocation4], 32
    $region265: #{tpu_custom_call.1} parent=1 // pred_fallthru
      _
    // Predicated region
    $region266: #{tpu_custom_call.1} parent=1 // pred_check
      _
    $region267: #{tpu_custom_call.1} parent=1 // pred_check_branch
      %2734 = sbr.rel (0) target = $region269
    $region268: #{tpu_custom_call.1} parent=1 // pred_region
      _
    $region269: #{tpu_custom_call.1} parent=1 // pred_fallthru
      _
    %2735 = vsyncpa [#allocation3], 1
    %2736 = vsyncpa [#allocation6], 1
    %2737 = vsyncpa [#allocation9], 1
    %2738 = vsyncpa [#allocation12], 1
    %2739 = vsyncpa [#allocation15], 1
    %2740 = vsyncpa [#allocation18], 1
    %2741 = vsyncpa [#allocation4], 1

</llo_original>
